<compile_context>
chip_gen: v6e
topology: v6e:2x2x1
jax: 0.10.0
libtpu: 0.0.40
codegen_flags: <defaults>
</compile_context>

<pallas_src>
import jax
import jax.numpy as jnp
from jax.experimental import pallas as pl
from jax.experimental.pallas import tpu as pltpu

LANE = 128


def _round_up(n, m):
    return ((n + m - 1) // m) * m


# ---------------------------------------------------------------------------
# Kernel
# ---------------------------------------------------------------------------
def _linear_relu(h, w_ref, b_ref):
    """h @ W + b, ReLU.  MXU inputs follow the weight dtype (bf16 by default);
    accumulation and the bias/ReLU epilogue stay in f32 (v5e-safe)."""
    h = h.astype(w_ref.dtype)
    acc = jnp.dot(h, w_ref[...], preferred_element_type=jnp.float32)
    return jnp.maximum(acc + b_ref[...].astype(jnp.float32), 0.0)


def deephit_kernel(x_ref,
                   ws0_ref, bs0_ref,
                   ws1_ref, bs1_ref,
                   ws2_ref, bs2_ref,
                   wh1_ref, bh1_ref,
                   wh2_ref, bh2_ref,
                   out_ref):
    """One batch tile of the DeepHit forward, entirely on the MXU."""
    h = x_ref[...]

    # Shared trunk: 3x (Linear + ReLU), all lane-dense (hidden padded to 128).
    h = _linear_relu(h, ws0_ref, bs0_ref)
    h = _linear_relu(h, ws1_ref, bs1_ref)
    h = _linear_relu(h, ws2_ref, bs2_ref)

    # All cause-specific first layers fused into ONE matmul: (TB, E*H_pad).
    he = _linear_relu(h, wh1_ref, bh1_ref)

    # All final Linear(H, 1) heads fused into ONE block-diagonal matmul.
    out = jnp.dot(he.astype(wh2_ref.dtype), wh2_ref[...],
                  preferred_element_type=jnp.float32)
    out_ref[...] = (out + bh2_ref[...].astype(jnp.float32)).astype(out_ref.dtype)


# ---------------------------------------------------------------------------
# Wrapper
# ---------------------------------------------------------------------------
def _vmem_limit_bytes():
    """Per-generation scoped-VMEM limit: 75% of physical VMEM.
    -> ~48 MiB on v7x (64 MiB), ~96 MiB on v5e/v6e (128 MiB)."""
    try:
        cap = int(pltpu.get_tpu_info().vmem_capacity_bytes)
    except Exception:
        cap = 64 * 1024 * 1024
    return int(cap * 3 // 4)


def deephit_forward(x, fused, *, batch_tile=4096):
    """x: (batch, input_dim) f32 (cast to the MXU dtype before streaming).
    fused: dict from fuse_params()."""
    batch, input_dim = x.shape
    num_events = fused["bh2"].shape[1]
    Hp = fused["ws0"].shape[1]
    EHp = fused["wh1"].shape[1]
    compute_dtype = fused["ws0"].dtype

    # x is the only per-row HBM read that scales with batch -> stream it in
    # the MXU dtype (bf16) to halve input DMA bytes.
    x = x.astype(compute_dtype)

    weight_keys = ("ws0", "bs0", "ws1", "bs1", "ws2", "bs2",
                   "wh1", "bh1", "wh2", "bh2")
    weights = [fused[k] for k in weight_keys]
    weight_bytes = sum(int(w.size) * w.dtype.itemsize for w in weights)

    vmem_limit = _vmem_limit_bytes()

    # Budget the batch tile against live bytes per row:
    #   streamed x tile (2 bufs) + out tile (2 bufs) + f32 h/he intermediates
    #   + their bf16 cast copies; weights counted at worst-case 2 copies.
    per_row = (input_dim * x.dtype.itemsize * 2
               + num_events * 4 * 2
               + (Hp + EHp) * (4 + compute_dtype.itemsize))
    budget = int(0.6 * vmem_limit) - 2 * weight_bytes
    tb_budget = max(8, budget // max(per_row, 1))
    tb = int(min(batch_tile, batch, tb_budget))
    if tb < batch:
        tb = max(8, (tb // 8) * 8)
    grid = (pl.cdiv(batch, tb),)

    # Advisory cost so XLA schedules the surrounding graph correctly.
    flops = 2 * batch * (input_dim * Hp + 2 * Hp * Hp + Hp * EHp
                         + EHp * num_events)
    bytes_accessed = (int(x.size) * x.dtype.itemsize
                      + batch * num_events * 4
                      + weight_bytes)
    cost = pl.CostEstimate(flops=flops, transcendentals=0,
                           bytes_accessed=bytes_accessed)

    def build(single_buffer_weights):
        def resident(arr):
            # Full-array block, same block index every grid step -> DMA'd
            # once, stays resident in VMEM across the batch loop.  Single
            # buffering (index never changes) halves weight VMEM footprint.
            idx = lambda i: (0,) * arr.ndim
            if single_buffer_weights:
                return pl.BlockSpec(arr.shape, idx,
                                    pipeline_mode=pl.Buffered(1))
            return pl.BlockSpec(arr.shape, idx)

        in_specs = [pl.BlockSpec((tb, input_dim), lambda i: (i, 0))]
        in_specs += [resident(w) for w in weights]
        # TODO(synk): if profiling shows the narrow (tb, E) writeback exposed
        # (masked vst.msk), pad wh2/bh2 to 128 output lanes, emit (batch, 128)
        # and slice [:, :E] in the wrapper (measure first, esp. on v5e).
        out_spec = pl.BlockSpec((tb, num_events), lambda i: (i, 0))

        return pl.pallas_call(
            deephit_kernel,
            out_shape=jax.ShapeDtypeStruct((batch, num_events), jnp.float32),
            grid=grid,
            in_specs=in_specs,
            out_specs=out_spec,
            compiler_params=pltpu.CompilerParams(
                dimension_semantics=("parallel",),   # megacore sharding
                vmem_limit_bytes=vmem_limit),
            cost_estimate=cost,
        )(x, *weights)

    try:
        return build(True)
    except Exception:
        # Older Pallas without BlockSpec(pipeline_mode=...)/Buffered(1):
        # fall back to default double-buffered resident weights.
        return build(False)


# ---------------------------------------------------------------------------
# Parameters
# ---------------------------------------------------------------------------
def init_params(key, input_dim, num_events, hidden_dim):
    """PyTorch-Linear-style init.  Weights stored as (in, out)."""
    def linear(k, fan_in, fan_out):
        kw, kb = jax.random.split(k)
        bound = 1.0 / jnp.sqrt(float(fan_in))
        w = jax.random.uniform(kw, (fan_in, fan_out), jnp.float32, -bound, bound)
        b = jax.random.uniform(kb, (fan_out,), jnp.float32, -bound, bound)
        return w, b

    keys = jax.random.split(key, 3 + 2 * num_events)
    ws0, bs0 = linear(keys[0], input_dim, hidden_dim)
    ws1, bs1 = linear(keys[1], hidden_dim, hidden_dim)
    ws2, bs2 = linear(keys[2], hidden_dim, hidden_dim)

    cw1, cb1, cw2, cb2 = [], [], [], []
    for e in range(num_events):
        w1, b1 = linear(keys[3 + 2 * e], hidden_dim, hidden_dim)
        w2, b2 = linear(keys[4 + 2 * e], hidden_dim, 1)
        cw1.append(w1)
        cb1.append(b1)
        cw2.append(w2[:, 0])   # (hidden,)
        cb2.append(b2[0])      # scalar

    return {
        "ws0": ws0, "bs0": bs0, "ws1": ws1, "bs1": bs1, "ws2": ws2, "bs2": bs2,
        "cw1": jnp.stack(cw1),   # (E, H, H)
        "cb1": jnp.stack(cb1),   # (E, H)
        "cw2": jnp.stack(cw2),   # (E, H)
        "cb2": jnp.stack(cb2),   # (E,)
    }


def fuse_params(p, input_dim, num_events, hidden_dim, weight_dtype=jnp.bfloat16):
    """Build lane-padded, head-fused weights for the kernel.

    * hidden dim padded to a multiple of 128 lanes (zero weights/biases ->
      padded activations are exactly 0 after ReLU, results unchanged).
    * per-event head layer 1 fused into a single (H_pad, pad(E*H)) weight;
      head layer 2 (Linear(H,1) x E) fused into a block-diagonal
      (pad(E*H), E) weight.
    * weight_dtype=bf16 (default) feeds the MXU bf16 on all generations with
      f32 accumulation; biases stay f32 so the VPU epilogue is f32.
    """
    H = hidden_dim
    Hp = _round_up(H, LANE)
    EHp = _round_up(num_events * H, LANE)

    def pad2(w, rows, cols):
        out = jnp.zeros((rows, cols), jnp.float32)
        return out.at[:w.shape[0], :w.shape[1]].set(w)

    def pad_bias(b, cols):
        return jnp.zeros((1, cols), jnp.float32).at[0, :b.shape[0]].set(b)

    ws0 = pad2(p["ws0"], input_dim, Hp)
    ws1 = pad2(p["ws1"], Hp, Hp)
    ws2 = pad2(p["ws2"], Hp, Hp)
    bs0 = pad_bias(p["bs0"], Hp)
    bs1 = pad_bias(p["bs1"], Hp)
    bs2 = pad_bias(p["bs2"], Hp)

    wh1 = jnp.zeros((Hp, EHp), jnp.float32)
    bh1 = jnp.zeros((1, EHp), jnp.float32)
    wh2 = jnp.zeros((EHp, num_events), jnp.float32)
    for e in range(num_events):
        c0, c1 = e * H, (e + 1) * H
        wh1 = wh1.at[:H, c0:c1].set(p["cw1"][e])
        bh1 = bh1.at[0, c0:c1].set(p["cb1"][e])
        wh2 = wh2.at[c0:c1, e].set(p["cw2"][e])
    bh2 = p["cb2"].reshape(1, num_events)

    wt = lambda w: w.astype(weight_dtype)
    return {
        "ws0": wt(ws0), "bs0": bs0,
        "ws1": wt(ws1), "bs1": bs1,
        "ws2": wt(ws2), "bs2": bs2,
        "wh1": wt(wh1), "bh1": bh1,
        "wh2": wt(wh2), "bh2": bh2,
    }


# ---------------------------------------------------------------------------
# Pure-JAX reference (mirrors the PyTorch module; mxu_dtype emulates the
# kernel's matmul-input precision while keeping f32 accumulation).
# ---------------------------------------------------------------------------
def deephit_reference(x, p, mxu_dtype=jnp.float32):
    def mm(a, w):
        return jnp.dot(a.astype(mxu_dtype), w.astype(mxu_dtype),
                       preferred_element_type=jnp.float32)

    h = x
    h = jax.nn.relu(mm(h, p["ws0"]) + p["bs0"][None, :])
    h = jax.nn.relu(mm(h, p["ws1"]) + p["bs1"][None, :])
    h = jax.nn.relu(mm(h, p["ws2"]) + p["bs2"][None, :])
    cols = []
    for e in range(p["cw1"].shape[0]):
        he = jax.nn.relu(mm(h, p["cw1"][e]) + p["cb1"][e][None, :])
        cols.append(mm(he, p["cw2"][e][:, None]) + p["cb2"][e])
    return jnp.concatenate(cols, axis=1)


if __name__ == "__main__":
    batch, input_dim, hidden_dim, num_events = 256, 16, 32, 3

    key = jax.random.PRNGKey(0)
    kx, kp = jax.random.split(key)
    x = jax.random.normal(kx, (batch, input_dim), jnp.float32)

    raw = init_params(kp, input_dim, num_events, hidden_dim)
    # bf16 MXU inputs on all generations (f32 accumulation, f32 epilogue).
    fused = fuse_params(raw, input_dim, num_events, hidden_dim,
                        weight_dtype=jnp.bfloat16)

    out = deephit_forward(x, fused, batch_tile=4096)
    out = jax.block_until_ready(out)
    assert out.shape == (batch, num_events), out.shape

    # Tight check against a reference emulating the kernel's bf16 MXU inputs.
    ref_bf16 = deephit_reference(x, raw, mxu_dtype=jnp.bfloat16)
    err_bf16 = float(jnp.max(jnp.abs(out - ref_bf16)))
    assert jnp.allclose(out, ref_bf16, atol=2e-3, rtol=2e-3), (
        f"bf16-ref max abs diff {err_bf16}")

    # Loose sanity check against the exact f32 PyTorch-equivalent module.
    ref_f32 = deephit_reference(x, raw, mxu_dtype=jnp.float32)
    err_f32 = float(jnp.max(jnp.abs(out - ref_f32)))
    assert jnp.allclose(out, ref_f32, atol=5e-2, rtol=5e-2), (
        f"f32-ref max abs diff {err_f32}")

    print("KERNEL_OK")
</pallas_src>

<mosaic_0001>
module attributes {stable_mosaic.version = 11 : i64} {
  func.func @deephit_kernel(%arg0: i32, %arg1: memref<256x16xbf16, #tpu.memory_space<vmem>>, %arg2: memref<16x128xbf16, #tpu.memory_space<vmem>>, %arg3: memref<1x128xf32, #tpu.memory_space<vmem>>, %arg4: memref<128x128xbf16, #tpu.memory_space<vmem>>, %arg5: memref<1x128xf32, #tpu.memory_space<vmem>>, %arg6: memref<128x128xbf16, #tpu.memory_space<vmem>>, %arg7: memref<1x128xf32, #tpu.memory_space<vmem>>, %arg8: memref<128x128xbf16, #tpu.memory_space<vmem>>, %arg9: memref<1x128xf32, #tpu.memory_space<vmem>>, %arg10: memref<128x3xbf16, #tpu.memory_space<vmem>>, %arg11: memref<1x3xf32, #tpu.memory_space<vmem>>, %arg12: memref<256x3xf32, #tpu.memory_space<vmem>>) attributes {dimension_semantics = [#tpu.dimension_semantics<parallel>], iteration_bounds = array<i64: 1>, scalar_prefetch = 0 : i64, scratch_operands = 0 : i64, tpu.core_type = #tpu.core_type<tc>, window_params = [{transform_indices = @transform_0, window_bounds = array<i64: 256, 16>}, {pipeline_mode = #tpu.pipeline_mode<synchronous>, transform_indices = @transform_1, window_bounds = array<i64: 16, 128>}, {pipeline_mode = #tpu.pipeline_mode<synchronous>, transform_indices = @transform_2, window_bounds = array<i64: 1, 128>}, {pipeline_mode = #tpu.pipeline_mode<synchronous>, transform_indices = @transform_3, window_bounds = array<i64: 128, 128>}, {pipeline_mode = #tpu.pipeline_mode<synchronous>, transform_indices = @transform_4, window_bounds = array<i64: 1, 128>}, {pipeline_mode = #tpu.pipeline_mode<synchronous>, transform_indices = @transform_5, window_bounds = array<i64: 128, 128>}, {pipeline_mode = #tpu.pipeline_mode<synchronous>, transform_indices = @transform_6, window_bounds = array<i64: 1, 128>}, {pipeline_mode = #tpu.pipeline_mode<synchronous>, transform_indices = @transform_7, window_bounds = array<i64: 128, 128>}, {pipeline_mode = #tpu.pipeline_mode<synchronous>, transform_indices = @transform_8, window_bounds = array<i64: 1, 128>}, {pipeline_mode = #tpu.pipeline_mode<synchronous>, transform_indices = @transform_9, window_bounds = array<i64: 128, 3>}, {pipeline_mode = #tpu.pipeline_mode<synchronous>, transform_indices = @transform_10, window_bounds = array<i64: 1, 3>}, {transform_indices = @transform_11, window_bounds = array<i64: 256, 3>}]} {
    %c0 = arith.constant 0 : index
    %c0_0 = arith.constant 0 : index
    %0 = vector.load %arg1[%c0, %c0_0] : memref<256x16xbf16, #tpu.memory_space<vmem>>, vector<256x16xbf16>
    %c0_1 = arith.constant 0 : index
    %c0_2 = arith.constant 0 : index
    %1 = vector.load %arg2[%c0_1, %c0_2] : memref<16x128xbf16, #tpu.memory_space<vmem>>, vector<16x128xbf16>
    %cst = arith.constant dense<0.000000e+00> : vector<256x128xf32>
    %2 = tpu.matmul %0, %1, %cst {dimension_numbers = #tpu.dot_dimension_numbers<[1], [0], [0], [1], [0, 0, 1, 1], [], []>} : vector<256x16xbf16>, vector<16x128xbf16>, vector<256x128xf32> -> vector<256x128xf32>
    %c0_3 = arith.constant 0 : index
    %c0_4 = arith.constant 0 : index
    %3 = vector.load %arg3[%c0_3, %c0_4] : memref<1x128xf32, #tpu.memory_space<vmem>>, vector<1x128xf32>
    %4 = vector.broadcast %3 : vector<1x128xf32> to vector<256x128xf32>
    %5 = arith.addf %2, %4 : vector<256x128xf32>
    %cst_5 = arith.constant 0.000000e+00 : f32
    %6 = vector.broadcast %cst_5 : f32 to vector<256x128xf32>
    %7 = arith.maximumf %5, %6 : vector<256x128xf32>
    %8 = arith.truncf %7 : vector<256x128xf32> to vector<256x128xbf16>
    %c0_6 = arith.constant 0 : index
    %c0_7 = arith.constant 0 : index
    %9 = vector.load %arg4[%c0_6, %c0_7] : memref<128x128xbf16, #tpu.memory_space<vmem>>, vector<128x128xbf16>
    %cst_8 = arith.constant dense<0.000000e+00> : vector<256x128xf32>
    %10 = tpu.matmul %8, %9, %cst_8 {dimension_numbers = #tpu.dot_dimension_numbers<[1], [0], [0], [1], [0, 0, 1, 1], [], []>} : vector<256x128xbf16>, vector<128x128xbf16>, vector<256x128xf32> -> vector<256x128xf32>
    %c0_9 = arith.constant 0 : index
    %c0_10 = arith.constant 0 : index
    %11 = vector.load %arg5[%c0_9, %c0_10] : memref<1x128xf32, #tpu.memory_space<vmem>>, vector<1x128xf32>
    %12 = vector.broadcast %11 : vector<1x128xf32> to vector<256x128xf32>
    %13 = arith.addf %10, %12 : vector<256x128xf32>
    %cst_11 = arith.constant 0.000000e+00 : f32
    %14 = vector.broadcast %cst_11 : f32 to vector<256x128xf32>
    %15 = arith.maximumf %13, %14 : vector<256x128xf32>
    %16 = arith.truncf %15 : vector<256x128xf32> to vector<256x128xbf16>
    %c0_12 = arith.constant 0 : index
    %c0_13 = arith.constant 0 : index
    %17 = vector.load %arg6[%c0_12, %c0_13] : memref<128x128xbf16, #tpu.memory_space<vmem>>, vector<128x128xbf16>
    %cst_14 = arith.constant dense<0.000000e+00> : vector<256x128xf32>
    %18 = tpu.matmul %16, %17, %cst_14 {dimension_numbers = #tpu.dot_dimension_numbers<[1], [0], [0], [1], [0, 0, 1, 1], [], []>} : vector<256x128xbf16>, vector<128x128xbf16>, vector<256x128xf32> -> vector<256x128xf32>
    %c0_15 = arith.constant 0 : index
    %c0_16 = arith.constant 0 : index
    %19 = vector.load %arg7[%c0_15, %c0_16] : memref<1x128xf32, #tpu.memory_space<vmem>>, vector<1x128xf32>
    %20 = vector.broadcast %19 : vector<1x128xf32> to vector<256x128xf32>
    %21 = arith.addf %18, %20 : vector<256x128xf32>
    %cst_17 = arith.constant 0.000000e+00 : f32
    %22 = vector.broadcast %cst_17 : f32 to vector<256x128xf32>
    %23 = arith.maximumf %21, %22 : vector<256x128xf32>
    %24 = arith.truncf %23 : vector<256x128xf32> to vector<256x128xbf16>
    %c0_18 = arith.constant 0 : index
    %c0_19 = arith.constant 0 : index
    %25 = vector.load %arg8[%c0_18, %c0_19] : memref<128x128xbf16, #tpu.memory_space<vmem>>, vector<128x128xbf16>
    %cst_20 = arith.constant dense<0.000000e+00> : vector<256x128xf32>
    %26 = tpu.matmul %24, %25, %cst_20 {dimension_numbers = #tpu.dot_dimension_numbers<[1], [0], [0], [1], [0, 0, 1, 1], [], []>} : vector<256x128xbf16>, vector<128x128xbf16>, vector<256x128xf32> -> vector<256x128xf32>
    %c0_21 = arith.constant 0 : index
    %c0_22 = arith.constant 0 : index
    %27 = vector.load %arg9[%c0_21, %c0_22] : memref<1x128xf32, #tpu.memory_space<vmem>>, vector<1x128xf32>
    %28 = vector.broadcast %27 : vector<1x128xf32> to vector<256x128xf32>
    %29 = arith.addf %26, %28 : vector<256x128xf32>
    %cst_23 = arith.constant 0.000000e+00 : f32
    %30 = vector.broadcast %cst_23 : f32 to vector<256x128xf32>
    %31 = arith.maximumf %29, %30 : vector<256x128xf32>
    %32 = arith.truncf %31 : vector<256x128xf32> to vector<256x128xbf16>
    %c0_24 = arith.constant 0 : index
    %c0_25 = arith.constant 0 : index
    %33 = vector.load %arg10[%c0_24, %c0_25] : memref<128x3xbf16, #tpu.memory_space<vmem>>, vector<128x3xbf16>
    %cst_26 = arith.constant dense<0.000000e+00> : vector<256x3xf32>
    %34 = tpu.matmul %32, %33, %cst_26 {dimension_numbers = #tpu.dot_dimension_numbers<[1], [0], [0], [1], [0, 0, 1, 1], [], []>} : vector<256x128xbf16>, vector<128x3xbf16>, vector<256x3xf32> -> vector<256x3xf32>
    %c0_27 = arith.constant 0 : index
    %c0_28 = arith.constant 0 : index
    %35 = vector.load %arg11[%c0_27, %c0_28] : memref<1x3xf32, #tpu.memory_space<vmem>>, vector<1x3xf32>
    %36 = vector.broadcast %35 : vector<1x3xf32> to vector<256x3xf32>
    %37 = arith.addf %34, %36 : vector<256x3xf32>
    %c0_29 = arith.constant 0 : index
    %c0_30 = arith.constant 0 : index
    %38 = vector.load %arg12[%c0_29, %c0_30] : memref<256x3xf32, #tpu.memory_space<vmem>>, vector<256x3xf32>
    tpu.vector_store %arg12[%c0_29, %c0_30], %37 {strides = array<i32>} : memref<256x3xf32, #tpu.memory_space<vmem>>, vector<256x3xf32>,
    return
  }
  func.func @transform_0(%arg0: i32) -> (i32, i32) {
    %c0_i32 = arith.constant 0 : i32
    %c0_i32_0 = arith.constant 0 : i32
    return %arg0, %c0_i32 : i32, i32
  }
  func.func @transform_1(%arg0: i32) -> (i32, i32) {
    %c0_i32 = arith.constant 0 : i32
    %c0_i32_0 = arith.constant 0 : i32
    %c0_i32_1 = arith.constant 0 : i32
    return %c0_i32, %c0_i32_0 : i32, i32
  }
  func.func @transform_2(%arg0: i32) -> (i32, i32) {
    %c0_i32 = arith.constant 0 : i32
    %c0_i32_0 = arith.constant 0 : i32
    %c0_i32_1 = arith.constant 0 : i32
    return %c0_i32, %c0_i32_0 : i32, i32
  }
  func.func @transform_3(%arg0: i32) -> (i32, i32) {
    %c0_i32 = arith.constant 0 : i32
    %c0_i32_0 = arith.constant 0 : i32
    %c0_i32_1 = arith.constant 0 : i32
    return %c0_i32, %c0_i32_0 : i32, i32
  }
  func.func @transform_4(%arg0: i32) -> (i32, i32) {
    %c0_i32 = arith.constant 0 : i32
    %c0_i32_0 = arith.constant 0 : i32
    %c0_i32_1 = arith.constant 0 : i32
    return %c0_i32, %c0_i32_0 : i32, i32
  }
  func.func @transform_5(%arg0: i32) -> (i32, i32) {
    %c0_i32 = arith.constant 0 : i32
    %c0_i32_0 = arith.constant 0 : i32
    %c0_i32_1 = arith.constant 0 : i32
    return %c0_i32, %c0_i32_0 : i32, i32
  }
  func.func @transform_6(%arg0: i32) -> (i32, i32) {
    %c0_i32 = arith.constant 0 : i32
    %c0_i32_0 = arith.constant 0 : i32
    %c0_i32_1 = arith.constant 0 : i32
    return %c0_i32, %c0_i32_0 : i32, i32
  }
  func.func @transform_7(%arg0: i32) -> (i32, i32) {
    %c0_i32 = arith.constant 0 : i32
    %c0_i32_0 = arith.constant 0 : i32
    %c0_i32_1 = arith.constant 0 : i32
    return %c0_i32, %c0_i32_0 : i32, i32
  }
  func.func @transform_8(%arg0: i32) -> (i32, i32) {
    %c0_i32 = arith.constant 0 : i32
    %c0_i32_0 = arith.constant 0 : i32
    %c0_i32_1 = arith.constant 0 : i32
    return %c0_i32, %c0_i32_0 : i32, i32
  }
  func.func @transform_9(%arg0: i32) -> (i32, i32) {
    %c0_i32 = arith.constant 0 : i32
    %c0_i32_0 = arith.constant 0 : i32
    %c0_i32_1 = arith.constant 0 : i32
    return %c0_i32, %c0_i32_0 : i32, i32
  }
  func.func @transform_10(%arg0: i32) -> (i32, i32) {
    %c0_i32 = arith.constant 0 : i32
    %c0_i32_0 = arith.constant 0 : i32
    %c0_i32_1 = arith.constant 0 : i32
    return %c0_i32, %c0_i32_0 : i32, i32
  }
  func.func @transform_11(%arg0: i32) -> (i32, i32) {
    %c0_i32 = arith.constant 0 : i32
    %c0_i32_0 = arith.constant 0 : i32
    return %arg0, %c0_i32 : i32, i32
  }
}

module attributes {stable_mosaic.version = 11 : i64} {
  func.func @deephit_kernel(%arg0: i32, %arg1: memref<256x16xbf16, #tpu.memory_space<vmem>>, %arg2: memref<16x128xbf16, #tpu.memory_space<vmem>>, %arg3: memref<1x128xf32, #tpu.memory_space<vmem>>, %arg4: memref<128x128xbf16, #tpu.memory_space<vmem>>, %arg5: memref<1x128xf32, #tpu.memory_space<vmem>>, %arg6: memref<128x128xbf16, #tpu.memory_space<vmem>>, %arg7: memref<1x128xf32, #tpu.memory_space<vmem>>, %arg8: memref<128x128xbf16, #tpu.memory_space<vmem>>, %arg9: memref<1x128xf32, #tpu.memory_space<vmem>>, %arg10: memref<128x3xbf16, #tpu.memory_space<vmem>>, %arg11: memref<1x3xf32, #tpu.memory_space<vmem>>, %arg12: memref<256x3xf32, #tpu.memory_space<vmem>>) attributes {dimension_semantics = [#tpu.dimension_semantics<parallel>], iteration_bounds = array<i64: 1>, scalar_prefetch = 0 : i64, scratch_operands = 0 : i64, tpu.core_type = #tpu.core_type<tc>, window_params = [{transform_indices = @transform_0, window_bounds = array<i64: 256, 16>}, {pipeline_mode = #tpu.pipeline_mode<synchronous>, transform_indices = @transform_1, window_bounds = array<i64: 16, 128>}, {pipeline_mode = #tpu.pipeline_mode<synchronous>, transform_indices = @transform_2, window_bounds = array<i64: 1, 128>}, {pipeline_mode = #tpu.pipeline_mode<synchronous>, transform_indices = @transform_3, window_bounds = array<i64: 128, 128>}, {pipeline_mode = #tpu.pipeline_mode<synchronous>, transform_indices = @transform_4, window_bounds = array<i64: 1, 128>}, {pipeline_mode = #tpu.pipeline_mode<synchronous>, transform_indices = @transform_5, window_bounds = array<i64: 128, 128>}, {pipeline_mode = #tpu.pipeline_mode<synchronous>, transform_indices = @transform_6, window_bounds = array<i64: 1, 128>}, {pipeline_mode = #tpu.pipeline_mode<synchronous>, transform_indices = @transform_7, window_bounds = array<i64: 128, 128>}, {pipeline_mode = #tpu.pipeline_mode<synchronous>, transform_indices = @transform_8, window_bounds = array<i64: 1, 128>}, {pipeline_mode = #tpu.pipeline_mode<synchronous>, transform_indices = @transform_9, window_bounds = array<i64: 128, 3>}, {pipeline_mode = #tpu.pipeline_mode<synchronous>, transform_indices = @transform_10, window_bounds = array<i64: 1, 3>}, {transform_indices = @transform_11, window_bounds = array<i64: 256, 3>}]} {
    %c0 = arith.constant 0 : index
    %c0_0 = arith.constant 0 : index
    %0 = vector.load %arg1[%c0, %c0_0] : memref<256x16xbf16, #tpu.memory_space<vmem>>, vector<256x16xbf16>
    %c0_1 = arith.constant 0 : index
    %c0_2 = arith.constant 0 : index
    %1 = vector.load %arg2[%c0_1, %c0_2] : memref<16x128xbf16, #tpu.memory_space<vmem>>, vector<16x128xbf16>
    %cst = arith.constant dense<0.000000e+00> : vector<256x128xf32>
    %2 = tpu.matmul %0, %1, %cst {dimension_numbers = #tpu.dot_dimension_numbers<[1], [0], [0], [1], [0, 0, 1, 1], [], []>} : vector<256x16xbf16>, vector<16x128xbf16>, vector<256x128xf32> -> vector<256x128xf32>
    %c0_3 = arith.constant 0 : index
    %c0_4 = arith.constant 0 : index
    %3 = vector.load %arg3[%c0_3, %c0_4] : memref<1x128xf32, #tpu.memory_space<vmem>>, vector<1x128xf32>
    %4 = vector.broadcast %3 : vector<1x128xf32> to vector<256x128xf32>
    %5 = arith.addf %2, %4 : vector<256x128xf32>
    %cst_5 = arith.constant 0.000000e+00 : f32
    %6 = vector.broadcast %cst_5 : f32 to vector<256x128xf32>
    %7 = arith.maximumf %5, %6 : vector<256x128xf32>
    %8 = arith.truncf %7 : vector<256x128xf32> to vector<256x128xbf16>
    %c0_6 = arith.constant 0 : index
    %c0_7 = arith.constant 0 : index
    %9 = vector.load %arg4[%c0_6, %c0_7] : memref<128x128xbf16, #tpu.memory_space<vmem>>, vector<128x128xbf16>
    %cst_8 = arith.constant dense<0.000000e+00> : vector<256x128xf32>
    %10 = tpu.matmul %8, %9, %cst_8 {dimension_numbers = #tpu.dot_dimension_numbers<[1], [0], [0], [1], [0, 0, 1, 1], [], []>} : vector<256x128xbf16>, vector<128x128xbf16>, vector<256x128xf32> -> vector<256x128xf32>
    %c0_9 = arith.constant 0 : index
    %c0_10 = arith.constant 0 : index
    %11 = vector.load %arg5[%c0_9, %c0_10] : memref<1x128xf32, #tpu.memory_space<vmem>>, vector<1x128xf32>
    %12 = vector.broadcast %11 : vector<1x128xf32> to vector<256x128xf32>
    %13 = arith.addf %10, %12 : vector<256x128xf32>
    %cst_11 = arith.constant 0.000000e+00 : f32
    %14 = vector.broadcast %cst_11 : f32 to vector<256x128xf32>
    %15 = arith.maximumf %13, %14 : vector<256x128xf32>
    %16 = arith.truncf %15 : vector<256x128xf32> to vector<256x128xbf16>
    %c0_12 = arith.constant 0 : index
    %c0_13 = arith.constant 0 : index
    %17 = vector.load %arg6[%c0_12, %c0_13] : memref<128x128xbf16, #tpu.memory_space<vmem>>, vector<128x128xbf16>
    %cst_14 = arith.constant dense<0.000000e+00> : vector<256x128xf32>
    %18 = tpu.matmul %16, %17, %cst_14 {dimension_numbers = #tpu.dot_dimension_numbers<[1], [0], [0], [1], [0, 0, 1, 1], [], []>} : vector<256x128xbf16>, vector<128x128xbf16>, vector<256x128xf32> -> vector<256x128xf32>
    %c0_15 = arith.constant 0 : index
    %c0_16 = arith.constant 0 : index
    %19 = vector.load %arg7[%c0_15, %c0_16] : memref<1x128xf32, #tpu.memory_space<vmem>>, vector<1x128xf32>
    %20 = vector.broadcast %19 : vector<1x128xf32> to vector<256x128xf32>
    %21 = arith.addf %18, %20 : vector<256x128xf32>
    %cst_17 = arith.constant 0.000000e+00 : f32
    %22 = vector.broadcast %cst_17 : f32 to vector<256x128xf32>
    %23 = arith.maximumf %21, %22 : vector<256x128xf32>
    %24 = arith.truncf %23 : vector<256x128xf32> to vector<256x128xbf16>
    %c0_18 = arith.constant 0 : index
    %c0_19 = arith.constant 0 : index
    %25 = vector.load %arg8[%c0_18, %c0_19] : memref<128x128xbf16, #tpu.memory_space<vmem>>, vector<128x128xbf16>
    %cst_20 = arith.constant dense<0.000000e+00> : vector<256x128xf32>
    %26 = tpu.matmul %24, %25, %cst_20 {dimension_numbers = #tpu.dot_dimension_numbers<[1], [0], [0], [1], [0, 0, 1, 1], [], []>} : vector<256x128xbf16>, vector<128x128xbf16>, vector<256x128xf32> -> vector<256x128xf32>
    %c0_21 = arith.constant 0 : index
    %c0_22 = arith.constant 0 : index
    %27 = vector.load %arg9[%c0_21, %c0_22] : memref<1x128xf32, #tpu.memory_space<vmem>>, vector<1x128xf32>
    %28 = vector.broadcast %27 : vector<1x128xf32> to vector<256x128xf32>
    %29 = arith.addf %26, %28 : vector<256x128xf32>
    %cst_23 = arith.constant 0.000000e+00 : f32
    %30 = vector.broadcast %cst_23 : f32 to vector<256x128xf32>
    %31 = arith.maximumf %29, %30 : vector<256x128xf32>
    %32 = arith.truncf %31 : vector<256x128xf32> to vector<256x128xbf16>
    %c0_24 = arith.constant 0 : index
    %c0_25 = arith.constant 0 : index
    %33 = vector.load %arg10[%c0_24, %c0_25] : memref<128x3xbf16, #tpu.memory_space<vmem>>, vector<128x3xbf16>
    %cst_26 = arith.constant dense<0.000000e+00> : vector<256x3xf32>
    %34 = tpu.matmul %32, %33, %cst_26 {dimension_numbers = #tpu.dot_dimension_numbers<[1], [0], [0], [1], [0, 0, 1, 1], [], []>} : vector<256x128xbf16>, vector<128x3xbf16>, vector<256x3xf32> -> vector<256x3xf32>
    %c0_27 = arith.constant 0 : index
    %c0_28 = arith.constant 0 : index
    %35 = vector.load %arg11[%c0_27, %c0_28] : memref<1x3xf32, #tpu.memory_space<vmem>>, vector<1x3xf32>
    %36 = vector.broadcast %35 : vector<1x3xf32> to vector<256x3xf32>
    %37 = arith.addf %34, %36 : vector<256x3xf32>
    %c0_29 = arith.constant 0 : index
    %c0_30 = arith.constant 0 : index
    %38 = vector.load %arg12[%c0_29, %c0_30] : memref<256x3xf32, #tpu.memory_space<vmem>>, vector<256x3xf32>
    tpu.vector_store %arg12[%c0_29, %c0_30], %37 {strides = array<i32>} : memref<256x3xf32, #tpu.memory_space<vmem>>, vector<256x3xf32>,
    return
  }
  func.func @transform_0(%arg0: i32) -> (i32, i32) {
    %c0_i32 = arith.constant 0 : i32
    %c0_i32_0 = arith.constant 0 : i32
    return %arg0, %c0_i32 : i32, i32
  }
  func.func @transform_1(%arg0: i32) -> (i32, i32) {
    %c0_i32 = arith.constant 0 : i32
    %c0_i32_0 = arith.constant 0 : i32
    %c0_i32_1 = arith.constant 0 : i32
    return %c0_i32, %c0_i32_0 : i32, i32
  }
  func.func @transform_2(%arg0: i32) -> (i32, i32) {
    %c0_i32 = arith.constant 0 : i32
    %c0_i32_0 = arith.constant 0 : i32
    %c0_i32_1 = arith.constant 0 : i32
    return %c0_i32, %c0_i32_0 : i32, i32
  }
  func.func @transform_3(%arg0: i32) -> (i32, i32) {
    %c0_i32 = arith.constant 0 : i32
    %c0_i32_0 = arith.constant 0 : i32
    %c0_i32_1 = arith.constant 0 : i32
    return %c0_i32, %c0_i32_0 : i32, i32
  }
  func.func @transform_4(%arg0: i32) -> (i32, i32) {
    %c0_i32 = arith.constant 0 : i32
    %c0_i32_0 = arith.constant 0 : i32
    %c0_i32_1 = arith.constant 0 : i32
    return %c0_i32, %c0_i32_0 : i32, i32
  }
  func.func @transform_5(%arg0: i32) -> (i32, i32) {
    %c0_i32 = arith.constant 0 : i32
    %c0_i32_0 = arith.constant 0 : i32
    %c0_i32_1 = arith.constant 0 : i32
    return %c0_i32, %c0_i32_0 : i32, i32
  }
  func.func @transform_6(%arg0: i32) -> (i32, i32) {
    %c0_i32 = arith.constant 0 : i32
    %c0_i32_0 = arith.constant 0 : i32
    %c0_i32_1 = arith.constant 0 : i32
    return %c0_i32, %c0_i32_0 : i32, i32
  }
  func.func @transform_7(%arg0: i32) -> (i32, i32) {
    %c0_i32 = arith.constant 0 : i32
    %c0_i32_0 = arith.constant 0 : i32
    %c0_i32_1 = arith.constant 0 : i32
    return %c0_i32, %c0_i32_0 : i32, i32
  }
  func.func @transform_8(%arg0: i32) -> (i32, i32) {
    %c0_i32 = arith.constant 0 : i32
    %c0_i32_0 = arith.constant 0 : i32
    %c0_i32_1 = arith.constant 0 : i32
    return %c0_i32, %c0_i32_0 : i32, i32
  }
  func.func @transform_9(%arg0: i32) -> (i32, i32) {
    %c0_i32 = arith.constant 0 : i32
    %c0_i32_0 = arith.constant 0 : i32
    %c0_i32_1 = arith.constant 0 : i32
    return %c0_i32, %c0_i32_0 : i32, i32
  }
  func.func @transform_10(%arg0: i32) -> (i32, i32) {
    %c0_i32 = arith.constant 0 : i32
    %c0_i32_0 = arith.constant 0 : i32
    %c0_i32_1 = arith.constant 0 : i32
    return %c0_i32, %c0_i32_0 : i32, i32
  }
  func.func @transform_11(%arg0: i32) -> (i32, i32) {
    %c0_i32 = arith.constant 0 : i32
    %c0_i32_0 = arith.constant 0 : i32
    return %arg0, %c0_i32 : i32, i32
  }
}

</mosaic_0001>

<llo_original>
// kernel: tpu_custom_call.1
$region0: #{tpu_custom_call.1}
  #allocation0 [shape = 'u32[]', space=smem, size = 0x4, offset = 0x4, fixed_abs, tag = 'smem constant byte address 0x4 - core index']
  #allocation1 [shape = 'u32[144,128]{1,0:T(1,128)}', space=vmem, size = 0x12000, scoped, tag = 'internal scratch']
  %s0 = inlined_call_operand.vmem [shape: bf16[256,16], index: 0, kind: input, shape index: {}]
  %s1 = inlined_call_operand.vmem [shape: bf16[16,128], index: 1, kind: input, shape index: {}]
  %s2 = inlined_call_operand.vmem [shape: f32[1,128], index: 2, kind: input, shape index: {}]
  %s3 = inlined_call_operand.vmem [shape: bf16[128,128], index: 3, kind: input, shape index: {}]
  %s4 = inlined_call_operand.vmem [shape: f32[1,128], index: 4, kind: input, shape index: {}]
  %s5 = inlined_call_operand.vmem [shape: bf16[128,128], index: 5, kind: input, shape index: {}]
  %s6 = inlined_call_operand.vmem [shape: f32[1,128], index: 6, kind: input, shape index: {}]
  %s7 = inlined_call_operand.vmem [shape: bf16[128,128], index: 7, kind: input, shape index: {}]
  %s8 = inlined_call_operand.vmem [shape: f32[1,128], index: 8, kind: input, shape index: {}]
  %s9 = inlined_call_operand.vmem [shape: bf16[128,3], index: 9, kind: input, shape index: {}]
  %s10 = inlined_call_operand.vmem [shape: f32[1,3], index: 10, kind: input, shape index: {}]
  %s11 = inlined_call_operand.vmem [shape: f32[256,3], index: 11, kind: output, shape index: {}]
  %s12 = sld [smem:[#allocation0]]
  $region54: #{tpu_custom_call.1} parent=0
    _
  %s14 = ssub.s32 1, %s12
  %s15 = scalar_select 0, %s14, %s12
  // Predicated region
  $region2: #{tpu_custom_call.1} parent=0 // pred_check
    _
  $region3: #{tpu_custom_call.1} parent=0 // pred_check_branch
    %17 = sbr.rel (0) target = $region5
  $region4: #{tpu_custom_call.1} parent=0 // pred_region
    _
  $region5: #{tpu_custom_call.1} parent=0 // pred_fallthru
    _
  // Predicated region
  $region6: #{tpu_custom_call.1} parent=0 // pred_check
    _
  $region7: #{tpu_custom_call.1} parent=0 // pred_check_branch
    %19 = sbr.rel (0) target = $region9
  $region8: #{tpu_custom_call.1} parent=0 // pred_region
    _
  $region9: #{tpu_custom_call.1} parent=0 // pred_fallthru
    _
  // Predicated region
  $region10: #{tpu_custom_call.1} parent=0 // pred_check
    _
  $region11: #{tpu_custom_call.1} parent=0 // pred_check_branch
    %21 = sbr.rel (0) target = $region13
  $region12: #{tpu_custom_call.1} parent=0 // pred_region
    _
  $region13: #{tpu_custom_call.1} parent=0 // pred_fallthru
    _
  // Predicated region
  $region14: #{tpu_custom_call.1} parent=0 // pred_check
    _
  $region15: #{tpu_custom_call.1} parent=0 // pred_check_branch
    %23 = sbr.rel (0) target = $region17
  $region16: #{tpu_custom_call.1} parent=0 // pred_region
    _
  $region17: #{tpu_custom_call.1} parent=0 // pred_fallthru
    _
  // Predicated region
  $region18: #{tpu_custom_call.1} parent=0 // pred_check
    _
  $region19: #{tpu_custom_call.1} parent=0 // pred_check_branch
    %25 = sbr.rel (0) target = $region21
  $region20: #{tpu_custom_call.1} parent=0 // pred_region
    _
  $region21: #{tpu_custom_call.1} parent=0 // pred_fallthru
    _
  // Predicated region
  $region22: #{tpu_custom_call.1} parent=0 // pred_check
    _
  $region23: #{tpu_custom_call.1} parent=0 // pred_check_branch
    %27 = sbr.rel (0) target = $region25
  $region24: #{tpu_custom_call.1} parent=0 // pred_region
    _
  $region25: #{tpu_custom_call.1} parent=0 // pred_fallthru
    _
  // Predicated region
  $region26: #{tpu_custom_call.1} parent=0 // pred_check
    _
  $region27: #{tpu_custom_call.1} parent=0 // pred_check_branch
    %29 = sbr.rel (0) target = $region29
  $region28: #{tpu_custom_call.1} parent=0 // pred_region
    _
  $region29: #{tpu_custom_call.1} parent=0 // pred_fallthru
    _
  // Predicated region
  $region30: #{tpu_custom_call.1} parent=0 // pred_check
    _
  $region31: #{tpu_custom_call.1} parent=0 // pred_check_branch
    %31 = sbr.rel (0) target = $region33
  $region32: #{tpu_custom_call.1} parent=0 // pred_region
    _
  $region33: #{tpu_custom_call.1} parent=0 // pred_fallthru
    _
  // Predicated region
  $region34: #{tpu_custom_call.1} parent=0 // pred_check
    _
  $region35: #{tpu_custom_call.1} parent=0 // pred_check_branch
    %33 = sbr.rel (0) target = $region37
  $region36: #{tpu_custom_call.1} parent=0 // pred_region
    _
  $region37: #{tpu_custom_call.1} parent=0 // pred_fallthru
    _
  // Predicated region
  $region38: #{tpu_custom_call.1} parent=0 // pred_check
    _
  $region39: #{tpu_custom_call.1} parent=0 // pred_check_branch
    %35 = sbr.rel (0) target = $region41
  $region40: #{tpu_custom_call.1} parent=0 // pred_region
    _
  $region41: #{tpu_custom_call.1} parent=0 // pred_fallthru
    _
  // Predicated region
  $region42: #{tpu_custom_call.1} parent=0 // pred_check
    _
  $region43: #{tpu_custom_call.1} parent=0 // pred_check_branch
    %37 = sbr.rel (0) target = $region45
  $region44: #{tpu_custom_call.1} parent=0 // pred_region
    _
  $region45: #{tpu_custom_call.1} parent=0 // pred_fallthru
    _
  %v39 = vld [vmem:[%s0] sm:$0xf]
  %v40 = vld [vmem:[%s0 + $0x4] sm:$0xf]
  %v41 = vld [vmem:[%s0 + $0x8] sm:$0xf]
  %v42 = vld [vmem:[%s0 + $0xc] sm:$0xf]
  %v43 = vld [vmem:[%s0 + $0x10] sm:$0xf]
  %v44 = vld [vmem:[%s0 + $0x14] sm:$0xf]
  %v45 = vld [vmem:[%s0 + $0x18] sm:$0xf]
  %v46 = vld [vmem:[%s0 + $0x1c] sm:$0xf]
  %v47 = vld [vmem:[%s0 + $0x20] sm:$0xf]
  %v48 = vld [vmem:[%s0 + $0x24] sm:$0xf]
  %v49 = vld [vmem:[%s0 + $0x28] sm:$0xf]
  %v50 = vld [vmem:[%s0 + $0x2c] sm:$0xf]
  %v51 = vld [vmem:[%s0 + $0x30] sm:$0xf]
  %v52 = vld [vmem:[%s0 + $0x34] sm:$0xf]
  %v53 = vld [vmem:[%s0 + $0x38] sm:$0xf]
  %v54 = vld [vmem:[%s0 + $0x3c] sm:$0xf]
  %v55 = vld [vmem:[%s0 + $0x40] sm:$0xf]
  %v56 = vld [vmem:[%s0 + $0x44] sm:$0xf]
  %v57 = vld [vmem:[%s0 + $0x48] sm:$0xf]
  %v58 = vld [vmem:[%s0 + $0x4c] sm:$0xf]
  %v59 = vld [vmem:[%s0 + $0x50] sm:$0xf]
  %v60 = vld [vmem:[%s0 + $0x54] sm:$0xf]
  %v61 = vld [vmem:[%s0 + $0x58] sm:$0xf]
  %v62 = vld [vmem:[%s0 + $0x5c] sm:$0xf]
  %v63 = vld [vmem:[%s0 + $0x60] sm:$0xf]
  %v64 = vld [vmem:[%s0 + $0x64] sm:$0xf]
  %v65 = vld [vmem:[%s0 + $0x68] sm:$0xf]
  %v66 = vld [vmem:[%s0 + $0x6c] sm:$0xf]
  %v67 = vld [vmem:[%s0 + $0x70] sm:$0xf]
  %v68 = vld [vmem:[%s0 + $0x74] sm:$0xf]
  %v69 = vld [vmem:[%s0 + $0x78] sm:$0xf]
  %v70 = vld [vmem:[%s0 + $0x7c] sm:$0xf]
  %v71 = vld [vmem:[%s1] sm:$0xf]
  %v72 = vld [vmem:[%s1 + $0x4] sm:$0xf]
  %v73 = vld [vmem:[%s2] sm:$0x1]
  %v75 = vlaneseq
  %v76 = vshrl.u32 %v75, 7
  %v77 = vsub.s32 0, %v76
  %v78 = vrot.slane %v73, %v77
  %v112 = vunpack.c.l.b16 %v39
  %v113 = vunpack.c.l.b16 %v40
  %v114 = vunpack.c.l.b16 %v41
  %v115 = vunpack.c.l.b16 %v42
  %v116 = vunpack.c.l.b16 %v43
  %v117 = vunpack.c.l.b16 %v44
  %v118 = vunpack.c.l.b16 %v45
  %v119 = vunpack.c.l.b16 %v46
  %v120 = vunpack.c.l.b16 %v47
  %v121 = vunpack.c.l.b16 %v48
  %v122 = vunpack.c.l.b16 %v49
  %v123 = vunpack.c.l.b16 %v50
  %v124 = vunpack.c.l.b16 %v51
  %v125 = vunpack.c.l.b16 %v52
  %v126 = vunpack.c.l.b16 %v53
  %v127 = vunpack.c.l.b16 %v54
  %v128 = vunpack.c.l.b16 %v55
  %v129 = vunpack.c.l.b16 %v56
  %v130 = vunpack.c.l.b16 %v57
  %v131 = vunpack.c.l.b16 %v58
  %v132 = vunpack.c.l.b16 %v59
  %v133 = vunpack.c.l.b16 %v60
  %v134 = vunpack.c.l.b16 %v61
  %v135 = vunpack.c.l.b16 %v62
  %v136 = vunpack.c.l.b16 %v63
  %v137 = vunpack.c.l.b16 %v64
  %v138 = vunpack.c.l.b16 %v65
  %v139 = vunpack.c.l.b16 %v66
  %v140 = vunpack.c.l.b16 %v67
  %v141 = vunpack.c.l.b16 %v68
  %v142 = vunpack.c.l.b16 %v69
  %v143 = vunpack.c.l.b16 %v70
  %v144 = vpack.c.b16 %v113, %v112
  %v145 = vpack.c.b16 %v115, %v114
  %v146 = vpack.c.b16 %v117, %v116
  %v147 = vpack.c.b16 %v119, %v118
  %v148 = vpack.c.b16 %v121, %v120
  %v149 = vpack.c.b16 %v123, %v122
  %v150 = vpack.c.b16 %v125, %v124
  %v151 = vpack.c.b16 %v127, %v126
  %v152 = vpack.c.b16 %v129, %v128
  %v153 = vpack.c.b16 %v131, %v130
  %v154 = vpack.c.b16 %v133, %v132
  %v155 = vpack.c.b16 %v135, %v134
  %v156 = vpack.c.b16 %v137, %v136
  %v157 = vpack.c.b16 %v139, %v138
  %v158 = vpack.c.b16 %v141, %v140
  %v159 = vpack.c.b16 %v143, %v142
  %v162 = vunpack.c.l.b16 %v71
  %v163 = vunpack.c.l.b16 %v72
  %v164 = vpack.c.b16 %v163, %v162
  %vm166 = vcmask 130048
  %v168 = vsel %vm166, %v144, 0
  %v171 = vsel %vm166, %v145, 0
  %v174 = vsel %vm166, %v146, 0
  %v177 = vsel %vm166, %v147, 0
  %v180 = vsel %vm166, %v148, 0
  %v183 = vsel %vm166, %v149, 0
  %v186 = vsel %vm166, %v150, 0
  %v189 = vsel %vm166, %v151, 0
  %v192 = vsel %vm166, %v152, 0
  %v195 = vsel %vm166, %v153, 0
  %v198 = vsel %vm166, %v154, 0
  %v201 = vsel %vm166, %v155, 0
  %v204 = vsel %vm166, %v156, 0
  %v207 = vsel %vm166, %v157, 0
  %v210 = vsel %vm166, %v158, 0
  %v213 = vsel %vm166, %v159, 0
  %215 = vmatprep.subr.bf16.mxu0 0
  %216 = vmatpush1.bf16.msra.mxu0 0
  %217 = vmatprep.subr.bf16.mxu0 0
  %218 = vmatpush1.bf16.msra.mxu0 0
  %219 = vmatprep.subr.bf16.mxu0 0
  %220 = vmatpush1.bf16.msra.mxu0 0
  %221 = vmatprep.subr.bf16.mxu0 0
  %222 = vmatpush1.bf16.msra.mxu0 0
  %223 = vmatprep.subr.bf16.mxu0 0
  %224 = vmatpush1.bf16.msra.mxu0 0
  %225 = vmatprep.subr.bf16.mxu0 0
  %226 = vmatpush1.bf16.msra.mxu0 0
  %227 = vmatprep.subr.bf16.mxu0 0
  %228 = vmatpush1.bf16.msra.mxu0 0
  %229 = vmatprep.subr.bf16.mxu0 0
  %230 = vmatpush1.bf16.msra.mxu0 %v164
  %231 = vmatprep.subr.bf16.mxu0 0
  %232 = vmatpush2.bf16.msra.mxu0 0
  %233 = vmatprep.subr.bf16.mxu0 0
  %234 = vmatpush2.bf16.msra.mxu0 0
  %235 = vmatprep.subr.bf16.mxu0 0
  %236 = vmatpush2.bf16.msra.mxu0 0
  %237 = vmatprep.subr.bf16.mxu0 0
  %238 = vmatpush2.bf16.msra.mxu0 0
  %239 = vmatprep.subr.bf16.mxu0 0
  %240 = vmatpush2.bf16.msra.mxu0 0
  %241 = vmatprep.subr.bf16.mxu0 0
  %242 = vmatpush2.bf16.msra.mxu0 0
  %243 = vmatprep.subr.bf16.mxu0 0
  %244 = vmatpush2.bf16.msra.mxu0 0
  %245 = vmatprep.subr.bf16.mxu0 0
  %246 = vmatpush2.bf16.msra.mxu0 0
  %247 = vmatprep.mubr.bf16.mxu0 0
  %248 = vmatmul.mubr.bf16.gmra.mxu0 %v168
  %v249 = vpop.f32.mrf.mxu0
  %v250 = vadd.f32 %v78, %v249
  %v251 = vpop.f32.mrf.mxu0
  %v252 = vpop.f32.mrf.mxu0
  %v253 = vadd.f32 %v78, %v252
  %v254 = vpop.f32.mrf.mxu0
  %255 = vmatprep.mubr.bf16.mxu0 0
  %256 = vmatmul.mubr.bf16.gmra.mxu0 %v171
  %v257 = vpop.f32.mrf.mxu0
  %v258 = vadd.f32 %v78, %v257
  %v259 = vpop.f32.mrf.mxu0
  %v260 = vpop.f32.mrf.mxu0
  %v261 = vadd.f32 %v78, %v260
  %v262 = vpop.f32.mrf.mxu0
  %263 = vmatprep.mubr.bf16.mxu0 0
  %264 = vmatmul.mubr.bf16.gmra.mxu0 %v174
  %v265 = vpop.f32.mrf.mxu0
  %v266 = vadd.f32 %v78, %v265
  %v267 = vpop.f32.mrf.mxu0
  %v268 = vpop.f32.mrf.mxu0
  %v269 = vadd.f32 %v78, %v268
  %v270 = vpop.f32.mrf.mxu0
  %271 = vmatprep.mubr.bf16.mxu0 0
  %272 = vmatmul.mubr.bf16.gmra.mxu0 %v177
  %v273 = vpop.f32.mrf.mxu0
  %v274 = vadd.f32 %v78, %v273
  %v275 = vpop.f32.mrf.mxu0
  %v276 = vpop.f32.mrf.mxu0
  %v277 = vadd.f32 %v78, %v276
  %v278 = vpop.f32.mrf.mxu0
  %279 = vmatprep.mubr.bf16.mxu0 0
  %280 = vmatmul.mubr.bf16.gmra.mxu0 %v180
  %v281 = vpop.f32.mrf.mxu0
  %v282 = vadd.f32 %v78, %v281
  %v283 = vpop.f32.mrf.mxu0
  %v284 = vpop.f32.mrf.mxu0
  %v285 = vadd.f32 %v78, %v284
  %v286 = vpop.f32.mrf.mxu0
  %287 = vmatprep.mubr.bf16.mxu0 0
  %288 = vmatmul.mubr.bf16.gmra.mxu0 %v183
  %v289 = vpop.f32.mrf.mxu0
  %v290 = vadd.f32 %v78, %v289
  %v291 = vpop.f32.mrf.mxu0
  %v292 = vpop.f32.mrf.mxu0
  %v293 = vadd.f32 %v78, %v292
  %v294 = vpop.f32.mrf.mxu0
  %295 = vmatprep.mubr.bf16.mxu0 0
  %296 = vmatmul.mubr.bf16.gmra.mxu0 %v186
  %v297 = vpop.f32.mrf.mxu0
  %v298 = vadd.f32 %v78, %v297
  %v299 = vpop.f32.mrf.mxu0
  %v300 = vpop.f32.mrf.mxu0
  %v301 = vadd.f32 %v78, %v300
  %v302 = vpop.f32.mrf.mxu0
  %303 = vmatprep.mubr.bf16.mxu0 0
  %304 = vmatmul.mubr.bf16.gmra.mxu0 %v189
  %v305 = vpop.f32.mrf.mxu0
  %v306 = vadd.f32 %v78, %v305
  %v307 = vpop.f32.mrf.mxu0
  %v308 = vpop.f32.mrf.mxu0
  %v309 = vadd.f32 %v78, %v308
  %v310 = vpop.f32.mrf.mxu0
  %311 = vmatprep.mubr.bf16.mxu0 0
  %312 = vmatmul.mubr.bf16.gmra.mxu0 %v192
  %v313 = vpop.f32.mrf.mxu0
  %v314 = vadd.f32 %v78, %v313
  %v315 = vpop.f32.mrf.mxu0
  %v316 = vpop.f32.mrf.mxu0
  %v317 = vadd.f32 %v78, %v316
  %v318 = vpop.f32.mrf.mxu0
  %319 = vmatprep.mubr.bf16.mxu0 0
  %320 = vmatmul.mubr.bf16.gmra.mxu0 %v195
  %v321 = vpop.f32.mrf.mxu0
  %v322 = vadd.f32 %v78, %v321
  %v323 = vpop.f32.mrf.mxu0
  %v324 = vpop.f32.mrf.mxu0
  %v325 = vadd.f32 %v78, %v324
  %v326 = vpop.f32.mrf.mxu0
  %327 = vmatprep.mubr.bf16.mxu0 0
  %328 = vmatmul.mubr.bf16.gmra.mxu0 %v198
  %v329 = vpop.f32.mrf.mxu0
  %v330 = vadd.f32 %v78, %v329
  %v331 = vpop.f32.mrf.mxu0
  %v332 = vpop.f32.mrf.mxu0
  %v333 = vadd.f32 %v78, %v332
  %v334 = vpop.f32.mrf.mxu0
  %335 = vmatprep.mubr.bf16.mxu0 0
  %336 = vmatmul.mubr.bf16.gmra.mxu0 %v201
  %v337 = vpop.f32.mrf.mxu0
  %v338 = vadd.f32 %v78, %v337
  %v339 = vpop.f32.mrf.mxu0
  %v340 = vpop.f32.mrf.mxu0
  %v341 = vadd.f32 %v78, %v340
  %v342 = vpop.f32.mrf.mxu0
  %343 = vmatprep.mubr.bf16.mxu0 0
  %344 = vmatmul.mubr.bf16.gmra.mxu0 %v204
  %v345 = vpop.f32.mrf.mxu0
  %v346 = vadd.f32 %v78, %v345
  %v347 = vpop.f32.mrf.mxu0
  %v348 = vpop.f32.mrf.mxu0
  %v349 = vadd.f32 %v78, %v348
  %v350 = vpop.f32.mrf.mxu0
  %351 = vmatprep.mubr.bf16.mxu0 0
  %352 = vmatmul.mubr.bf16.gmra.mxu0 %v207
  %v353 = vpop.f32.mrf.mxu0
  %v354 = vadd.f32 %v78, %v353
  %v355 = vpop.f32.mrf.mxu0
  %v356 = vpop.f32.mrf.mxu0
  %v357 = vadd.f32 %v78, %v356
  %v358 = vpop.f32.mrf.mxu0
  %359 = vmatprep.mubr.bf16.mxu0 0
  %360 = vmatmul.mubr.bf16.gmra.mxu0 %v210
  %v361 = vpop.f32.mrf.mxu0
  %v362 = vadd.f32 %v78, %v361
  %v363 = vpop.f32.mrf.mxu0
  %v364 = vpop.f32.mrf.mxu0
  %v365 = vadd.f32 %v78, %v364
  %v366 = vpop.f32.mrf.mxu0
  %367 = vmatprep.mubr.bf16.mxu0 0
  %368 = vmatmul.mubr.bf16.gmra.mxu0 %v213
  %v369 = vpop.f32.mrf.mxu0
  %v370 = vadd.f32 %v78, %v369
  %v371 = vpop.f32.mrf.mxu0
  %v372 = vpop.f32.mrf.mxu0
  %v373 = vadd.f32 %v78, %v372
  %v374 = vpop.f32.mrf.mxu0
  %375 = vdwg.mxu0
  %v376 = vmax.f32 %v250, 0.0
  %v377 = vmax.f32 %v253, 0.0
  %v378 = vmax.f32 %v258, 0.0
  %v379 = vmax.f32 %v261, 0.0
  %v380 = vmax.f32 %v266, 0.0
  %v381 = vmax.f32 %v269, 0.0
  %v382 = vmax.f32 %v274, 0.0
  %v383 = vmax.f32 %v277, 0.0
  %v384 = vmax.f32 %v282, 0.0
  %v385 = vmax.f32 %v285, 0.0
  %v386 = vmax.f32 %v290, 0.0
  %v387 = vmax.f32 %v293, 0.0
  %v388 = vmax.f32 %v298, 0.0
  %v389 = vmax.f32 %v301, 0.0
  %v390 = vmax.f32 %v306, 0.0
  %v391 = vmax.f32 %v309, 0.0
  %v392 = vmax.f32 %v314, 0.0
  %v393 = vmax.f32 %v317, 0.0
  %v394 = vmax.f32 %v322, 0.0
  %v395 = vmax.f32 %v325, 0.0
  %v396 = vmax.f32 %v330, 0.0
  %v397 = vmax.f32 %v333, 0.0
  %v398 = vmax.f32 %v338, 0.0
  %v399 = vmax.f32 %v341, 0.0
  %v400 = vmax.f32 %v346, 0.0
  %v401 = vmax.f32 %v349, 0.0
  %v402 = vmax.f32 %v354, 0.0
  %v403 = vmax.f32 %v357, 0.0
  %v404 = vmax.f32 %v362, 0.0
  %v405 = vmax.f32 %v365, 0.0
  %v406 = vmax.f32 %v370, 0.0
  %v407 = vmax.f32 %v373, 0.0
  %v408 = vpack.c.bf16 %v377, %v376
  %v409 = vpack.c.bf16 %v379, %v378
  %v410 = vpack.c.bf16 %v381, %v380
  %v411 = vpack.c.bf16 %v383, %v382
  %v412 = vpack.c.bf16 %v385, %v384
  %v413 = vpack.c.bf16 %v387, %v386
  %v414 = vpack.c.bf16 %v389, %v388
  %v415 = vpack.c.bf16 %v391, %v390
  %v416 = vpack.c.bf16 %v393, %v392
  %v417 = vpack.c.bf16 %v395, %v394
  %v418 = vpack.c.bf16 %v397, %v396
  %v419 = vpack.c.bf16 %v399, %v398
  %v420 = vpack.c.bf16 %v401, %v400
  %v421 = vpack.c.bf16 %v403, %v402
  %v422 = vpack.c.bf16 %v405, %v404
  %v423 = vpack.c.bf16 %v407, %v406
  %v424 = vld [vmem:[%s3] sm:$0xf]
  %v425 = vld [vmem:[%s3 + $0x4] sm:$0xf]
  %v426 = vld [vmem:[%s3 + $0x8] sm:$0xf]
  %v427 = vld [vmem:[%s3 + $0xc] sm:$0xf]
  %v428 = vld [vmem:[%s3 + $0x10] sm:$0xf]
  %v429 = vld [vmem:[%s3 + $0x14] sm:$0xf]
  %v430 = vld [vmem:[%s3 + $0x18] sm:$0xf]
  %v431 = vld [vmem:[%s3 + $0x1c] sm:$0xf]
  %v432 = vld [vmem:[%s3 + $0x20] sm:$0xf]
  %v433 = vld [vmem:[%s3 + $0x24] sm:$0xf]
  %v434 = vld [vmem:[%s3 + $0x28] sm:$0xf]
  %v435 = vld [vmem:[%s3 + $0x2c] sm:$0xf]
  %v436 = vld [vmem:[%s3 + $0x30] sm:$0xf]
  %v437 = vld [vmem:[%s3 + $0x34] sm:$0xf]
  %v438 = vld [vmem:[%s3 + $0x38] sm:$0xf]
  %v439 = vld [vmem:[%s3 + $0x3c] sm:$0xf]
  %v440 = vld [vmem:[%s4] sm:$0x1]
  %v442 = vlaneseq
  %v443 = vshrl.u32 %v442, 7
  %v444 = vsub.s32 0, %v443
  %v445 = vrot.slane %v440, %v444
  %v463 = vunpack.c.l.b16 %v424
  %v464 = vunpack.c.l.b16 %v425
  %v465 = vunpack.c.l.b16 %v426
  %v466 = vunpack.c.l.b16 %v427
  %v467 = vunpack.c.l.b16 %v428
  %v468 = vunpack.c.l.b16 %v429
  %v469 = vunpack.c.l.b16 %v430
  %v470 = vunpack.c.l.b16 %v431
  %v471 = vunpack.c.l.b16 %v432
  %v472 = vunpack.c.l.b16 %v433
  %v473 = vunpack.c.l.b16 %v434
  %v474 = vunpack.c.l.b16 %v435
  %v475 = vunpack.c.l.b16 %v436
  %v476 = vunpack.c.l.b16 %v437
  %v477 = vunpack.c.l.b16 %v438
  %v478 = vunpack.c.l.b16 %v439
  %v479 = vpack.c.b16 %v464, %v463
  %v480 = vpack.c.b16 %v466, %v465
  %v481 = vpack.c.b16 %v468, %v467
  %v482 = vpack.c.b16 %v470, %v469
  %v483 = vpack.c.b16 %v472, %v471
  %v484 = vpack.c.b16 %v474, %v473
  %v485 = vpack.c.b16 %v476, %v475
  %v486 = vpack.c.b16 %v478, %v477
  %495 = vmatprep.subr.bf16.mxu0 0
  %496 = vmatpush1.bf16.msra.mxu0 %v486
  %497 = vmatprep.subr.bf16.mxu0 0
  %498 = vmatpush1.bf16.msra.mxu0 %v485
  %499 = vmatprep.subr.bf16.mxu0 0
  %500 = vmatpush1.bf16.msra.mxu0 %v484
  %501 = vmatprep.subr.bf16.mxu0 0
  %502 = vmatpush1.bf16.msra.mxu0 %v483
  %503 = vmatprep.subr.bf16.mxu0 0
  %504 = vmatpush1.bf16.msra.mxu0 %v482
  %505 = vmatprep.subr.bf16.mxu0 0
  %506 = vmatpush1.bf16.msra.mxu0 %v481
  %507 = vmatprep.subr.bf16.mxu0 0
  %508 = vmatpush1.bf16.msra.mxu0 %v480
  %509 = vmatprep.subr.bf16.mxu0 0
  %510 = vmatpush1.bf16.msra.mxu0 %v479
  %511 = vmatprep.subr.bf16.mxu0 0
  %512 = vmatpush2.bf16.msra.mxu0 0
  %513 = vmatprep.subr.bf16.mxu0 0
  %514 = vmatpush2.bf16.msra.mxu0 0
  %515 = vmatprep.subr.bf16.mxu0 0
  %516 = vmatpush2.bf16.msra.mxu0 0
  %517 = vmatprep.subr.bf16.mxu0 0
  %518 = vmatpush2.bf16.msra.mxu0 0
  %519 = vmatprep.subr.bf16.mxu0 0
  %520 = vmatpush2.bf16.msra.mxu0 0
  %521 = vmatprep.subr.bf16.mxu0 0
  %522 = vmatpush2.bf16.msra.mxu0 0
  %523 = vmatprep.subr.bf16.mxu0 0
  %524 = vmatpush2.bf16.msra.mxu0 0
  %525 = vmatprep.subr.bf16.mxu0 0
  %526 = vmatpush2.bf16.msra.mxu0 0
  %527 = vmatprep.mubr.bf16.mxu0 0
  %528 = vmatmul.mubr.bf16.gmra.mxu0 %v408
  %v529 = vpop.f32.mrf.mxu0
  %v530 = vadd.f32 %v445, %v529
  %v531 = vpop.f32.mrf.mxu0
  %v532 = vpop.f32.mrf.mxu0
  %v533 = vadd.f32 %v445, %v532
  %v534 = vpop.f32.mrf.mxu0
  %535 = vmatprep.mubr.bf16.mxu0 0
  %536 = vmatmul.mubr.bf16.gmra.mxu0 %v409
  %v537 = vpop.f32.mrf.mxu0
  %v538 = vadd.f32 %v445, %v537
  %v539 = vpop.f32.mrf.mxu0
  %v540 = vpop.f32.mrf.mxu0
  %v541 = vadd.f32 %v445, %v540
  %v542 = vpop.f32.mrf.mxu0
  %543 = vmatprep.mubr.bf16.mxu0 0
  %544 = vmatmul.mubr.bf16.gmra.mxu0 %v410
  %v545 = vpop.f32.mrf.mxu0
  %v546 = vadd.f32 %v445, %v545
  %v547 = vpop.f32.mrf.mxu0
  %v548 = vpop.f32.mrf.mxu0
  %v549 = vadd.f32 %v445, %v548
  %v550 = vpop.f32.mrf.mxu0
  %551 = vmatprep.mubr.bf16.mxu0 0
  %552 = vmatmul.mubr.bf16.gmra.mxu0 %v411
  %v553 = vpop.f32.mrf.mxu0
  %v554 = vadd.f32 %v445, %v553
  %v555 = vpop.f32.mrf.mxu0
  %v556 = vpop.f32.mrf.mxu0
  %v557 = vadd.f32 %v445, %v556
  %v558 = vpop.f32.mrf.mxu0
  %559 = vmatprep.mubr.bf16.mxu0 0
  %560 = vmatmul.mubr.bf16.gmra.mxu0 %v412
  %v561 = vpop.f32.mrf.mxu0
  %v562 = vadd.f32 %v445, %v561
  %v563 = vpop.f32.mrf.mxu0
  %v564 = vpop.f32.mrf.mxu0
  %v565 = vadd.f32 %v445, %v564
  %v566 = vpop.f32.mrf.mxu0
  %567 = vmatprep.mubr.bf16.mxu0 0
  %568 = vmatmul.mubr.bf16.gmra.mxu0 %v413
  %v569 = vpop.f32.mrf.mxu0
  %v570 = vadd.f32 %v445, %v569
  %v571 = vpop.f32.mrf.mxu0
  %v572 = vpop.f32.mrf.mxu0
  %v573 = vadd.f32 %v445, %v572
  %v574 = vpop.f32.mrf.mxu0
  %575 = vmatprep.mubr.bf16.mxu0 0
  %576 = vmatmul.mubr.bf16.gmra.mxu0 %v414
  %v577 = vpop.f32.mrf.mxu0
  %v578 = vadd.f32 %v445, %v577
  %v579 = vpop.f32.mrf.mxu0
  %v580 = vpop.f32.mrf.mxu0
  %v581 = vadd.f32 %v445, %v580
  %v582 = vpop.f32.mrf.mxu0
  %583 = vmatprep.mubr.bf16.mxu0 0
  %584 = vmatmul.mubr.bf16.gmra.mxu0 %v415
  %v585 = vpop.f32.mrf.mxu0
  %v586 = vadd.f32 %v445, %v585
  %v587 = vpop.f32.mrf.mxu0
  %v588 = vpop.f32.mrf.mxu0
  %v589 = vadd.f32 %v445, %v588
  %v590 = vpop.f32.mrf.mxu0
  %591 = vmatprep.mubr.bf16.mxu0 0
  %592 = vmatmul.mubr.bf16.gmra.mxu0 %v416
  %v593 = vpop.f32.mrf.mxu0
  %v594 = vadd.f32 %v445, %v593
  %v595 = vpop.f32.mrf.mxu0
  %v596 = vpop.f32.mrf.mxu0
  %v597 = vadd.f32 %v445, %v596
  %v598 = vpop.f32.mrf.mxu0
  %599 = vmatprep.mubr.bf16.mxu0 0
  %600 = vmatmul.mubr.bf16.gmra.mxu0 %v417
  %v601 = vpop.f32.mrf.mxu0
  %v602 = vadd.f32 %v445, %v601
  %v603 = vpop.f32.mrf.mxu0
  %v604 = vpop.f32.mrf.mxu0
  %v605 = vadd.f32 %v445, %v604
  %v606 = vpop.f32.mrf.mxu0
  %607 = vmatprep.mubr.bf16.mxu0 0
  %608 = vmatmul.mubr.bf16.gmra.mxu0 %v418
  %v609 = vpop.f32.mrf.mxu0
  %v610 = vadd.f32 %v445, %v609
  %v611 = vpop.f32.mrf.mxu0
  %v612 = vpop.f32.mrf.mxu0
  %v613 = vadd.f32 %v445, %v612
  %v614 = vpop.f32.mrf.mxu0
  %615 = vmatprep.mubr.bf16.mxu0 0
  %616 = vmatmul.mubr.bf16.gmra.mxu0 %v419
  %v617 = vpop.f32.mrf.mxu0
  %v618 = vadd.f32 %v445, %v617
  %v619 = vpop.f32.mrf.mxu0
  %v620 = vpop.f32.mrf.mxu0
  %v621 = vadd.f32 %v445, %v620
  %v622 = vpop.f32.mrf.mxu0
  %623 = vmatprep.mubr.bf16.mxu0 0
  %624 = vmatmul.mubr.bf16.gmra.mxu0 %v420
  %v625 = vpop.f32.mrf.mxu0
  %v626 = vadd.f32 %v445, %v625
  %v627 = vpop.f32.mrf.mxu0
  %v628 = vpop.f32.mrf.mxu0
  %v629 = vadd.f32 %v445, %v628
  %v630 = vpop.f32.mrf.mxu0
  %631 = vmatprep.mubr.bf16.mxu0 0
  %632 = vmatmul.mubr.bf16.gmra.mxu0 %v421
  %v633 = vpop.f32.mrf.mxu0
  %v634 = vadd.f32 %v445, %v633
  %v635 = vpop.f32.mrf.mxu0
  %v636 = vpop.f32.mrf.mxu0
  %v637 = vadd.f32 %v445, %v636
  %v638 = vpop.f32.mrf.mxu0
  %639 = vmatprep.mubr.bf16.mxu0 0
  %640 = vmatmul.mubr.bf16.gmra.mxu0 %v422
  %v641 = vpop.f32.mrf.mxu0
  %v642 = vadd.f32 %v445, %v641
  %v643 = vpop.f32.mrf.mxu0
  %v644 = vpop.f32.mrf.mxu0
  %v645 = vadd.f32 %v445, %v644
  %v646 = vpop.f32.mrf.mxu0
  %647 = vmatprep.mubr.bf16.mxu0 0
  %648 = vmatmul.mubr.bf16.gmra.mxu0 %v423
  %v649 = vpop.f32.mrf.mxu0
  %v650 = vadd.f32 %v445, %v649
  %v651 = vpop.f32.mrf.mxu0
  %v652 = vpop.f32.mrf.mxu0
  %v653 = vadd.f32 %v445, %v652
  %v654 = vpop.f32.mrf.mxu0
  %655 = vdwg.mxu0
  %v656 = vmax.f32 %v530, 0.0
  %v657 = vmax.f32 %v533, 0.0
  %v658 = vmax.f32 %v538, 0.0
  %v659 = vmax.f32 %v541, 0.0
  %v660 = vmax.f32 %v546, 0.0
  %v661 = vmax.f32 %v549, 0.0
  %v662 = vmax.f32 %v554, 0.0
  %v663 = vmax.f32 %v557, 0.0
  %v664 = vmax.f32 %v562, 0.0
  %v665 = vmax.f32 %v565, 0.0
  %v666 = vmax.f32 %v570, 0.0
  %v667 = vmax.f32 %v573, 0.0
  %v668 = vmax.f32 %v578, 0.0
  %v669 = vmax.f32 %v581, 0.0
  %v670 = vmax.f32 %v586, 0.0
  %v671 = vmax.f32 %v589, 0.0
  %v672 = vmax.f32 %v594, 0.0
  %v673 = vmax.f32 %v597, 0.0
  %v674 = vmax.f32 %v602, 0.0
  %v675 = vmax.f32 %v605, 0.0
  %v676 = vmax.f32 %v610, 0.0
  %v677 = vmax.f32 %v613, 0.0
  %v678 = vmax.f32 %v618, 0.0
  %v679 = vmax.f32 %v621, 0.0
  %v680 = vmax.f32 %v626, 0.0
  %v681 = vmax.f32 %v629, 0.0
  %v682 = vmax.f32 %v634, 0.0
  %v683 = vmax.f32 %v637, 0.0
  %v684 = vmax.f32 %v642, 0.0
  %v685 = vmax.f32 %v645, 0.0
  %v686 = vmax.f32 %v650, 0.0
  %v687 = vmax.f32 %v653, 0.0
  %v688 = vpack.c.bf16 %v657, %v656
  %v689 = vpack.c.bf16 %v659, %v658
  %v690 = vpack.c.bf16 %v661, %v660
  %v691 = vpack.c.bf16 %v663, %v662
  %v692 = vpack.c.bf16 %v665, %v664
  %v693 = vpack.c.bf16 %v667, %v666
  %v694 = vpack.c.bf16 %v669, %v668
  %v695 = vpack.c.bf16 %v671, %v670
  %v696 = vpack.c.bf16 %v673, %v672
  %v697 = vpack.c.bf16 %v675, %v674
  %v698 = vpack.c.bf16 %v677, %v676
  %v699 = vpack.c.bf16 %v679, %v678
  %v700 = vpack.c.bf16 %v681, %v680
  %v701 = vpack.c.bf16 %v683, %v682
  %v702 = vpack.c.bf16 %v685, %v684
  %v703 = vpack.c.bf16 %v687, %v686
  %v704 = vld [vmem:[%s5] sm:$0xf]
  %v705 = vld [vmem:[%s5 + $0x4] sm:$0xf]
  %v706 = vld [vmem:[%s5 + $0x8] sm:$0xf]
  %v707 = vld [vmem:[%s5 + $0xc] sm:$0xf]
  %v708 = vld [vmem:[%s5 + $0x10] sm:$0xf]
  %v709 = vld [vmem:[%s5 + $0x14] sm:$0xf]
  %v710 = vld [vmem:[%s5 + $0x18] sm:$0xf]
  %v711 = vld [vmem:[%s5 + $0x1c] sm:$0xf]
  %v712 = vld [vmem:[%s5 + $0x20] sm:$0xf]
  %v713 = vld [vmem:[%s5 + $0x24] sm:$0xf]
  %v714 = vld [vmem:[%s5 + $0x28] sm:$0xf]
  %v715 = vld [vmem:[%s5 + $0x2c] sm:$0xf]
  %v716 = vld [vmem:[%s5 + $0x30] sm:$0xf]
  %v717 = vld [vmem:[%s5 + $0x34] sm:$0xf]
  %v718 = vld [vmem:[%s5 + $0x38] sm:$0xf]
  %v719 = vld [vmem:[%s5 + $0x3c] sm:$0xf]
  %v720 = vld [vmem:[%s6] sm:$0x1]
  %v722 = vlaneseq
  %v723 = vshrl.u32 %v722, 7
  %v724 = vsub.s32 0, %v723
  %v725 = vrot.slane %v720, %v724
  %v743 = vunpack.c.l.b16 %v704
  %v744 = vunpack.c.l.b16 %v705
  %v745 = vunpack.c.l.b16 %v706
  %v746 = vunpack.c.l.b16 %v707
  %v747 = vunpack.c.l.b16 %v708
  %v748 = vunpack.c.l.b16 %v709
  %v749 = vunpack.c.l.b16 %v710
  %v750 = vunpack.c.l.b16 %v711
  %v751 = vunpack.c.l.b16 %v712
  %v752 = vunpack.c.l.b16 %v713
  %v753 = vunpack.c.l.b16 %v714
  %v754 = vunpack.c.l.b16 %v715
  %v755 = vunpack.c.l.b16 %v716
  %v756 = vunpack.c.l.b16 %v717
  %v757 = vunpack.c.l.b16 %v718
  %v758 = vunpack.c.l.b16 %v719
  %v759 = vpack.c.b16 %v744, %v743
  %v760 = vpack.c.b16 %v746, %v745
  %v761 = vpack.c.b16 %v748, %v747
  %v762 = vpack.c.b16 %v750, %v749
  %v763 = vpack.c.b16 %v752, %v751
  %v764 = vpack.c.b16 %v754, %v753
  %v765 = vpack.c.b16 %v756, %v755
  %v766 = vpack.c.b16 %v758, %v757
  %775 = vmatprep.subr.bf16.mxu0 0
  %776 = vmatpush1.bf16.msra.mxu0 %v766
  %777 = vmatprep.subr.bf16.mxu0 0
  %778 = vmatpush1.bf16.msra.mxu0 %v765
  %779 = vmatprep.subr.bf16.mxu0 0
  %780 = vmatpush1.bf16.msra.mxu0 %v764
  %781 = vmatprep.subr.bf16.mxu0 0
  %782 = vmatpush1.bf16.msra.mxu0 %v763
  %783 = vmatprep.subr.bf16.mxu0 0
  %784 = vmatpush1.bf16.msra.mxu0 %v762
  %785 = vmatprep.subr.bf16.mxu0 0
  %786 = vmatpush1.bf16.msra.mxu0 %v761
  %787 = vmatprep.subr.bf16.mxu0 0
  %788 = vmatpush1.bf16.msra.mxu0 %v760
  %789 = vmatprep.subr.bf16.mxu0 0
  %790 = vmatpush1.bf16.msra.mxu0 %v759
  %791 = vmatprep.subr.bf16.mxu0 0
  %792 = vmatpush2.bf16.msra.mxu0 0
  %793 = vmatprep.subr.bf16.mxu0 0
  %794 = vmatpush2.bf16.msra.mxu0 0
  %795 = vmatprep.subr.bf16.mxu0 0
  %796 = vmatpush2.bf16.msra.mxu0 0
  %797 = vmatprep.subr.bf16.mxu0 0
  %798 = vmatpush2.bf16.msra.mxu0 0
  %799 = vmatprep.subr.bf16.mxu0 0
  %800 = vmatpush2.bf16.msra.mxu0 0
  %801 = vmatprep.subr.bf16.mxu0 0
  %802 = vmatpush2.bf16.msra.mxu0 0
  %803 = vmatprep.subr.bf16.mxu0 0
  %804 = vmatpush2.bf16.msra.mxu0 0
  %805 = vmatprep.subr.bf16.mxu0 0
  %806 = vmatpush2.bf16.msra.mxu0 0
  %807 = vmatprep.mubr.bf16.mxu0 0
  %808 = vmatmul.mubr.bf16.gmra.mxu0 %v688
  %v809 = vpop.f32.mrf.mxu0
  %v810 = vadd.f32 %v725, %v809
  %v811 = vpop.f32.mrf.mxu0
  %v812 = vpop.f32.mrf.mxu0
  %v813 = vadd.f32 %v725, %v812
  %v814 = vpop.f32.mrf.mxu0
  %815 = vmatprep.mubr.bf16.mxu0 0
  %816 = vmatmul.mubr.bf16.gmra.mxu0 %v689
  %v817 = vpop.f32.mrf.mxu0
  %v818 = vadd.f32 %v725, %v817
  %v819 = vpop.f32.mrf.mxu0
  %v820 = vpop.f32.mrf.mxu0
  %v821 = vadd.f32 %v725, %v820
  %v822 = vpop.f32.mrf.mxu0
  %823 = vmatprep.mubr.bf16.mxu0 0
  %824 = vmatmul.mubr.bf16.gmra.mxu0 %v690
  %v825 = vpop.f32.mrf.mxu0
  %v826 = vadd.f32 %v725, %v825
  %v827 = vpop.f32.mrf.mxu0
  %v828 = vpop.f32.mrf.mxu0
  %v829 = vadd.f32 %v725, %v828
  %v830 = vpop.f32.mrf.mxu0
  %831 = vmatprep.mubr.bf16.mxu0 0
  %832 = vmatmul.mubr.bf16.gmra.mxu0 %v691
  %v833 = vpop.f32.mrf.mxu0
  %v834 = vadd.f32 %v725, %v833
  %v835 = vpop.f32.mrf.mxu0
  %v836 = vpop.f32.mrf.mxu0
  %v837 = vadd.f32 %v725, %v836
  %v838 = vpop.f32.mrf.mxu0
  %839 = vmatprep.mubr.bf16.mxu0 0
  %840 = vmatmul.mubr.bf16.gmra.mxu0 %v692
  %v841 = vpop.f32.mrf.mxu0
  %v842 = vadd.f32 %v725, %v841
  %v843 = vpop.f32.mrf.mxu0
  %v844 = vpop.f32.mrf.mxu0
  %v845 = vadd.f32 %v725, %v844
  %v846 = vpop.f32.mrf.mxu0
  %847 = vmatprep.mubr.bf16.mxu0 0
  %848 = vmatmul.mubr.bf16.gmra.mxu0 %v693
  %v849 = vpop.f32.mrf.mxu0
  %v850 = vadd.f32 %v725, %v849
  %v851 = vpop.f32.mrf.mxu0
  %v852 = vpop.f32.mrf.mxu0
  %v853 = vadd.f32 %v725, %v852
  %v854 = vpop.f32.mrf.mxu0
  %855 = vmatprep.mubr.bf16.mxu0 0
  %856 = vmatmul.mubr.bf16.gmra.mxu0 %v694
  %v857 = vpop.f32.mrf.mxu0
  %v858 = vadd.f32 %v725, %v857
  %v859 = vpop.f32.mrf.mxu0
  %v860 = vpop.f32.mrf.mxu0
  %v861 = vadd.f32 %v725, %v860
  %v862 = vpop.f32.mrf.mxu0
  %863 = vmatprep.mubr.bf16.mxu0 0
  %864 = vmatmul.mubr.bf16.gmra.mxu0 %v695
  %v865 = vpop.f32.mrf.mxu0
  %v866 = vadd.f32 %v725, %v865
  %v867 = vpop.f32.mrf.mxu0
  %v868 = vpop.f32.mrf.mxu0
  %v869 = vadd.f32 %v725, %v868
  %v870 = vpop.f32.mrf.mxu0
  %871 = vmatprep.mubr.bf16.mxu0 0
  %872 = vmatmul.mubr.bf16.gmra.mxu0 %v696
  %v873 = vpop.f32.mrf.mxu0
  %v874 = vadd.f32 %v725, %v873
  %v875 = vpop.f32.mrf.mxu0
  %v876 = vpop.f32.mrf.mxu0
  %v877 = vadd.f32 %v725, %v876
  %v878 = vpop.f32.mrf.mxu0
  %879 = vmatprep.mubr.bf16.mxu0 0
  %880 = vmatmul.mubr.bf16.gmra.mxu0 %v697
  %v881 = vpop.f32.mrf.mxu0
  %v882 = vadd.f32 %v725, %v881
  %v883 = vpop.f32.mrf.mxu0
  %v884 = vpop.f32.mrf.mxu0
  %v885 = vadd.f32 %v725, %v884
  %v886 = vpop.f32.mrf.mxu0
  %887 = vmatprep.mubr.bf16.mxu0 0
  %888 = vmatmul.mubr.bf16.gmra.mxu0 %v698
  %v889 = vpop.f32.mrf.mxu0
  %v890 = vadd.f32 %v725, %v889
  %v891 = vpop.f32.mrf.mxu0
  %v892 = vpop.f32.mrf.mxu0
  %v893 = vadd.f32 %v725, %v892
  %v894 = vpop.f32.mrf.mxu0
  %895 = vmatprep.mubr.bf16.mxu0 0
  %896 = vmatmul.mubr.bf16.gmra.mxu0 %v699
  %v897 = vpop.f32.mrf.mxu0
  %v898 = vadd.f32 %v725, %v897
  %v899 = vpop.f32.mrf.mxu0
  %v900 = vpop.f32.mrf.mxu0
  %v901 = vadd.f32 %v725, %v900
  %v902 = vpop.f32.mrf.mxu0
  %903 = vmatprep.mubr.bf16.mxu0 0
  %904 = vmatmul.mubr.bf16.gmra.mxu0 %v700
  %v905 = vpop.f32.mrf.mxu0
  %v906 = vadd.f32 %v725, %v905
  %v907 = vpop.f32.mrf.mxu0
  %v908 = vpop.f32.mrf.mxu0
  %v909 = vadd.f32 %v725, %v908
  %v910 = vpop.f32.mrf.mxu0
  %911 = vmatprep.mubr.bf16.mxu0 0
  %912 = vmatmul.mubr.bf16.gmra.mxu0 %v701
  %v913 = vpop.f32.mrf.mxu0
  %v914 = vadd.f32 %v725, %v913
  %v915 = vpop.f32.mrf.mxu0
  %v916 = vpop.f32.mrf.mxu0
  %v917 = vadd.f32 %v725, %v916
  %v918 = vpop.f32.mrf.mxu0
  %919 = vmatprep.mubr.bf16.mxu0 0
  %920 = vmatmul.mubr.bf16.gmra.mxu0 %v702
  %v921 = vpop.f32.mrf.mxu0
  %v922 = vadd.f32 %v725, %v921
  %v923 = vpop.f32.mrf.mxu0
  %v924 = vpop.f32.mrf.mxu0
  %v925 = vadd.f32 %v725, %v924
  %v926 = vpop.f32.mrf.mxu0
  %927 = vmatprep.mubr.bf16.mxu0 0
  %928 = vmatmul.mubr.bf16.gmra.mxu0 %v703
  %v929 = vpop.f32.mrf.mxu0
  %v930 = vadd.f32 %v725, %v929
  %v931 = vpop.f32.mrf.mxu0
  %v932 = vpop.f32.mrf.mxu0
  %v933 = vadd.f32 %v725, %v932
  %v934 = vpop.f32.mrf.mxu0
  %935 = vdwg.mxu0
  %v936 = vmax.f32 %v810, 0.0
  %v937 = vmax.f32 %v813, 0.0
  %v938 = vmax.f32 %v818, 0.0
  %v939 = vmax.f32 %v821, 0.0
  %v940 = vmax.f32 %v826, 0.0
  %v941 = vmax.f32 %v829, 0.0
  %v942 = vmax.f32 %v834, 0.0
  %v943 = vmax.f32 %v837, 0.0
  %v944 = vmax.f32 %v842, 0.0
  %v945 = vmax.f32 %v845, 0.0
  %v946 = vmax.f32 %v850, 0.0
  %v947 = vmax.f32 %v853, 0.0
  %v948 = vmax.f32 %v858, 0.0
  %v949 = vmax.f32 %v861, 0.0
  %v950 = vmax.f32 %v866, 0.0
  %v951 = vmax.f32 %v869, 0.0
  %v952 = vmax.f32 %v874, 0.0
  %v953 = vmax.f32 %v877, 0.0
  %v954 = vmax.f32 %v882, 0.0
  %v955 = vmax.f32 %v885, 0.0
  %v956 = vmax.f32 %v890, 0.0
  %v957 = vmax.f32 %v893, 0.0
  %v958 = vmax.f32 %v898, 0.0
  %v959 = vmax.f32 %v901, 0.0
  %v960 = vmax.f32 %v906, 0.0
  %v961 = vmax.f32 %v909, 0.0
  %v962 = vmax.f32 %v914, 0.0
  %v963 = vmax.f32 %v917, 0.0
  %v964 = vmax.f32 %v922, 0.0
  %v965 = vmax.f32 %v925, 0.0
  %v966 = vmax.f32 %v930, 0.0
  %v967 = vmax.f32 %v933, 0.0
  %v968 = vpack.c.bf16 %v937, %v936
  %v969 = vpack.c.bf16 %v939, %v938
  %v970 = vpack.c.bf16 %v941, %v940
  %v971 = vpack.c.bf16 %v943, %v942
  %v972 = vpack.c.bf16 %v945, %v944
  %v973 = vpack.c.bf16 %v947, %v946
  %v974 = vpack.c.bf16 %v949, %v948
  %v975 = vpack.c.bf16 %v951, %v950
  %v976 = vpack.c.bf16 %v953, %v952
  %v977 = vpack.c.bf16 %v955, %v954
  %v978 = vpack.c.bf16 %v957, %v956
  %v979 = vpack.c.bf16 %v959, %v958
  %v980 = vpack.c.bf16 %v961, %v960
  %v981 = vpack.c.bf16 %v963, %v962
  %v982 = vpack.c.bf16 %v965, %v964
  %v983 = vpack.c.bf16 %v967, %v966
  %v984 = vld [vmem:[%s7] sm:$0xf]
  %v985 = vld [vmem:[%s7 + $0x4] sm:$0xf]
  %v986 = vld [vmem:[%s7 + $0x8] sm:$0xf]
  %v987 = vld [vmem:[%s7 + $0xc] sm:$0xf]
  %v988 = vld [vmem:[%s7 + $0x10] sm:$0xf]
  %v989 = vld [vmem:[%s7 + $0x14] sm:$0xf]
  %v990 = vld [vmem:[%s7 + $0x18] sm:$0xf]
  %v991 = vld [vmem:[%s7 + $0x1c] sm:$0xf]
  %v992 = vld [vmem:[%s7 + $0x20] sm:$0xf]
  %v993 = vld [vmem:[%s7 + $0x24] sm:$0xf]
  %v994 = vld [vmem:[%s7 + $0x28] sm:$0xf]
  %v995 = vld [vmem:[%s7 + $0x2c] sm:$0xf]
  %v996 = vld [vmem:[%s7 + $0x30] sm:$0xf]
  %v997 = vld [vmem:[%s7 + $0x34] sm:$0xf]
  %v998 = vld [vmem:[%s7 + $0x38] sm:$0xf]
  %v999 = vld [vmem:[%s7 + $0x3c] sm:$0xf]
  %v1000 = vld [vmem:[%s8] sm:$0x1]
  %v1002 = vlaneseq
  %v1003 = vshrl.u32 %v1002, 7
  %v1004 = vsub.s32 0, %v1003
  %v1005 = vrot.slane %v1000, %v1004
  %v1023 = vunpack.c.l.b16 %v984
  %v1024 = vunpack.c.l.b16 %v985
  %v1025 = vunpack.c.l.b16 %v986
  %v1026 = vunpack.c.l.b16 %v987
  %v1027 = vunpack.c.l.b16 %v988
  %v1028 = vunpack.c.l.b16 %v989
  %v1029 = vunpack.c.l.b16 %v990
  %v1030 = vunpack.c.l.b16 %v991
  %v1031 = vunpack.c.l.b16 %v992
  %v1032 = vunpack.c.l.b16 %v993
  %v1033 = vunpack.c.l.b16 %v994
  %v1034 = vunpack.c.l.b16 %v995
  %v1035 = vunpack.c.l.b16 %v996
  %v1036 = vunpack.c.l.b16 %v997
  %v1037 = vunpack.c.l.b16 %v998
  %v1038 = vunpack.c.l.b16 %v999
  %v1039 = vpack.c.b16 %v1024, %v1023
  %v1040 = vpack.c.b16 %v1026, %v1025
  %v1041 = vpack.c.b16 %v1028, %v1027
  %v1042 = vpack.c.b16 %v1030, %v1029
  %v1043 = vpack.c.b16 %v1032, %v1031
  %v1044 = vpack.c.b16 %v1034, %v1033
  %v1045 = vpack.c.b16 %v1036, %v1035
  %v1046 = vpack.c.b16 %v1038, %v1037
  %1055 = vmatprep.subr.bf16.mxu0 0
  %1056 = vmatpush1.bf16.msra.mxu0 %v1046
  %1057 = vmatprep.subr.bf16.mxu0 0
  %1058 = vmatpush1.bf16.msra.mxu0 %v1045
  %1059 = vmatprep.subr.bf16.mxu0 0
  %1060 = vmatpush1.bf16.msra.mxu0 %v1044
  %1061 = vmatprep.subr.bf16.mxu0 0
  %1062 = vmatpush1.bf16.msra.mxu0 %v1043
  %1063 = vmatprep.subr.bf16.mxu0 0
  %1064 = vmatpush1.bf16.msra.mxu0 %v1042
  %1065 = vmatprep.subr.bf16.mxu0 0
  %1066 = vmatpush1.bf16.msra.mxu0 %v1041
  %1067 = vmatprep.subr.bf16.mxu0 0
  %1068 = vmatpush1.bf16.msra.mxu0 %v1040
  %1069 = vmatprep.subr.bf16.mxu0 0
  %1070 = vmatpush1.bf16.msra.mxu0 %v1039
  %1071 = vmatprep.subr.bf16.mxu0 0
  %1072 = vmatpush2.bf16.msra.mxu0 0
  %1073 = vmatprep.subr.bf16.mxu0 0
  %1074 = vmatpush2.bf16.msra.mxu0 0
  %1075 = vmatprep.subr.bf16.mxu0 0
  %1076 = vmatpush2.bf16.msra.mxu0 0
  %1077 = vmatprep.subr.bf16.mxu0 0
  %1078 = vmatpush2.bf16.msra.mxu0 0
  %1079 = vmatprep.subr.bf16.mxu0 0
  %1080 = vmatpush2.bf16.msra.mxu0 0
  %1081 = vmatprep.subr.bf16.mxu0 0
  %1082 = vmatpush2.bf16.msra.mxu0 0
  %1083 = vmatprep.subr.bf16.mxu0 0
  %1084 = vmatpush2.bf16.msra.mxu0 0
  %1085 = vmatprep.subr.bf16.mxu0 0
  %1086 = vmatpush2.bf16.msra.mxu0 0
  %1087 = vmatprep.mubr.bf16.mxu0 0
  %1088 = vmatmul.mubr.bf16.gmra.mxu0 %v968
  %v1089 = vpop.f32.mrf.mxu0
  %v1090 = vadd.f32 %v1005, %v1089
  %v1091 = vpop.f32.mrf.mxu0
  %v1092 = vpop.f32.mrf.mxu0
  %v1093 = vadd.f32 %v1005, %v1092
  %v1094 = vpop.f32.mrf.mxu0
  %1095 = vmatprep.mubr.bf16.mxu0 0
  %1096 = vmatmul.mubr.bf16.gmra.mxu0 %v969
  %v1097 = vpop.f32.mrf.mxu0
  %v1098 = vadd.f32 %v1005, %v1097
  %v1099 = vpop.f32.mrf.mxu0
  %v1100 = vpop.f32.mrf.mxu0
  %v1101 = vadd.f32 %v1005, %v1100
  %v1102 = vpop.f32.mrf.mxu0
  %1103 = vmatprep.mubr.bf16.mxu0 0
  %1104 = vmatmul.mubr.bf16.gmra.mxu0 %v970
  %v1105 = vpop.f32.mrf.mxu0
  %v1106 = vadd.f32 %v1005, %v1105
  %v1107 = vpop.f32.mrf.mxu0
  %v1108 = vpop.f32.mrf.mxu0
  %v1109 = vadd.f32 %v1005, %v1108
  %v1110 = vpop.f32.mrf.mxu0
  %1111 = vmatprep.mubr.bf16.mxu0 0
  %1112 = vmatmul.mubr.bf16.gmra.mxu0 %v971
  %v1113 = vpop.f32.mrf.mxu0
  %v1114 = vadd.f32 %v1005, %v1113
  %v1115 = vpop.f32.mrf.mxu0
  %v1116 = vpop.f32.mrf.mxu0
  %v1117 = vadd.f32 %v1005, %v1116
  %v1118 = vpop.f32.mrf.mxu0
  %1119 = vmatprep.mubr.bf16.mxu0 0
  %1120 = vmatmul.mubr.bf16.gmra.mxu0 %v972
  %v1121 = vpop.f32.mrf.mxu0
  %v1122 = vadd.f32 %v1005, %v1121
  %v1123 = vpop.f32.mrf.mxu0
  %v1124 = vpop.f32.mrf.mxu0
  %v1125 = vadd.f32 %v1005, %v1124
  %v1126 = vpop.f32.mrf.mxu0
  %1127 = vmatprep.mubr.bf16.mxu0 0
  %1128 = vmatmul.mubr.bf16.gmra.mxu0 %v973
  %v1129 = vpop.f32.mrf.mxu0
  %v1130 = vadd.f32 %v1005, %v1129
  %v1131 = vpop.f32.mrf.mxu0
  %v1132 = vpop.f32.mrf.mxu0
  %v1133 = vadd.f32 %v1005, %v1132
  %v1134 = vpop.f32.mrf.mxu0
  %1135 = vmatprep.mubr.bf16.mxu0 0
  %1136 = vmatmul.mubr.bf16.gmra.mxu0 %v974
  %v1137 = vpop.f32.mrf.mxu0
  %v1138 = vadd.f32 %v1005, %v1137
  %v1139 = vpop.f32.mrf.mxu0
  %v1140 = vpop.f32.mrf.mxu0
  %v1141 = vadd.f32 %v1005, %v1140
  %v1142 = vpop.f32.mrf.mxu0
  %1143 = vmatprep.mubr.bf16.mxu0 0
  %1144 = vmatmul.mubr.bf16.gmra.mxu0 %v975
  %v1145 = vpop.f32.mrf.mxu0
  %v1146 = vadd.f32 %v1005, %v1145
  %v1147 = vpop.f32.mrf.mxu0
  %v1148 = vpop.f32.mrf.mxu0
  %v1149 = vadd.f32 %v1005, %v1148
  %v1150 = vpop.f32.mrf.mxu0
  %1151 = vmatprep.mubr.bf16.mxu0 0
  %1152 = vmatmul.mubr.bf16.gmra.mxu0 %v976
  %v1153 = vpop.f32.mrf.mxu0
  %v1154 = vadd.f32 %v1005, %v1153
  %v1155 = vpop.f32.mrf.mxu0
  %v1156 = vpop.f32.mrf.mxu0
  %v1157 = vadd.f32 %v1005, %v1156
  %v1158 = vpop.f32.mrf.mxu0
  %1159 = vmatprep.mubr.bf16.mxu0 0
  %1160 = vmatmul.mubr.bf16.gmra.mxu0 %v977
  %v1161 = vpop.f32.mrf.mxu0
  %v1162 = vadd.f32 %v1005, %v1161
  %v1163 = vpop.f32.mrf.mxu0
  %v1164 = vpop.f32.mrf.mxu0
  %v1165 = vadd.f32 %v1005, %v1164
  %v1166 = vpop.f32.mrf.mxu0
  %1167 = vmatprep.mubr.bf16.mxu0 0
  %1168 = vmatmul.mubr.bf16.gmra.mxu0 %v978
  %v1169 = vpop.f32.mrf.mxu0
  %v1170 = vadd.f32 %v1005, %v1169
  %v1171 = vpop.f32.mrf.mxu0
  %v1172 = vpop.f32.mrf.mxu0
  %v1173 = vadd.f32 %v1005, %v1172
  %v1174 = vpop.f32.mrf.mxu0
  %1175 = vmatprep.mubr.bf16.mxu0 0
  %1176 = vmatmul.mubr.bf16.gmra.mxu0 %v979
  %v1177 = vpop.f32.mrf.mxu0
  %v1178 = vadd.f32 %v1005, %v1177
  %v1179 = vpop.f32.mrf.mxu0
  %v1180 = vpop.f32.mrf.mxu0
  %v1181 = vadd.f32 %v1005, %v1180
  %v1182 = vpop.f32.mrf.mxu0
  %1183 = vmatprep.mubr.bf16.mxu0 0
  %1184 = vmatmul.mubr.bf16.gmra.mxu0 %v980
  %v1185 = vpop.f32.mrf.mxu0
  %v1186 = vadd.f32 %v1005, %v1185
  %v1187 = vpop.f32.mrf.mxu0
  %v1188 = vpop.f32.mrf.mxu0
  %v1189 = vadd.f32 %v1005, %v1188
  %v1190 = vpop.f32.mrf.mxu0
  %1191 = vmatprep.mubr.bf16.mxu0 0
  %1192 = vmatmul.mubr.bf16.gmra.mxu0 %v981
  %v1193 = vpop.f32.mrf.mxu0
  %v1194 = vadd.f32 %v1005, %v1193
  %v1195 = vpop.f32.mrf.mxu0
  %v1196 = vpop.f32.mrf.mxu0
  %v1197 = vadd.f32 %v1005, %v1196
  %v1198 = vpop.f32.mrf.mxu0
  %1199 = vmatprep.mubr.bf16.mxu0 0
  %1200 = vmatmul.mubr.bf16.gmra.mxu0 %v982
  %v1201 = vpop.f32.mrf.mxu0
  %v1202 = vadd.f32 %v1005, %v1201
  %v1203 = vpop.f32.mrf.mxu0
  %v1204 = vpop.f32.mrf.mxu0
  %v1205 = vadd.f32 %v1005, %v1204
  %v1206 = vpop.f32.mrf.mxu0
  %1207 = vmatprep.mubr.bf16.mxu0 0
  %1208 = vmatmul.mubr.bf16.gmra.mxu0 %v983
  %v1209 = vpop.f32.mrf.mxu0
  %v1210 = vadd.f32 %v1005, %v1209
  %v1211 = vpop.f32.mrf.mxu0
  %v1212 = vpop.f32.mrf.mxu0
  %v1213 = vadd.f32 %v1005, %v1212
  %v1214 = vpop.f32.mrf.mxu0
  %1215 = vdwg.mxu0
  %v1216 = vmax.f32 %v1090, 0.0
  %v1217 = vmax.f32 %v1093, 0.0
  %v1218 = vmax.f32 %v1098, 0.0
  %v1219 = vmax.f32 %v1101, 0.0
  %v1220 = vmax.f32 %v1106, 0.0
  %v1221 = vmax.f32 %v1109, 0.0
  %v1222 = vmax.f32 %v1114, 0.0
  %v1223 = vmax.f32 %v1117, 0.0
  %v1224 = vmax.f32 %v1122, 0.0
  %v1225 = vmax.f32 %v1125, 0.0
  %v1226 = vmax.f32 %v1130, 0.0
  %v1227 = vmax.f32 %v1133, 0.0
  %v1228 = vmax.f32 %v1138, 0.0
  %v1229 = vmax.f32 %v1141, 0.0
  %v1230 = vmax.f32 %v1146, 0.0
  %v1231 = vmax.f32 %v1149, 0.0
  %v1232 = vmax.f32 %v1154, 0.0
  %v1233 = vmax.f32 %v1157, 0.0
  %v1234 = vmax.f32 %v1162, 0.0
  %v1235 = vmax.f32 %v1165, 0.0
  %v1236 = vmax.f32 %v1170, 0.0
  %v1237 = vmax.f32 %v1173, 0.0
  %v1238 = vmax.f32 %v1178, 0.0
  %v1239 = vmax.f32 %v1181, 0.0
  %v1240 = vmax.f32 %v1186, 0.0
  %v1241 = vmax.f32 %v1189, 0.0
  %v1242 = vmax.f32 %v1194, 0.0
  %v1243 = vmax.f32 %v1197, 0.0
  %v1244 = vmax.f32 %v1202, 0.0
  %v1245 = vmax.f32 %v1205, 0.0
  %v1246 = vmax.f32 %v1210, 0.0
  %v1247 = vmax.f32 %v1213, 0.0
  %v1248 = vpack.c.bf16 %v1217, %v1216
  %v1249 = vpack.c.bf16 %v1219, %v1218
  %v1250 = vpack.c.bf16 %v1221, %v1220
  %v1251 = vpack.c.bf16 %v1223, %v1222
  %v1252 = vpack.c.bf16 %v1225, %v1224
  %v1253 = vpack.c.bf16 %v1227, %v1226
  %v1254 = vpack.c.bf16 %v1229, %v1228
  %v1255 = vpack.c.bf16 %v1231, %v1230
  %v1256 = vpack.c.bf16 %v1233, %v1232
  %v1257 = vpack.c.bf16 %v1235, %v1234
  %v1258 = vpack.c.bf16 %v1237, %v1236
  %v1259 = vpack.c.bf16 %v1239, %v1238
  %v1260 = vpack.c.bf16 %v1241, %v1240
  %v1261 = vpack.c.bf16 %v1243, %v1242
  %v1262 = vpack.c.bf16 %v1245, %v1244
  %v1263 = vpack.c.bf16 %v1247, %v1246
  %v1264 = vld [vmem:[%s9] sm:$0xf]
  %v1265 = vld [vmem:[%s9 + $0x4] sm:$0xf]
  %v1266 = vld [vmem:[%s9 + $0x8] sm:$0xf]
  %v1267 = vld [vmem:[%s9 + $0xc] sm:$0xf]
  %v1268 = vld [vmem:[%s9 + $0x10] sm:$0xf]
  %v1269 = vld [vmem:[%s9 + $0x14] sm:$0xf]
  %v1270 = vld [vmem:[%s9 + $0x18] sm:$0xf]
  %v1271 = vld [vmem:[%s9 + $0x1c] sm:$0xf]
  %v1272 = vld [vmem:[%s9 + $0x20] sm:$0xf]
  %v1273 = vld [vmem:[%s9 + $0x24] sm:$0xf]
  %v1274 = vld [vmem:[%s9 + $0x28] sm:$0xf]
  %v1275 = vld [vmem:[%s9 + $0x2c] sm:$0xf]
  %v1276 = vld [vmem:[%s9 + $0x30] sm:$0xf]
  %v1277 = vld [vmem:[%s9 + $0x34] sm:$0xf]
  %v1278 = vld [vmem:[%s9 + $0x38] sm:$0xf]
  %v1279 = vld [vmem:[%s9 + $0x3c] sm:$0xf]
  %v1280 = vld [vmem:[%s10] sm:$0x1]
  %v1282 = vlaneseq
  %v1283 = vshrl.u32 %v1282, 7
  %v1284 = vsub.s32 0, %v1283
  %v1285 = vrot.slane %v1280, %v1284
  %v1303 = vunpack.c.l.b16 %v1264
  %v1304 = vunpack.c.l.b16 %v1265
  %v1305 = vunpack.c.l.b16 %v1266
  %v1306 = vunpack.c.l.b16 %v1267
  %v1307 = vunpack.c.l.b16 %v1268
  %v1308 = vunpack.c.l.b16 %v1269
  %v1309 = vunpack.c.l.b16 %v1270
  %v1310 = vunpack.c.l.b16 %v1271
  %v1311 = vunpack.c.l.b16 %v1272
  %v1312 = vunpack.c.l.b16 %v1273
  %v1313 = vunpack.c.l.b16 %v1274
  %v1314 = vunpack.c.l.b16 %v1275
  %v1315 = vunpack.c.l.b16 %v1276
  %v1316 = vunpack.c.l.b16 %v1277
  %v1317 = vunpack.c.l.b16 %v1278
  %v1318 = vunpack.c.l.b16 %v1279
  %v1319 = vpack.c.b16 %v1304, %v1303
  %v1320 = vpack.c.b16 %v1306, %v1305
  %v1321 = vpack.c.b16 %v1308, %v1307
  %v1322 = vpack.c.b16 %v1310, %v1309
  %v1323 = vpack.c.b16 %v1312, %v1311
  %v1324 = vpack.c.b16 %v1314, %v1313
  %v1325 = vpack.c.b16 %v1316, %v1315
  %v1326 = vpack.c.b16 %v1318, %v1317
  %1335 = vmatprep.subr.bf16.mxu0 0
  %1336 = vmatpush1.bf16.msra.mxu0 %v1326
  %1337 = vmatprep.subr.bf16.mxu0 0
  %1338 = vmatpush1.bf16.msra.mxu0 %v1325
  %1339 = vmatprep.subr.bf16.mxu0 0
  %1340 = vmatpush1.bf16.msra.mxu0 %v1324
  %1341 = vmatprep.subr.bf16.mxu0 0
  %1342 = vmatpush1.bf16.msra.mxu0 %v1323
  %1343 = vmatprep.subr.bf16.mxu0 0
  %1344 = vmatpush1.bf16.msra.mxu0 %v1322
  %1345 = vmatprep.subr.bf16.mxu0 0
  %1346 = vmatpush1.bf16.msra.mxu0 %v1321
  %1347 = vmatprep.subr.bf16.mxu0 0
  %1348 = vmatpush1.bf16.msra.mxu0 %v1320
  %1349 = vmatprep.subr.bf16.mxu0 0
  %1350 = vmatpush1.bf16.msra.mxu0 %v1319
  %1351 = vmatprep.subr.bf16.mxu0 0
  %1352 = vmatpush2.bf16.msra.mxu0 0
  %1353 = vmatprep.subr.bf16.mxu0 0
  %1354 = vmatpush2.bf16.msra.mxu0 0
  %1355 = vmatprep.subr.bf16.mxu0 0
  %1356 = vmatpush2.bf16.msra.mxu0 0
  %1357 = vmatprep.subr.bf16.mxu0 0
  %1358 = vmatpush2.bf16.msra.mxu0 0
  %1359 = vmatprep.subr.bf16.mxu0 0
  %1360 = vmatpush2.bf16.msra.mxu0 0
  %1361 = vmatprep.subr.bf16.mxu0 0
  %1362 = vmatpush2.bf16.msra.mxu0 0
  %1363 = vmatprep.subr.bf16.mxu0 0
  %1364 = vmatpush2.bf16.msra.mxu0 0
  %1365 = vmatprep.subr.bf16.mxu0 0
  %1366 = vmatpush2.bf16.msra.mxu0 0
  %1367 = vmatprep.mubr.bf16.mxu0 0
  %1368 = vmatmul.mubr.bf16.gmra.mxu0 %v1248
  %v1369 = vpop.f32.mrf.mxu0
  %v1370 = vadd.f32 %v1285, %v1369
  %v1371 = vpop.f32.mrf.mxu0
  %v1372 = vpop.f32.mrf.mxu0
  %v1373 = vadd.f32 %v1285, %v1372
  %v1374 = vpop.f32.mrf.mxu0
  %1375 = vmatprep.mubr.bf16.mxu0 0
  %1376 = vmatmul.mubr.bf16.gmra.mxu0 %v1249
  %v1377 = vpop.f32.mrf.mxu0
  %v1378 = vadd.f32 %v1285, %v1377
  %v1379 = vpop.f32.mrf.mxu0
  %v1380 = vpop.f32.mrf.mxu0
  %v1381 = vadd.f32 %v1285, %v1380
  %v1382 = vpop.f32.mrf.mxu0
  %1383 = vmatprep.mubr.bf16.mxu0 0
  %1384 = vmatmul.mubr.bf16.gmra.mxu0 %v1250
  %v1385 = vpop.f32.mrf.mxu0
  %v1386 = vadd.f32 %v1285, %v1385
  %v1387 = vpop.f32.mrf.mxu0
  %v1388 = vpop.f32.mrf.mxu0
  %v1389 = vadd.f32 %v1285, %v1388
  %v1390 = vpop.f32.mrf.mxu0
  %1391 = vmatprep.mubr.bf16.mxu0 0
  %1392 = vmatmul.mubr.bf16.gmra.mxu0 %v1251
  %v1393 = vpop.f32.mrf.mxu0
  %v1394 = vadd.f32 %v1285, %v1393
  %v1395 = vpop.f32.mrf.mxu0
  %v1396 = vpop.f32.mrf.mxu0
  %v1397 = vadd.f32 %v1285, %v1396
  %v1398 = vpop.f32.mrf.mxu0
  %1399 = vmatprep.mubr.bf16.mxu0 0
  %1400 = vmatmul.mubr.bf16.gmra.mxu0 %v1252
  %v1401 = vpop.f32.mrf.mxu0
  %v1402 = vadd.f32 %v1285, %v1401
  %v1403 = vpop.f32.mrf.mxu0
  %v1404 = vpop.f32.mrf.mxu0
  %v1405 = vadd.f32 %v1285, %v1404
  %v1406 = vpop.f32.mrf.mxu0
  %1407 = vmatprep.mubr.bf16.mxu0 0
  %1408 = vmatmul.mubr.bf16.gmra.mxu0 %v1253
  %v1409 = vpop.f32.mrf.mxu0
  %v1410 = vadd.f32 %v1285, %v1409
  %v1411 = vpop.f32.mrf.mxu0
  %v1412 = vpop.f32.mrf.mxu0
  %v1413 = vadd.f32 %v1285, %v1412
  %v1414 = vpop.f32.mrf.mxu0
  %1415 = vmatprep.mubr.bf16.mxu0 0
  %1416 = vmatmul.mubr.bf16.gmra.mxu0 %v1254
  %v1417 = vpop.f32.mrf.mxu0
  %v1418 = vadd.f32 %v1285, %v1417
  %v1419 = vpop.f32.mrf.mxu0
  %v1420 = vpop.f32.mrf.mxu0
  %v1421 = vadd.f32 %v1285, %v1420
  %v1422 = vpop.f32.mrf.mxu0
  %1423 = vmatprep.mubr.bf16.mxu0 0
  %1424 = vmatmul.mubr.bf16.gmra.mxu0 %v1255
  %v1425 = vpop.f32.mrf.mxu0
  %v1426 = vadd.f32 %v1285, %v1425
  %v1427 = vpop.f32.mrf.mxu0
  %v1428 = vpop.f32.mrf.mxu0
  %v1429 = vadd.f32 %v1285, %v1428
  %v1430 = vpop.f32.mrf.mxu0
  %1431 = vmatprep.mubr.bf16.mxu0 0
  %1432 = vmatmul.mubr.bf16.gmra.mxu0 %v1256
  %v1433 = vpop.f32.mrf.mxu0
  %v1434 = vadd.f32 %v1285, %v1433
  %v1435 = vpop.f32.mrf.mxu0
  %v1436 = vpop.f32.mrf.mxu0
  %v1437 = vadd.f32 %v1285, %v1436
  %v1438 = vpop.f32.mrf.mxu0
  %1439 = vmatprep.mubr.bf16.mxu0 0
  %1440 = vmatmul.mubr.bf16.gmra.mxu0 %v1257
  %v1441 = vpop.f32.mrf.mxu0
  %v1442 = vadd.f32 %v1285, %v1441
  %v1443 = vpop.f32.mrf.mxu0
  %v1444 = vpop.f32.mrf.mxu0
  %v1445 = vadd.f32 %v1285, %v1444
  %v1446 = vpop.f32.mrf.mxu0
  %1447 = vmatprep.mubr.bf16.mxu0 0
  %1448 = vmatmul.mubr.bf16.gmra.mxu0 %v1258
  %v1449 = vpop.f32.mrf.mxu0
  %v1450 = vadd.f32 %v1285, %v1449
  %v1451 = vpop.f32.mrf.mxu0
  %v1452 = vpop.f32.mrf.mxu0
  %v1453 = vadd.f32 %v1285, %v1452
  %v1454 = vpop.f32.mrf.mxu0
  %1455 = vmatprep.mubr.bf16.mxu0 0
  %1456 = vmatmul.mubr.bf16.gmra.mxu0 %v1259
  %v1457 = vpop.f32.mrf.mxu0
  %v1458 = vadd.f32 %v1285, %v1457
  %v1459 = vpop.f32.mrf.mxu0
  %v1460 = vpop.f32.mrf.mxu0
  %v1461 = vadd.f32 %v1285, %v1460
  %v1462 = vpop.f32.mrf.mxu0
  %1463 = vmatprep.mubr.bf16.mxu0 0
  %1464 = vmatmul.mubr.bf16.gmra.mxu0 %v1260
  %v1465 = vpop.f32.mrf.mxu0
  %v1466 = vadd.f32 %v1285, %v1465
  %v1467 = vpop.f32.mrf.mxu0
  %v1468 = vpop.f32.mrf.mxu0
  %v1469 = vadd.f32 %v1285, %v1468
  %v1470 = vpop.f32.mrf.mxu0
  %1471 = vmatprep.mubr.bf16.mxu0 0
  %1472 = vmatmul.mubr.bf16.gmra.mxu0 %v1261
  %v1473 = vpop.f32.mrf.mxu0
  %v1474 = vadd.f32 %v1285, %v1473
  %v1475 = vpop.f32.mrf.mxu0
  %v1476 = vpop.f32.mrf.mxu0
  %v1477 = vadd.f32 %v1285, %v1476
  %v1478 = vpop.f32.mrf.mxu0
  %1479 = vmatprep.mubr.bf16.mxu0 0
  %1480 = vmatmul.mubr.bf16.gmra.mxu0 %v1262
  %v1481 = vpop.f32.mrf.mxu0
  %v1482 = vadd.f32 %v1285, %v1481
  %v1483 = vpop.f32.mrf.mxu0
  %v1484 = vpop.f32.mrf.mxu0
  %v1485 = vadd.f32 %v1285, %v1484
  %v1486 = vpop.f32.mrf.mxu0
  %1487 = vmatprep.mubr.bf16.mxu0 0
  %1488 = vmatmul.mubr.bf16.gmra.mxu0 %v1263
  %v1489 = vpop.f32.mrf.mxu0
  %v1490 = vadd.f32 %v1285, %v1489
  %v1491 = vpop.f32.mrf.mxu0
  %v1492 = vpop.f32.mrf.mxu0
  %v1493 = vadd.f32 %v1285, %v1492
  %v1494 = vpop.f32.mrf.mxu0
  %1495 = vdwg.mxu0
  %vm1496 = vcmask 23552
  %1497 = vst.msk [vmem:[%s11] sm:$0xff] %vm1496, %v1370
  %1498 = vst.msk [vmem:[%s11 + $0x8] sm:$0xff] %vm1496, %v1373
  %1499 = vst.msk [vmem:[%s11 + $0x10] sm:$0xff] %vm1496, %v1378
  %1500 = vst.msk [vmem:[%s11 + $0x18] sm:$0xff] %vm1496, %v1381
  %1501 = vst.msk [vmem:[%s11 + $0x20] sm:$0xff] %vm1496, %v1386
  %1502 = vst.msk [vmem:[%s11 + $0x28] sm:$0xff] %vm1496, %v1389
  %1503 = vst.msk [vmem:[%s11 + $0x30] sm:$0xff] %vm1496, %v1394
  %1504 = vst.msk [vmem:[%s11 + $0x38] sm:$0xff] %vm1496, %v1397
  %1505 = vst.msk [vmem:[%s11 + $0x40] sm:$0xff] %vm1496, %v1402
  %1506 = vst.msk [vmem:[%s11 + $0x48] sm:$0xff] %vm1496, %v1405
  %1507 = vst.msk [vmem:[%s11 + $0x50] sm:$0xff] %vm1496, %v1410
  %1508 = vst.msk [vmem:[%s11 + $0x58] sm:$0xff] %vm1496, %v1413
  %1509 = vst.msk [vmem:[%s11 + $0x60] sm:$0xff] %vm1496, %v1418
  %1510 = vst.msk [vmem:[%s11 + $0x68] sm:$0xff] %vm1496, %v1421
  %1511 = vst.msk [vmem:[%s11 + $0x70] sm:$0xff] %vm1496, %v1426
  %1512 = vst.msk [vmem:[%s11 + $0x78] sm:$0xff] %vm1496, %v1429
  %1513 = vst.msk [vmem:[%s11 + $0x80] sm:$0xff] %vm1496, %v1434
  %1514 = vst.msk [vmem:[%s11 + $0x88] sm:$0xff] %vm1496, %v1437
  %1515 = vst.msk [vmem:[%s11 + $0x90] sm:$0xff] %vm1496, %v1442
  %1516 = vst.msk [vmem:[%s11 + $0x98] sm:$0xff] %vm1496, %v1445
  %1517 = vst.msk [vmem:[%s11 + $0xa0] sm:$0xff] %vm1496, %v1450
  %1518 = vst.msk [vmem:[%s11 + $0xa8] sm:$0xff] %vm1496, %v1453
  %1519 = vst.msk [vmem:[%s11 + $0xb0] sm:$0xff] %vm1496, %v1458
  %1520 = vst.msk [vmem:[%s11 + $0xb8] sm:$0xff] %vm1496, %v1461
  %1521 = vst.msk [vmem:[%s11 + $0xc0] sm:$0xff] %vm1496, %v1466
  %1522 = vst.msk [vmem:[%s11 + $0xc8] sm:$0xff] %vm1496, %v1469
  %1523 = vst.msk [vmem:[%s11 + $0xd0] sm:$0xff] %vm1496, %v1474
  %1524 = vst.msk [vmem:[%s11 + $0xd8] sm:$0xff] %vm1496, %v1477
  %1525 = vst.msk [vmem:[%s11 + $0xe0] sm:$0xff] %vm1496, %v1482
  %1526 = vst.msk [vmem:[%s11 + $0xe8] sm:$0xff] %vm1496, %v1485
  %1527 = vst.msk [vmem:[%s11 + $0xf0] sm:$0xff] %vm1496, %v1490
  %1528 = vst.msk [vmem:[%s11 + $0xf8] sm:$0xff] %vm1496, %v1493
  // Predicated region
  $region46: #{tpu_custom_call.1} parent=0 // pred_check
    _
  $region47: #{tpu_custom_call.1} parent=0 // pred_check_branch
    %1530 = sbr.rel (0) target = $region49
  $region48: #{tpu_custom_call.1} parent=0 // pred_region
    _
  $region49: #{tpu_custom_call.1} parent=0 // pred_fallthru
    _
  // Predicated region
  $region50: #{tpu_custom_call.1} parent=0 // pred_check
    _
  $region51: #{tpu_custom_call.1} parent=0 // pred_check_branch
    %1532 = sbr.rel (0) target = $region53
  $region52: #{tpu_custom_call.1} parent=0 // pred_region
    _
  $region53: #{tpu_custom_call.1} parent=0 // pred_fallthru
    _

// kernel: tpu_custom_call.1
$region0: #{tpu_custom_call.1}
  #allocation0 [shape = 'u32[]', space=smem, size = 0x4, offset = 0x4, fixed_abs, tag = 'smem constant byte address 0x4 - core index']
  #allocation1 [shape = 'u32[144,128]{1,0:T(1,128)}', space=vmem, size = 0x12000, scoped, tag = 'internal scratch']
  %s0 = inlined_call_operand.vmem [shape: bf16[256,16], index: 0, kind: input, shape index: {}]
  %s1 = inlined_call_operand.vmem [shape: bf16[16,128], index: 1, kind: input, shape index: {}]
  %s2 = inlined_call_operand.vmem [shape: f32[1,128], index: 2, kind: input, shape index: {}]
  %s3 = inlined_call_operand.vmem [shape: bf16[128,128], index: 3, kind: input, shape index: {}]
  %s4 = inlined_call_operand.vmem [shape: f32[1,128], index: 4, kind: input, shape index: {}]
  %s5 = inlined_call_operand.vmem [shape: bf16[128,128], index: 5, kind: input, shape index: {}]
  %s6 = inlined_call_operand.vmem [shape: f32[1,128], index: 6, kind: input, shape index: {}]
  %s7 = inlined_call_operand.vmem [shape: bf16[128,128], index: 7, kind: input, shape index: {}]
  %s8 = inlined_call_operand.vmem [shape: f32[1,128], index: 8, kind: input, shape index: {}]
  %s9 = inlined_call_operand.vmem [shape: bf16[128,3], index: 9, kind: input, shape index: {}]
  %s10 = inlined_call_operand.vmem [shape: f32[1,3], index: 10, kind: input, shape index: {}]
  %s11 = inlined_call_operand.vmem [shape: f32[256,3], index: 11, kind: output, shape index: {}]
  %s12 = sld [smem:[#allocation0]]
  $region54: #{tpu_custom_call.1} parent=0
    _
  %s14 = ssub.s32 1, %s12
  %s15 = scalar_select 0, %s14, %s12
  // Predicated region
  $region2: #{tpu_custom_call.1} parent=0 // pred_check
    _
  $region3: #{tpu_custom_call.1} parent=0 // pred_check_branch
    %17 = sbr.rel (0) target = $region5
  $region4: #{tpu_custom_call.1} parent=0 // pred_region
    _
  $region5: #{tpu_custom_call.1} parent=0 // pred_fallthru
    _
  // Predicated region
  $region6: #{tpu_custom_call.1} parent=0 // pred_check
    _
  $region7: #{tpu_custom_call.1} parent=0 // pred_check_branch
    %19 = sbr.rel (0) target = $region9
  $region8: #{tpu_custom_call.1} parent=0 // pred_region
    _
  $region9: #{tpu_custom_call.1} parent=0 // pred_fallthru
    _
  // Predicated region
  $region10: #{tpu_custom_call.1} parent=0 // pred_check
    _
  $region11: #{tpu_custom_call.1} parent=0 // pred_check_branch
    %21 = sbr.rel (0) target = $region13
  $region12: #{tpu_custom_call.1} parent=0 // pred_region
    _
  $region13: #{tpu_custom_call.1} parent=0 // pred_fallthru
    _
  // Predicated region
  $region14: #{tpu_custom_call.1} parent=0 // pred_check
    _
  $region15: #{tpu_custom_call.1} parent=0 // pred_check_branch
    %23 = sbr.rel (0) target = $region17
  $region16: #{tpu_custom_call.1} parent=0 // pred_region
    _
  $region17: #{tpu_custom_call.1} parent=0 // pred_fallthru
    _
  // Predicated region
  $region18: #{tpu_custom_call.1} parent=0 // pred_check
    _
  $region19: #{tpu_custom_call.1} parent=0 // pred_check_branch
    %25 = sbr.rel (0) target = $region21
  $region20: #{tpu_custom_call.1} parent=0 // pred_region
    _
  $region21: #{tpu_custom_call.1} parent=0 // pred_fallthru
    _
  // Predicated region
  $region22: #{tpu_custom_call.1} parent=0 // pred_check
    _
  $region23: #{tpu_custom_call.1} parent=0 // pred_check_branch
    %27 = sbr.rel (0) target = $region25
  $region24: #{tpu_custom_call.1} parent=0 // pred_region
    _
  $region25: #{tpu_custom_call.1} parent=0 // pred_fallthru
    _
  // Predicated region
  $region26: #{tpu_custom_call.1} parent=0 // pred_check
    _
  $region27: #{tpu_custom_call.1} parent=0 // pred_check_branch
    %29 = sbr.rel (0) target = $region29
  $region28: #{tpu_custom_call.1} parent=0 // pred_region
    _
  $region29: #{tpu_custom_call.1} parent=0 // pred_fallthru
    _
  // Predicated region
  $region30: #{tpu_custom_call.1} parent=0 // pred_check
    _
  $region31: #{tpu_custom_call.1} parent=0 // pred_check_branch
    %31 = sbr.rel (0) target = $region33
  $region32: #{tpu_custom_call.1} parent=0 // pred_region
    _
  $region33: #{tpu_custom_call.1} parent=0 // pred_fallthru
    _
  // Predicated region
  $region34: #{tpu_custom_call.1} parent=0 // pred_check
    _
  $region35: #{tpu_custom_call.1} parent=0 // pred_check_branch
    %33 = sbr.rel (0) target = $region37
  $region36: #{tpu_custom_call.1} parent=0 // pred_region
    _
  $region37: #{tpu_custom_call.1} parent=0 // pred_fallthru
    _
  // Predicated region
  $region38: #{tpu_custom_call.1} parent=0 // pred_check
    _
  $region39: #{tpu_custom_call.1} parent=0 // pred_check_branch
    %35 = sbr.rel (0) target = $region41
  $region40: #{tpu_custom_call.1} parent=0 // pred_region
    _
  $region41: #{tpu_custom_call.1} parent=0 // pred_fallthru
    _
  // Predicated region
  $region42: #{tpu_custom_call.1} parent=0 // pred_check
    _
  $region43: #{tpu_custom_call.1} parent=0 // pred_check_branch
    %37 = sbr.rel (0) target = $region45
  $region44: #{tpu_custom_call.1} parent=0 // pred_region
    _
  $region45: #{tpu_custom_call.1} parent=0 // pred_fallthru
    _
  %v39 = vld [vmem:[%s0] sm:$0xf]
  %v40 = vld [vmem:[%s0 + $0x4] sm:$0xf]
  %v41 = vld [vmem:[%s0 + $0x8] sm:$0xf]
  %v42 = vld [vmem:[%s0 + $0xc] sm:$0xf]
  %v43 = vld [vmem:[%s0 + $0x10] sm:$0xf]
  %v44 = vld [vmem:[%s0 + $0x14] sm:$0xf]
  %v45 = vld [vmem:[%s0 + $0x18] sm:$0xf]
  %v46 = vld [vmem:[%s0 + $0x1c] sm:$0xf]
  %v47 = vld [vmem:[%s0 + $0x20] sm:$0xf]
  %v48 = vld [vmem:[%s0 + $0x24] sm:$0xf]
  %v49 = vld [vmem:[%s0 + $0x28] sm:$0xf]
  %v50 = vld [vmem:[%s0 + $0x2c] sm:$0xf]
  %v51 = vld [vmem:[%s0 + $0x30] sm:$0xf]
  %v52 = vld [vmem:[%s0 + $0x34] sm:$0xf]
  %v53 = vld [vmem:[%s0 + $0x38] sm:$0xf]
  %v54 = vld [vmem:[%s0 + $0x3c] sm:$0xf]
  %v55 = vld [vmem:[%s0 + $0x40] sm:$0xf]
  %v56 = vld [vmem:[%s0 + $0x44] sm:$0xf]
  %v57 = vld [vmem:[%s0 + $0x48] sm:$0xf]
  %v58 = vld [vmem:[%s0 + $0x4c] sm:$0xf]
  %v59 = vld [vmem:[%s0 + $0x50] sm:$0xf]
  %v60 = vld [vmem:[%s0 + $0x54] sm:$0xf]
  %v61 = vld [vmem:[%s0 + $0x58] sm:$0xf]
  %v62 = vld [vmem:[%s0 + $0x5c] sm:$0xf]
  %v63 = vld [vmem:[%s0 + $0x60] sm:$0xf]
  %v64 = vld [vmem:[%s0 + $0x64] sm:$0xf]
  %v65 = vld [vmem:[%s0 + $0x68] sm:$0xf]
  %v66 = vld [vmem:[%s0 + $0x6c] sm:$0xf]
  %v67 = vld [vmem:[%s0 + $0x70] sm:$0xf]
  %v68 = vld [vmem:[%s0 + $0x74] sm:$0xf]
  %v69 = vld [vmem:[%s0 + $0x78] sm:$0xf]
  %v70 = vld [vmem:[%s0 + $0x7c] sm:$0xf]
  %v71 = vld [vmem:[%s1] sm:$0xf]
  %v72 = vld [vmem:[%s1 + $0x4] sm:$0xf]
  %v73 = vld [vmem:[%s2] sm:$0x1]
  %v75 = vlaneseq
  %v76 = vshrl.u32 %v75, 7
  %v77 = vsub.s32 0, %v76
  %v78 = vrot.slane %v73, %v77
  %v112 = vunpack.c.l.b16 %v39
  %v113 = vunpack.c.l.b16 %v40
  %v114 = vunpack.c.l.b16 %v41
  %v115 = vunpack.c.l.b16 %v42
  %v116 = vunpack.c.l.b16 %v43
  %v117 = vunpack.c.l.b16 %v44
  %v118 = vunpack.c.l.b16 %v45
  %v119 = vunpack.c.l.b16 %v46
  %v120 = vunpack.c.l.b16 %v47
  %v121 = vunpack.c.l.b16 %v48
  %v122 = vunpack.c.l.b16 %v49
  %v123 = vunpack.c.l.b16 %v50
  %v124 = vunpack.c.l.b16 %v51
  %v125 = vunpack.c.l.b16 %v52
  %v126 = vunpack.c.l.b16 %v53
  %v127 = vunpack.c.l.b16 %v54
  %v128 = vunpack.c.l.b16 %v55
  %v129 = vunpack.c.l.b16 %v56
  %v130 = vunpack.c.l.b16 %v57
  %v131 = vunpack.c.l.b16 %v58
  %v132 = vunpack.c.l.b16 %v59
  %v133 = vunpack.c.l.b16 %v60
  %v134 = vunpack.c.l.b16 %v61
  %v135 = vunpack.c.l.b16 %v62
  %v136 = vunpack.c.l.b16 %v63
  %v137 = vunpack.c.l.b16 %v64
  %v138 = vunpack.c.l.b16 %v65
  %v139 = vunpack.c.l.b16 %v66
  %v140 = vunpack.c.l.b16 %v67
  %v141 = vunpack.c.l.b16 %v68
  %v142 = vunpack.c.l.b16 %v69
  %v143 = vunpack.c.l.b16 %v70
  %v144 = vpack.c.b16 %v113, %v112
  %v145 = vpack.c.b16 %v115, %v114
  %v146 = vpack.c.b16 %v117, %v116
  %v147 = vpack.c.b16 %v119, %v118
  %v148 = vpack.c.b16 %v121, %v120
  %v149 = vpack.c.b16 %v123, %v122
  %v150 = vpack.c.b16 %v125, %v124
  %v151 = vpack.c.b16 %v127, %v126
  %v152 = vpack.c.b16 %v129, %v128
  %v153 = vpack.c.b16 %v131, %v130
  %v154 = vpack.c.b16 %v133, %v132
  %v155 = vpack.c.b16 %v135, %v134
  %v156 = vpack.c.b16 %v137, %v136
  %v157 = vpack.c.b16 %v139, %v138
  %v158 = vpack.c.b16 %v141, %v140
  %v159 = vpack.c.b16 %v143, %v142
  %v162 = vunpack.c.l.b16 %v71
  %v163 = vunpack.c.l.b16 %v72
  %v164 = vpack.c.b16 %v163, %v162
  %vm166 = vcmask 130048
  %v168 = vsel %vm166, %v144, 0
  %v171 = vsel %vm166, %v145, 0
  %v174 = vsel %vm166, %v146, 0
  %v177 = vsel %vm166, %v147, 0
  %v180 = vsel %vm166, %v148, 0
  %v183 = vsel %vm166, %v149, 0
  %v186 = vsel %vm166, %v150, 0
  %v189 = vsel %vm166, %v151, 0
  %v192 = vsel %vm166, %v152, 0
  %v195 = vsel %vm166, %v153, 0
  %v198 = vsel %vm166, %v154, 0
  %v201 = vsel %vm166, %v155, 0
  %v204 = vsel %vm166, %v156, 0
  %v207 = vsel %vm166, %v157, 0
  %v210 = vsel %vm166, %v158, 0
  %v213 = vsel %vm166, %v159, 0
  %215 = vmatprep.subr.bf16.mxu0 0
  %216 = vmatpush1.bf16.msra.mxu0 0
  %217 = vmatprep.subr.bf16.mxu0 0
  %218 = vmatpush1.bf16.msra.mxu0 0
  %219 = vmatprep.subr.bf16.mxu0 0
  %220 = vmatpush1.bf16.msra.mxu0 0
  %221 = vmatprep.subr.bf16.mxu0 0
  %222 = vmatpush1.bf16.msra.mxu0 0
  %223 = vmatprep.subr.bf16.mxu0 0
  %224 = vmatpush1.bf16.msra.mxu0 0
  %225 = vmatprep.subr.bf16.mxu0 0
  %226 = vmatpush1.bf16.msra.mxu0 0
  %227 = vmatprep.subr.bf16.mxu0 0
  %228 = vmatpush1.bf16.msra.mxu0 0
  %229 = vmatprep.subr.bf16.mxu0 0
  %230 = vmatpush1.bf16.msra.mxu0 %v164
  %231 = vmatprep.subr.bf16.mxu0 0
  %232 = vmatpush2.bf16.msra.mxu0 0
  %233 = vmatprep.subr.bf16.mxu0 0
  %234 = vmatpush2.bf16.msra.mxu0 0
  %235 = vmatprep.subr.bf16.mxu0 0
  %236 = vmatpush2.bf16.msra.mxu0 0
  %237 = vmatprep.subr.bf16.mxu0 0
  %238 = vmatpush2.bf16.msra.mxu0 0
  %239 = vmatprep.subr.bf16.mxu0 0
  %240 = vmatpush2.bf16.msra.mxu0 0
  %241 = vmatprep.subr.bf16.mxu0 0
  %242 = vmatpush2.bf16.msra.mxu0 0
  %243 = vmatprep.subr.bf16.mxu0 0
  %244 = vmatpush2.bf16.msra.mxu0 0
  %245 = vmatprep.subr.bf16.mxu0 0
  %246 = vmatpush2.bf16.msra.mxu0 0
  %247 = vmatprep.mubr.bf16.mxu0 0
  %248 = vmatmul.mubr.bf16.gmra.mxu0 %v168
  %v249 = vpop.f32.mrf.mxu0
  %v250 = vadd.f32 %v78, %v249
  %v251 = vpop.f32.mrf.mxu0
  %v252 = vpop.f32.mrf.mxu0
  %v253 = vadd.f32 %v78, %v252
  %v254 = vpop.f32.mrf.mxu0
  %255 = vmatprep.mubr.bf16.mxu0 0
  %256 = vmatmul.mubr.bf16.gmra.mxu0 %v171
  %v257 = vpop.f32.mrf.mxu0
  %v258 = vadd.f32 %v78, %v257
  %v259 = vpop.f32.mrf.mxu0
  %v260 = vpop.f32.mrf.mxu0
  %v261 = vadd.f32 %v78, %v260
  %v262 = vpop.f32.mrf.mxu0
  %263 = vmatprep.mubr.bf16.mxu0 0
  %264 = vmatmul.mubr.bf16.gmra.mxu0 %v174
  %v265 = vpop.f32.mrf.mxu0
  %v266 = vadd.f32 %v78, %v265
  %v267 = vpop.f32.mrf.mxu0
  %v268 = vpop.f32.mrf.mxu0
  %v269 = vadd.f32 %v78, %v268
  %v270 = vpop.f32.mrf.mxu0
  %271 = vmatprep.mubr.bf16.mxu0 0
  %272 = vmatmul.mubr.bf16.gmra.mxu0 %v177
  %v273 = vpop.f32.mrf.mxu0
  %v274 = vadd.f32 %v78, %v273
  %v275 = vpop.f32.mrf.mxu0
  %v276 = vpop.f32.mrf.mxu0
  %v277 = vadd.f32 %v78, %v276
  %v278 = vpop.f32.mrf.mxu0
  %279 = vmatprep.mubr.bf16.mxu0 0
  %280 = vmatmul.mubr.bf16.gmra.mxu0 %v180
  %v281 = vpop.f32.mrf.mxu0
  %v282 = vadd.f32 %v78, %v281
  %v283 = vpop.f32.mrf.mxu0
  %v284 = vpop.f32.mrf.mxu0
  %v285 = vadd.f32 %v78, %v284
  %v286 = vpop.f32.mrf.mxu0
  %287 = vmatprep.mubr.bf16.mxu0 0
  %288 = vmatmul.mubr.bf16.gmra.mxu0 %v183
  %v289 = vpop.f32.mrf.mxu0
  %v290 = vadd.f32 %v78, %v289
  %v291 = vpop.f32.mrf.mxu0
  %v292 = vpop.f32.mrf.mxu0
  %v293 = vadd.f32 %v78, %v292
  %v294 = vpop.f32.mrf.mxu0
  %295 = vmatprep.mubr.bf16.mxu0 0
  %296 = vmatmul.mubr.bf16.gmra.mxu0 %v186
  %v297 = vpop.f32.mrf.mxu0
  %v298 = vadd.f32 %v78, %v297
  %v299 = vpop.f32.mrf.mxu0
  %v300 = vpop.f32.mrf.mxu0
  %v301 = vadd.f32 %v78, %v300
  %v302 = vpop.f32.mrf.mxu0
  %303 = vmatprep.mubr.bf16.mxu0 0
  %304 = vmatmul.mubr.bf16.gmra.mxu0 %v189
  %v305 = vpop.f32.mrf.mxu0
  %v306 = vadd.f32 %v78, %v305
  %v307 = vpop.f32.mrf.mxu0
  %v308 = vpop.f32.mrf.mxu0
  %v309 = vadd.f32 %v78, %v308
  %v310 = vpop.f32.mrf.mxu0
  %311 = vmatprep.mubr.bf16.mxu0 0
  %312 = vmatmul.mubr.bf16.gmra.mxu0 %v192
  %v313 = vpop.f32.mrf.mxu0
  %v314 = vadd.f32 %v78, %v313
  %v315 = vpop.f32.mrf.mxu0
  %v316 = vpop.f32.mrf.mxu0
  %v317 = vadd.f32 %v78, %v316
  %v318 = vpop.f32.mrf.mxu0
  %319 = vmatprep.mubr.bf16.mxu0 0
  %320 = vmatmul.mubr.bf16.gmra.mxu0 %v195
  %v321 = vpop.f32.mrf.mxu0
  %v322 = vadd.f32 %v78, %v321
  %v323 = vpop.f32.mrf.mxu0
  %v324 = vpop.f32.mrf.mxu0
  %v325 = vadd.f32 %v78, %v324
  %v326 = vpop.f32.mrf.mxu0
  %327 = vmatprep.mubr.bf16.mxu0 0
  %328 = vmatmul.mubr.bf16.gmra.mxu0 %v198
  %v329 = vpop.f32.mrf.mxu0
  %v330 = vadd.f32 %v78, %v329
  %v331 = vpop.f32.mrf.mxu0
  %v332 = vpop.f32.mrf.mxu0
  %v333 = vadd.f32 %v78, %v332
  %v334 = vpop.f32.mrf.mxu0
  %335 = vmatprep.mubr.bf16.mxu0 0
  %336 = vmatmul.mubr.bf16.gmra.mxu0 %v201
  %v337 = vpop.f32.mrf.mxu0
  %v338 = vadd.f32 %v78, %v337
  %v339 = vpop.f32.mrf.mxu0
  %v340 = vpop.f32.mrf.mxu0
  %v341 = vadd.f32 %v78, %v340
  %v342 = vpop.f32.mrf.mxu0
  %343 = vmatprep.mubr.bf16.mxu0 0
  %344 = vmatmul.mubr.bf16.gmra.mxu0 %v204
  %v345 = vpop.f32.mrf.mxu0
  %v346 = vadd.f32 %v78, %v345
  %v347 = vpop.f32.mrf.mxu0
  %v348 = vpop.f32.mrf.mxu0
  %v349 = vadd.f32 %v78, %v348
  %v350 = vpop.f32.mrf.mxu0
  %351 = vmatprep.mubr.bf16.mxu0 0
  %352 = vmatmul.mubr.bf16.gmra.mxu0 %v207
  %v353 = vpop.f32.mrf.mxu0
  %v354 = vadd.f32 %v78, %v353
  %v355 = vpop.f32.mrf.mxu0
  %v356 = vpop.f32.mrf.mxu0
  %v357 = vadd.f32 %v78, %v356
  %v358 = vpop.f32.mrf.mxu0
  %359 = vmatprep.mubr.bf16.mxu0 0
  %360 = vmatmul.mubr.bf16.gmra.mxu0 %v210
  %v361 = vpop.f32.mrf.mxu0
  %v362 = vadd.f32 %v78, %v361
  %v363 = vpop.f32.mrf.mxu0
  %v364 = vpop.f32.mrf.mxu0
  %v365 = vadd.f32 %v78, %v364
  %v366 = vpop.f32.mrf.mxu0
  %367 = vmatprep.mubr.bf16.mxu0 0
  %368 = vmatmul.mubr.bf16.gmra.mxu0 %v213
  %v369 = vpop.f32.mrf.mxu0
  %v370 = vadd.f32 %v78, %v369
  %v371 = vpop.f32.mrf.mxu0
  %v372 = vpop.f32.mrf.mxu0
  %v373 = vadd.f32 %v78, %v372
  %v374 = vpop.f32.mrf.mxu0
  %375 = vdwg.mxu0
  %v376 = vmax.f32 %v250, 0.0
  %v377 = vmax.f32 %v253, 0.0
  %v378 = vmax.f32 %v258, 0.0
  %v379 = vmax.f32 %v261, 0.0
  %v380 = vmax.f32 %v266, 0.0
  %v381 = vmax.f32 %v269, 0.0
  %v382 = vmax.f32 %v274, 0.0
  %v383 = vmax.f32 %v277, 0.0
  %v384 = vmax.f32 %v282, 0.0
  %v385 = vmax.f32 %v285, 0.0
  %v386 = vmax.f32 %v290, 0.0
  %v387 = vmax.f32 %v293, 0.0
  %v388 = vmax.f32 %v298, 0.0
  %v389 = vmax.f32 %v301, 0.0
  %v390 = vmax.f32 %v306, 0.0
  %v391 = vmax.f32 %v309, 0.0
  %v392 = vmax.f32 %v314, 0.0
  %v393 = vmax.f32 %v317, 0.0
  %v394 = vmax.f32 %v322, 0.0
  %v395 = vmax.f32 %v325, 0.0
  %v396 = vmax.f32 %v330, 0.0
  %v397 = vmax.f32 %v333, 0.0
  %v398 = vmax.f32 %v338, 0.0
  %v399 = vmax.f32 %v341, 0.0
  %v400 = vmax.f32 %v346, 0.0
  %v401 = vmax.f32 %v349, 0.0
  %v402 = vmax.f32 %v354, 0.0
  %v403 = vmax.f32 %v357, 0.0
  %v404 = vmax.f32 %v362, 0.0
  %v405 = vmax.f32 %v365, 0.0
  %v406 = vmax.f32 %v370, 0.0
  %v407 = vmax.f32 %v373, 0.0
  %v408 = vpack.c.bf16 %v377, %v376
  %v409 = vpack.c.bf16 %v379, %v378
  %v410 = vpack.c.bf16 %v381, %v380
  %v411 = vpack.c.bf16 %v383, %v382
  %v412 = vpack.c.bf16 %v385, %v384
  %v413 = vpack.c.bf16 %v387, %v386
  %v414 = vpack.c.bf16 %v389, %v388
  %v415 = vpack.c.bf16 %v391, %v390
  %v416 = vpack.c.bf16 %v393, %v392
  %v417 = vpack.c.bf16 %v395, %v394
  %v418 = vpack.c.bf16 %v397, %v396
  %v419 = vpack.c.bf16 %v399, %v398
  %v420 = vpack.c.bf16 %v401, %v400
  %v421 = vpack.c.bf16 %v403, %v402
  %v422 = vpack.c.bf16 %v405, %v404
  %v423 = vpack.c.bf16 %v407, %v406
  %v424 = vld [vmem:[%s3] sm:$0xf]
  %v425 = vld [vmem:[%s3 + $0x4] sm:$0xf]
  %v426 = vld [vmem:[%s3 + $0x8] sm:$0xf]
  %v427 = vld [vmem:[%s3 + $0xc] sm:$0xf]
  %v428 = vld [vmem:[%s3 + $0x10] sm:$0xf]
  %v429 = vld [vmem:[%s3 + $0x14] sm:$0xf]
  %v430 = vld [vmem:[%s3 + $0x18] sm:$0xf]
  %v431 = vld [vmem:[%s3 + $0x1c] sm:$0xf]
  %v432 = vld [vmem:[%s3 + $0x20] sm:$0xf]
  %v433 = vld [vmem:[%s3 + $0x24] sm:$0xf]
  %v434 = vld [vmem:[%s3 + $0x28] sm:$0xf]
  %v435 = vld [vmem:[%s3 + $0x2c] sm:$0xf]
  %v436 = vld [vmem:[%s3 + $0x30] sm:$0xf]
  %v437 = vld [vmem:[%s3 + $0x34] sm:$0xf]
  %v438 = vld [vmem:[%s3 + $0x38] sm:$0xf]
  %v439 = vld [vmem:[%s3 + $0x3c] sm:$0xf]
  %v440 = vld [vmem:[%s4] sm:$0x1]
  %v442 = vlaneseq
  %v443 = vshrl.u32 %v442, 7
  %v444 = vsub.s32 0, %v443
  %v445 = vrot.slane %v440, %v444
  %v463 = vunpack.c.l.b16 %v424
  %v464 = vunpack.c.l.b16 %v425
  %v465 = vunpack.c.l.b16 %v426
  %v466 = vunpack.c.l.b16 %v427
  %v467 = vunpack.c.l.b16 %v428
  %v468 = vunpack.c.l.b16 %v429
  %v469 = vunpack.c.l.b16 %v430
  %v470 = vunpack.c.l.b16 %v431
  %v471 = vunpack.c.l.b16 %v432
  %v472 = vunpack.c.l.b16 %v433
  %v473 = vunpack.c.l.b16 %v434
  %v474 = vunpack.c.l.b16 %v435
  %v475 = vunpack.c.l.b16 %v436
  %v476 = vunpack.c.l.b16 %v437
  %v477 = vunpack.c.l.b16 %v438
  %v478 = vunpack.c.l.b16 %v439
  %v479 = vpack.c.b16 %v464, %v463
  %v480 = vpack.c.b16 %v466, %v465
  %v481 = vpack.c.b16 %v468, %v467
  %v482 = vpack.c.b16 %v470, %v469
  %v483 = vpack.c.b16 %v472, %v471
  %v484 = vpack.c.b16 %v474, %v473
  %v485 = vpack.c.b16 %v476, %v475
  %v486 = vpack.c.b16 %v478, %v477
  %495 = vmatprep.subr.bf16.mxu0 0
  %496 = vmatpush1.bf16.msra.mxu0 %v486
  %497 = vmatprep.subr.bf16.mxu0 0
  %498 = vmatpush1.bf16.msra.mxu0 %v485
  %499 = vmatprep.subr.bf16.mxu0 0
  %500 = vmatpush1.bf16.msra.mxu0 %v484
  %501 = vmatprep.subr.bf16.mxu0 0
  %502 = vmatpush1.bf16.msra.mxu0 %v483
  %503 = vmatprep.subr.bf16.mxu0 0
  %504 = vmatpush1.bf16.msra.mxu0 %v482
  %505 = vmatprep.subr.bf16.mxu0 0
  %506 = vmatpush1.bf16.msra.mxu0 %v481
  %507 = vmatprep.subr.bf16.mxu0 0
  %508 = vmatpush1.bf16.msra.mxu0 %v480
  %509 = vmatprep.subr.bf16.mxu0 0
  %510 = vmatpush1.bf16.msra.mxu0 %v479
  %511 = vmatprep.subr.bf16.mxu0 0
  %512 = vmatpush2.bf16.msra.mxu0 0
  %513 = vmatprep.subr.bf16.mxu0 0
  %514 = vmatpush2.bf16.msra.mxu0 0
  %515 = vmatprep.subr.bf16.mxu0 0
  %516 = vmatpush2.bf16.msra.mxu0 0
  %517 = vmatprep.subr.bf16.mxu0 0
  %518 = vmatpush2.bf16.msra.mxu0 0
  %519 = vmatprep.subr.bf16.mxu0 0
  %520 = vmatpush2.bf16.msra.mxu0 0
  %521 = vmatprep.subr.bf16.mxu0 0
  %522 = vmatpush2.bf16.msra.mxu0 0
  %523 = vmatprep.subr.bf16.mxu0 0
  %524 = vmatpush2.bf16.msra.mxu0 0
  %525 = vmatprep.subr.bf16.mxu0 0
  %526 = vmatpush2.bf16.msra.mxu0 0
  %527 = vmatprep.mubr.bf16.mxu0 0
  %528 = vmatmul.mubr.bf16.gmra.mxu0 %v408
  %v529 = vpop.f32.mrf.mxu0
  %v530 = vadd.f32 %v445, %v529
  %v531 = vpop.f32.mrf.mxu0
  %v532 = vpop.f32.mrf.mxu0
  %v533 = vadd.f32 %v445, %v532
  %v534 = vpop.f32.mrf.mxu0
  %535 = vmatprep.mubr.bf16.mxu0 0
  %536 = vmatmul.mubr.bf16.gmra.mxu0 %v409
  %v537 = vpop.f32.mrf.mxu0
  %v538 = vadd.f32 %v445, %v537
  %v539 = vpop.f32.mrf.mxu0
  %v540 = vpop.f32.mrf.mxu0
  %v541 = vadd.f32 %v445, %v540
  %v542 = vpop.f32.mrf.mxu0
  %543 = vmatprep.mubr.bf16.mxu0 0
  %544 = vmatmul.mubr.bf16.gmra.mxu0 %v410
  %v545 = vpop.f32.mrf.mxu0
  %v546 = vadd.f32 %v445, %v545
  %v547 = vpop.f32.mrf.mxu0
  %v548 = vpop.f32.mrf.mxu0
  %v549 = vadd.f32 %v445, %v548
  %v550 = vpop.f32.mrf.mxu0
  %551 = vmatprep.mubr.bf16.mxu0 0
  %552 = vmatmul.mubr.bf16.gmra.mxu0 %v411
  %v553 = vpop.f32.mrf.mxu0
  %v554 = vadd.f32 %v445, %v553
  %v555 = vpop.f32.mrf.mxu0
  %v556 = vpop.f32.mrf.mxu0
  %v557 = vadd.f32 %v445, %v556
  %v558 = vpop.f32.mrf.mxu0
  %559 = vmatprep.mubr.bf16.mxu0 0
  %560 = vmatmul.mubr.bf16.gmra.mxu0 %v412
  %v561 = vpop.f32.mrf.mxu0
  %v562 = vadd.f32 %v445, %v561
  %v563 = vpop.f32.mrf.mxu0
  %v564 = vpop.f32.mrf.mxu0
  %v565 = vadd.f32 %v445, %v564
  %v566 = vpop.f32.mrf.mxu0
  %567 = vmatprep.mubr.bf16.mxu0 0
  %568 = vmatmul.mubr.bf16.gmra.mxu0 %v413
  %v569 = vpop.f32.mrf.mxu0
  %v570 = vadd.f32 %v445, %v569
  %v571 = vpop.f32.mrf.mxu0
  %v572 = vpop.f32.mrf.mxu0
  %v573 = vadd.f32 %v445, %v572
  %v574 = vpop.f32.mrf.mxu0
  %575 = vmatprep.mubr.bf16.mxu0 0
  %576 = vmatmul.mubr.bf16.gmra.mxu0 %v414
  %v577 = vpop.f32.mrf.mxu0
  %v578 = vadd.f32 %v445, %v577
  %v579 = vpop.f32.mrf.mxu0
  %v580 = vpop.f32.mrf.mxu0
  %v581 = vadd.f32 %v445, %v580
  %v582 = vpop.f32.mrf.mxu0
  %583 = vmatprep.mubr.bf16.mxu0 0
  %584 = vmatmul.mubr.bf16.gmra.mxu0 %v415
  %v585 = vpop.f32.mrf.mxu0
  %v586 = vadd.f32 %v445, %v585
  %v587 = vpop.f32.mrf.mxu0
  %v588 = vpop.f32.mrf.mxu0
  %v589 = vadd.f32 %v445, %v588
  %v590 = vpop.f32.mrf.mxu0
  %591 = vmatprep.mubr.bf16.mxu0 0
  %592 = vmatmul.mubr.bf16.gmra.mxu0 %v416
  %v593 = vpop.f32.mrf.mxu0
  %v594 = vadd.f32 %v445, %v593
  %v595 = vpop.f32.mrf.mxu0
  %v596 = vpop.f32.mrf.mxu0
  %v597 = vadd.f32 %v445, %v596
  %v598 = vpop.f32.mrf.mxu0
  %599 = vmatprep.mubr.bf16.mxu0 0
  %600 = vmatmul.mubr.bf16.gmra.mxu0 %v417
  %v601 = vpop.f32.mrf.mxu0
  %v602 = vadd.f32 %v445, %v601
  %v603 = vpop.f32.mrf.mxu0
  %v604 = vpop.f32.mrf.mxu0
  %v605 = vadd.f32 %v445, %v604
  %v606 = vpop.f32.mrf.mxu0
  %607 = vmatprep.mubr.bf16.mxu0 0
  %608 = vmatmul.mubr.bf16.gmra.mxu0 %v418
  %v609 = vpop.f32.mrf.mxu0
  %v610 = vadd.f32 %v445, %v609
  %v611 = vpop.f32.mrf.mxu0
  %v612 = vpop.f32.mrf.mxu0
  %v613 = vadd.f32 %v445, %v612
  %v614 = vpop.f32.mrf.mxu0
  %615 = vmatprep.mubr.bf16.mxu0 0
  %616 = vmatmul.mubr.bf16.gmra.mxu0 %v419
  %v617 = vpop.f32.mrf.mxu0
  %v618 = vadd.f32 %v445, %v617
  %v619 = vpop.f32.mrf.mxu0
  %v620 = vpop.f32.mrf.mxu0
  %v621 = vadd.f32 %v445, %v620
  %v622 = vpop.f32.mrf.mxu0
  %623 = vmatprep.mubr.bf16.mxu0 0
  %624 = vmatmul.mubr.bf16.gmra.mxu0 %v420
  %v625 = vpop.f32.mrf.mxu0
  %v626 = vadd.f32 %v445, %v625
  %v627 = vpop.f32.mrf.mxu0
  %v628 = vpop.f32.mrf.mxu0
  %v629 = vadd.f32 %v445, %v628
  %v630 = vpop.f32.mrf.mxu0
  %631 = vmatprep.mubr.bf16.mxu0 0
  %632 = vmatmul.mubr.bf16.gmra.mxu0 %v421
  %v633 = vpop.f32.mrf.mxu0
  %v634 = vadd.f32 %v445, %v633
  %v635 = vpop.f32.mrf.mxu0
  %v636 = vpop.f32.mrf.mxu0
  %v637 = vadd.f32 %v445, %v636
  %v638 = vpop.f32.mrf.mxu0
  %639 = vmatprep.mubr.bf16.mxu0 0
  %640 = vmatmul.mubr.bf16.gmra.mxu0 %v422
  %v641 = vpop.f32.mrf.mxu0
  %v642 = vadd.f32 %v445, %v641
  %v643 = vpop.f32.mrf.mxu0
  %v644 = vpop.f32.mrf.mxu0
  %v645 = vadd.f32 %v445, %v644
  %v646 = vpop.f32.mrf.mxu0
  %647 = vmatprep.mubr.bf16.mxu0 0
  %648 = vmatmul.mubr.bf16.gmra.mxu0 %v423
  %v649 = vpop.f32.mrf.mxu0
  %v650 = vadd.f32 %v445, %v649
  %v651 = vpop.f32.mrf.mxu0
  %v652 = vpop.f32.mrf.mxu0
  %v653 = vadd.f32 %v445, %v652
  %v654 = vpop.f32.mrf.mxu0
  %655 = vdwg.mxu0
  %v656 = vmax.f32 %v530, 0.0
  %v657 = vmax.f32 %v533, 0.0
  %v658 = vmax.f32 %v538, 0.0
  %v659 = vmax.f32 %v541, 0.0
  %v660 = vmax.f32 %v546, 0.0
  %v661 = vmax.f32 %v549, 0.0
  %v662 = vmax.f32 %v554, 0.0
  %v663 = vmax.f32 %v557, 0.0
  %v664 = vmax.f32 %v562, 0.0
  %v665 = vmax.f32 %v565, 0.0
  %v666 = vmax.f32 %v570, 0.0
  %v667 = vmax.f32 %v573, 0.0
  %v668 = vmax.f32 %v578, 0.0
  %v669 = vmax.f32 %v581, 0.0
  %v670 = vmax.f32 %v586, 0.0
  %v671 = vmax.f32 %v589, 0.0
  %v672 = vmax.f32 %v594, 0.0
  %v673 = vmax.f32 %v597, 0.0
  %v674 = vmax.f32 %v602, 0.0
  %v675 = vmax.f32 %v605, 0.0
  %v676 = vmax.f32 %v610, 0.0
  %v677 = vmax.f32 %v613, 0.0
  %v678 = vmax.f32 %v618, 0.0
  %v679 = vmax.f32 %v621, 0.0
  %v680 = vmax.f32 %v626, 0.0
  %v681 = vmax.f32 %v629, 0.0
  %v682 = vmax.f32 %v634, 0.0
  %v683 = vmax.f32 %v637, 0.0
  %v684 = vmax.f32 %v642, 0.0
  %v685 = vmax.f32 %v645, 0.0
  %v686 = vmax.f32 %v650, 0.0
  %v687 = vmax.f32 %v653, 0.0
  %v688 = vpack.c.bf16 %v657, %v656
  %v689 = vpack.c.bf16 %v659, %v658
  %v690 = vpack.c.bf16 %v661, %v660
  %v691 = vpack.c.bf16 %v663, %v662
  %v692 = vpack.c.bf16 %v665, %v664
  %v693 = vpack.c.bf16 %v667, %v666
  %v694 = vpack.c.bf16 %v669, %v668
  %v695 = vpack.c.bf16 %v671, %v670
  %v696 = vpack.c.bf16 %v673, %v672
  %v697 = vpack.c.bf16 %v675, %v674
  %v698 = vpack.c.bf16 %v677, %v676
  %v699 = vpack.c.bf16 %v679, %v678
  %v700 = vpack.c.bf16 %v681, %v680
  %v701 = vpack.c.bf16 %v683, %v682
  %v702 = vpack.c.bf16 %v685, %v684
  %v703 = vpack.c.bf16 %v687, %v686
  %v704 = vld [vmem:[%s5] sm:$0xf]
  %v705 = vld [vmem:[%s5 + $0x4] sm:$0xf]
  %v706 = vld [vmem:[%s5 + $0x8] sm:$0xf]
  %v707 = vld [vmem:[%s5 + $0xc] sm:$0xf]
  %v708 = vld [vmem:[%s5 + $0x10] sm:$0xf]
  %v709 = vld [vmem:[%s5 + $0x14] sm:$0xf]
  %v710 = vld [vmem:[%s5 + $0x18] sm:$0xf]
  %v711 = vld [vmem:[%s5 + $0x1c] sm:$0xf]
  %v712 = vld [vmem:[%s5 + $0x20] sm:$0xf]
  %v713 = vld [vmem:[%s5 + $0x24] sm:$0xf]
  %v714 = vld [vmem:[%s5 + $0x28] sm:$0xf]
  %v715 = vld [vmem:[%s5 + $0x2c] sm:$0xf]
  %v716 = vld [vmem:[%s5 + $0x30] sm:$0xf]
  %v717 = vld [vmem:[%s5 + $0x34] sm:$0xf]
  %v718 = vld [vmem:[%s5 + $0x38] sm:$0xf]
  %v719 = vld [vmem:[%s5 + $0x3c] sm:$0xf]
  %v720 = vld [vmem:[%s6] sm:$0x1]
  %v722 = vlaneseq
  %v723 = vshrl.u32 %v722, 7
  %v724 = vsub.s32 0, %v723
  %v725 = vrot.slane %v720, %v724
  %v743 = vunpack.c.l.b16 %v704
  %v744 = vunpack.c.l.b16 %v705
  %v745 = vunpack.c.l.b16 %v706
  %v746 = vunpack.c.l.b16 %v707
  %v747 = vunpack.c.l.b16 %v708
  %v748 = vunpack.c.l.b16 %v709
  %v749 = vunpack.c.l.b16 %v710
  %v750 = vunpack.c.l.b16 %v711
  %v751 = vunpack.c.l.b16 %v712
  %v752 = vunpack.c.l.b16 %v713
  %v753 = vunpack.c.l.b16 %v714
  %v754 = vunpack.c.l.b16 %v715
  %v755 = vunpack.c.l.b16 %v716
  %v756 = vunpack.c.l.b16 %v717
  %v757 = vunpack.c.l.b16 %v718
  %v758 = vunpack.c.l.b16 %v719
  %v759 = vpack.c.b16 %v744, %v743
  %v760 = vpack.c.b16 %v746, %v745
  %v761 = vpack.c.b16 %v748, %v747
  %v762 = vpack.c.b16 %v750, %v749
  %v763 = vpack.c.b16 %v752, %v751
  %v764 = vpack.c.b16 %v754, %v753
  %v765 = vpack.c.b16 %v756, %v755
  %v766 = vpack.c.b16 %v758, %v757
  %775 = vmatprep.subr.bf16.mxu0 0
  %776 = vmatpush1.bf16.msra.mxu0 %v766
  %777 = vmatprep.subr.bf16.mxu0 0
  %778 = vmatpush1.bf16.msra.mxu0 %v765
  %779 = vmatprep.subr.bf16.mxu0 0
  %780 = vmatpush1.bf16.msra.mxu0 %v764
  %781 = vmatprep.subr.bf16.mxu0 0
  %782 = vmatpush1.bf16.msra.mxu0 %v763
  %783 = vmatprep.subr.bf16.mxu0 0
  %784 = vmatpush1.bf16.msra.mxu0 %v762
  %785 = vmatprep.subr.bf16.mxu0 0
  %786 = vmatpush1.bf16.msra.mxu0 %v761
  %787 = vmatprep.subr.bf16.mxu0 0
  %788 = vmatpush1.bf16.msra.mxu0 %v760
  %789 = vmatprep.subr.bf16.mxu0 0
  %790 = vmatpush1.bf16.msra.mxu0 %v759
  %791 = vmatprep.subr.bf16.mxu0 0
  %792 = vmatpush2.bf16.msra.mxu0 0
  %793 = vmatprep.subr.bf16.mxu0 0
  %794 = vmatpush2.bf16.msra.mxu0 0
  %795 = vmatprep.subr.bf16.mxu0 0
  %796 = vmatpush2.bf16.msra.mxu0 0
  %797 = vmatprep.subr.bf16.mxu0 0
  %798 = vmatpush2.bf16.msra.mxu0 0
  %799 = vmatprep.subr.bf16.mxu0 0
  %800 = vmatpush2.bf16.msra.mxu0 0
  %801 = vmatprep.subr.bf16.mxu0 0
  %802 = vmatpush2.bf16.msra.mxu0 0
  %803 = vmatprep.subr.bf16.mxu0 0
  %804 = vmatpush2.bf16.msra.mxu0 0
  %805 = vmatprep.subr.bf16.mxu0 0
  %806 = vmatpush2.bf16.msra.mxu0 0
  %807 = vmatprep.mubr.bf16.mxu0 0
  %808 = vmatmul.mubr.bf16.gmra.mxu0 %v688
  %v809 = vpop.f32.mrf.mxu0
  %v810 = vadd.f32 %v725, %v809
  %v811 = vpop.f32.mrf.mxu0
  %v812 = vpop.f32.mrf.mxu0
  %v813 = vadd.f32 %v725, %v812
  %v814 = vpop.f32.mrf.mxu0
  %815 = vmatprep.mubr.bf16.mxu0 0
  %816 = vmatmul.mubr.bf16.gmra.mxu0 %v689
  %v817 = vpop.f32.mrf.mxu0
  %v818 = vadd.f32 %v725, %v817
  %v819 = vpop.f32.mrf.mxu0
  %v820 = vpop.f32.mrf.mxu0
  %v821 = vadd.f32 %v725, %v820
  %v822 = vpop.f32.mrf.mxu0
  %823 = vmatprep.mubr.bf16.mxu0 0
  %824 = vmatmul.mubr.bf16.gmra.mxu0 %v690
  %v825 = vpop.f32.mrf.mxu0
  %v826 = vadd.f32 %v725, %v825
  %v827 = vpop.f32.mrf.mxu0
  %v828 = vpop.f32.mrf.mxu0
  %v829 = vadd.f32 %v725, %v828
  %v830 = vpop.f32.mrf.mxu0
  %831 = vmatprep.mubr.bf16.mxu0 0
  %832 = vmatmul.mubr.bf16.gmra.mxu0 %v691
  %v833 = vpop.f32.mrf.mxu0
  %v834 = vadd.f32 %v725, %v833
  %v835 = vpop.f32.mrf.mxu0
  %v836 = vpop.f32.mrf.mxu0
  %v837 = vadd.f32 %v725, %v836
  %v838 = vpop.f32.mrf.mxu0
  %839 = vmatprep.mubr.bf16.mxu0 0
  %840 = vmatmul.mubr.bf16.gmra.mxu0 %v692
  %v841 = vpop.f32.mrf.mxu0
  %v842 = vadd.f32 %v725, %v841
  %v843 = vpop.f32.mrf.mxu0
  %v844 = vpop.f32.mrf.mxu0
  %v845 = vadd.f32 %v725, %v844
  %v846 = vpop.f32.mrf.mxu0
  %847 = vmatprep.mubr.bf16.mxu0 0
  %848 = vmatmul.mubr.bf16.gmra.mxu0 %v693
  %v849 = vpop.f32.mrf.mxu0
  %v850 = vadd.f32 %v725, %v849
  %v851 = vpop.f32.mrf.mxu0
  %v852 = vpop.f32.mrf.mxu0
  %v853 = vadd.f32 %v725, %v852
  %v854 = vpop.f32.mrf.mxu0
  %855 = vmatprep.mubr.bf16.mxu0 0
  %856 = vmatmul.mubr.bf16.gmra.mxu0 %v694
  %v857 = vpop.f32.mrf.mxu0
  %v858 = vadd.f32 %v725, %v857
  %v859 = vpop.f32.mrf.mxu0
  %v860 = vpop.f32.mrf.mxu0
  %v861 = vadd.f32 %v725, %v860
  %v862 = vpop.f32.mrf.mxu0
  %863 = vmatprep.mubr.bf16.mxu0 0
  %864 = vmatmul.mubr.bf16.gmra.mxu0 %v695
  %v865 = vpop.f32.mrf.mxu0
  %v866 = vadd.f32 %v725, %v865
  %v867 = vpop.f32.mrf.mxu0
  %v868 = vpop.f32.mrf.mxu0
  %v869 = vadd.f32 %v725, %v868
  %v870 = vpop.f32.mrf.mxu0
  %871 = vmatprep.mubr.bf16.mxu0 0
  %872 = vmatmul.mubr.bf16.gmra.mxu0 %v696
  %v873 = vpop.f32.mrf.mxu0
  %v874 = vadd.f32 %v725, %v873
  %v875 = vpop.f32.mrf.mxu0
  %v876 = vpop.f32.mrf.mxu0
  %v877 = vadd.f32 %v725, %v876
  %v878 = vpop.f32.mrf.mxu0
  %879 = vmatprep.mubr.bf16.mxu0 0
  %880 = vmatmul.mubr.bf16.gmra.mxu0 %v697
  %v881 = vpop.f32.mrf.mxu0
  %v882 = vadd.f32 %v725, %v881
  %v883 = vpop.f32.mrf.mxu0
  %v884 = vpop.f32.mrf.mxu0
  %v885 = vadd.f32 %v725, %v884
  %v886 = vpop.f32.mrf.mxu0
  %887 = vmatprep.mubr.bf16.mxu0 0
  %888 = vmatmul.mubr.bf16.gmra.mxu0 %v698
  %v889 = vpop.f32.mrf.mxu0
  %v890 = vadd.f32 %v725, %v889
  %v891 = vpop.f32.mrf.mxu0
  %v892 = vpop.f32.mrf.mxu0
  %v893 = vadd.f32 %v725, %v892
  %v894 = vpop.f32.mrf.mxu0
  %895 = vmatprep.mubr.bf16.mxu0 0
  %896 = vmatmul.mubr.bf16.gmra.mxu0 %v699
  %v897 = vpop.f32.mrf.mxu0
  %v898 = vadd.f32 %v725, %v897
  %v899 = vpop.f32.mrf.mxu0
  %v900 = vpop.f32.mrf.mxu0
  %v901 = vadd.f32 %v725, %v900
  %v902 = vpop.f32.mrf.mxu0
  %903 = vmatprep.mubr.bf16.mxu0 0
  %904 = vmatmul.mubr.bf16.gmra.mxu0 %v700
  %v905 = vpop.f32.mrf.mxu0
  %v906 = vadd.f32 %v725, %v905
  %v907 = vpop.f32.mrf.mxu0
  %v908 = vpop.f32.mrf.mxu0
  %v909 = vadd.f32 %v725, %v908
  %v910 = vpop.f32.mrf.mxu0
  %911 = vmatprep.mubr.bf16.mxu0 0
  %912 = vmatmul.mubr.bf16.gmra.mxu0 %v701
  %v913 = vpop.f32.mrf.mxu0
  %v914 = vadd.f32 %v725, %v913
  %v915 = vpop.f32.mrf.mxu0
  %v916 = vpop.f32.mrf.mxu0
  %v917 = vadd.f32 %v725, %v916
  %v918 = vpop.f32.mrf.mxu0
  %919 = vmatprep.mubr.bf16.mxu0 0
  %920 = vmatmul.mubr.bf16.gmra.mxu0 %v702
  %v921 = vpop.f32.mrf.mxu0
  %v922 = vadd.f32 %v725, %v921
  %v923 = vpop.f32.mrf.mxu0
  %v924 = vpop.f32.mrf.mxu0
  %v925 = vadd.f32 %v725, %v924
  %v926 = vpop.f32.mrf.mxu0
  %927 = vmatprep.mubr.bf16.mxu0 0
  %928 = vmatmul.mubr.bf16.gmra.mxu0 %v703
  %v929 = vpop.f32.mrf.mxu0
  %v930 = vadd.f32 %v725, %v929
  %v931 = vpop.f32.mrf.mxu0
  %v932 = vpop.f32.mrf.mxu0
  %v933 = vadd.f32 %v725, %v932
  %v934 = vpop.f32.mrf.mxu0
  %935 = vdwg.mxu0
  %v936 = vmax.f32 %v810, 0.0
  %v937 = vmax.f32 %v813, 0.0
  %v938 = vmax.f32 %v818, 0.0
  %v939 = vmax.f32 %v821, 0.0
  %v940 = vmax.f32 %v826, 0.0
  %v941 = vmax.f32 %v829, 0.0
  %v942 = vmax.f32 %v834, 0.0
  %v943 = vmax.f32 %v837, 0.0
  %v944 = vmax.f32 %v842, 0.0
  %v945 = vmax.f32 %v845, 0.0
  %v946 = vmax.f32 %v850, 0.0
  %v947 = vmax.f32 %v853, 0.0
  %v948 = vmax.f32 %v858, 0.0
  %v949 = vmax.f32 %v861, 0.0
  %v950 = vmax.f32 %v866, 0.0
  %v951 = vmax.f32 %v869, 0.0
  %v952 = vmax.f32 %v874, 0.0
  %v953 = vmax.f32 %v877, 0.0
  %v954 = vmax.f32 %v882, 0.0
  %v955 = vmax.f32 %v885, 0.0
  %v956 = vmax.f32 %v890, 0.0
  %v957 = vmax.f32 %v893, 0.0
  %v958 = vmax.f32 %v898, 0.0
  %v959 = vmax.f32 %v901, 0.0
  %v960 = vmax.f32 %v906, 0.0
  %v961 = vmax.f32 %v909, 0.0
  %v962 = vmax.f32 %v914, 0.0
  %v963 = vmax.f32 %v917, 0.0
  %v964 = vmax.f32 %v922, 0.0
  %v965 = vmax.f32 %v925, 0.0
  %v966 = vmax.f32 %v930, 0.0
  %v967 = vmax.f32 %v933, 0.0
  %v968 = vpack.c.bf16 %v937, %v936
  %v969 = vpack.c.bf16 %v939, %v938
  %v970 = vpack.c.bf16 %v941, %v940
  %v971 = vpack.c.bf16 %v943, %v942
  %v972 = vpack.c.bf16 %v945, %v944
  %v973 = vpack.c.bf16 %v947, %v946
  %v974 = vpack.c.bf16 %v949, %v948
  %v975 = vpack.c.bf16 %v951, %v950
  %v976 = vpack.c.bf16 %v953, %v952
  %v977 = vpack.c.bf16 %v955, %v954
  %v978 = vpack.c.bf16 %v957, %v956
  %v979 = vpack.c.bf16 %v959, %v958
  %v980 = vpack.c.bf16 %v961, %v960
  %v981 = vpack.c.bf16 %v963, %v962
  %v982 = vpack.c.bf16 %v965, %v964
  %v983 = vpack.c.bf16 %v967, %v966
  %v984 = vld [vmem:[%s7] sm:$0xf]
  %v985 = vld [vmem:[%s7 + $0x4] sm:$0xf]
  %v986 = vld [vmem:[%s7 + $0x8] sm:$0xf]
  %v987 = vld [vmem:[%s7 + $0xc] sm:$0xf]
  %v988 = vld [vmem:[%s7 + $0x10] sm:$0xf]
  %v989 = vld [vmem:[%s7 + $0x14] sm:$0xf]
  %v990 = vld [vmem:[%s7 + $0x18] sm:$0xf]
  %v991 = vld [vmem:[%s7 + $0x1c] sm:$0xf]
  %v992 = vld [vmem:[%s7 + $0x20] sm:$0xf]
  %v993 = vld [vmem:[%s7 + $0x24] sm:$0xf]
  %v994 = vld [vmem:[%s7 + $0x28] sm:$0xf]
  %v995 = vld [vmem:[%s7 + $0x2c] sm:$0xf]
  %v996 = vld [vmem:[%s7 + $0x30] sm:$0xf]
  %v997 = vld [vmem:[%s7 + $0x34] sm:$0xf]
  %v998 = vld [vmem:[%s7 + $0x38] sm:$0xf]
  %v999 = vld [vmem:[%s7 + $0x3c] sm:$0xf]
  %v1000 = vld [vmem:[%s8] sm:$0x1]
  %v1002 = vlaneseq
  %v1003 = vshrl.u32 %v1002, 7
  %v1004 = vsub.s32 0, %v1003
  %v1005 = vrot.slane %v1000, %v1004
  %v1023 = vunpack.c.l.b16 %v984
  %v1024 = vunpack.c.l.b16 %v985
  %v1025 = vunpack.c.l.b16 %v986
  %v1026 = vunpack.c.l.b16 %v987
  %v1027 = vunpack.c.l.b16 %v988
  %v1028 = vunpack.c.l.b16 %v989
  %v1029 = vunpack.c.l.b16 %v990
  %v1030 = vunpack.c.l.b16 %v991
  %v1031 = vunpack.c.l.b16 %v992
  %v1032 = vunpack.c.l.b16 %v993
  %v1033 = vunpack.c.l.b16 %v994
  %v1034 = vunpack.c.l.b16 %v995
  %v1035 = vunpack.c.l.b16 %v996
  %v1036 = vunpack.c.l.b16 %v997
  %v1037 = vunpack.c.l.b16 %v998
  %v1038 = vunpack.c.l.b16 %v999
  %v1039 = vpack.c.b16 %v1024, %v1023
  %v1040 = vpack.c.b16 %v1026, %v1025
  %v1041 = vpack.c.b16 %v1028, %v1027
  %v1042 = vpack.c.b16 %v1030, %v1029
  %v1043 = vpack.c.b16 %v1032, %v1031
  %v1044 = vpack.c.b16 %v1034, %v1033
  %v1045 = vpack.c.b16 %v1036, %v1035
  %v1046 = vpack.c.b16 %v1038, %v1037
  %1055 = vmatprep.subr.bf16.mxu0 0
  %1056 = vmatpush1.bf16.msra.mxu0 %v1046
  %1057 = vmatprep.subr.bf16.mxu0 0
  %1058 = vmatpush1.bf16.msra.mxu0 %v1045
  %1059 = vmatprep.subr.bf16.mxu0 0
  %1060 = vmatpush1.bf16.msra.mxu0 %v1044
  %1061 = vmatprep.subr.bf16.mxu0 0
  %1062 = vmatpush1.bf16.msra.mxu0 %v1043
  %1063 = vmatprep.subr.bf16.mxu0 0
  %1064 = vmatpush1.bf16.msra.mxu0 %v1042
  %1065 = vmatprep.subr.bf16.mxu0 0
  %1066 = vmatpush1.bf16.msra.mxu0 %v1041
  %1067 = vmatprep.subr.bf16.mxu0 0
  %1068 = vmatpush1.bf16.msra.mxu0 %v1040
  %1069 = vmatprep.subr.bf16.mxu0 0
  %1070 = vmatpush1.bf16.msra.mxu0 %v1039
  %1071 = vmatprep.subr.bf16.mxu0 0
  %1072 = vmatpush2.bf16.msra.mxu0 0
  %1073 = vmatprep.subr.bf16.mxu0 0
  %1074 = vmatpush2.bf16.msra.mxu0 0
  %1075 = vmatprep.subr.bf16.mxu0 0
  %1076 = vmatpush2.bf16.msra.mxu0 0
  %1077 = vmatprep.subr.bf16.mxu0 0
  %1078 = vmatpush2.bf16.msra.mxu0 0
  %1079 = vmatprep.subr.bf16.mxu0 0
  %1080 = vmatpush2.bf16.msra.mxu0 0
  %1081 = vmatprep.subr.bf16.mxu0 0
  %1082 = vmatpush2.bf16.msra.mxu0 0
  %1083 = vmatprep.subr.bf16.mxu0 0
  %1084 = vmatpush2.bf16.msra.mxu0 0
  %1085 = vmatprep.subr.bf16.mxu0 0
  %1086 = vmatpush2.bf16.msra.mxu0 0
  %1087 = vmatprep.mubr.bf16.mxu0 0
  %1088 = vmatmul.mubr.bf16.gmra.mxu0 %v968
  %v1089 = vpop.f32.mrf.mxu0
  %v1090 = vadd.f32 %v1005, %v1089
  %v1091 = vpop.f32.mrf.mxu0
  %v1092 = vpop.f32.mrf.mxu0
  %v1093 = vadd.f32 %v1005, %v1092
  %v1094 = vpop.f32.mrf.mxu0
  %1095 = vmatprep.mubr.bf16.mxu0 0
  %1096 = vmatmul.mubr.bf16.gmra.mxu0 %v969
  %v1097 = vpop.f32.mrf.mxu0
  %v1098 = vadd.f32 %v1005, %v1097
  %v1099 = vpop.f32.mrf.mxu0
  %v1100 = vpop.f32.mrf.mxu0
  %v1101 = vadd.f32 %v1005, %v1100
  %v1102 = vpop.f32.mrf.mxu0
  %1103 = vmatprep.mubr.bf16.mxu0 0
  %1104 = vmatmul.mubr.bf16.gmra.mxu0 %v970
  %v1105 = vpop.f32.mrf.mxu0
  %v1106 = vadd.f32 %v1005, %v1105
  %v1107 = vpop.f32.mrf.mxu0
  %v1108 = vpop.f32.mrf.mxu0
  %v1109 = vadd.f32 %v1005, %v1108
  %v1110 = vpop.f32.mrf.mxu0
  %1111 = vmatprep.mubr.bf16.mxu0 0
  %1112 = vmatmul.mubr.bf16.gmra.mxu0 %v971
  %v1113 = vpop.f32.mrf.mxu0
  %v1114 = vadd.f32 %v1005, %v1113
  %v1115 = vpop.f32.mrf.mxu0
  %v1116 = vpop.f32.mrf.mxu0
  %v1117 = vadd.f32 %v1005, %v1116
  %v1118 = vpop.f32.mrf.mxu0
  %1119 = vmatprep.mubr.bf16.mxu0 0
  %1120 = vmatmul.mubr.bf16.gmra.mxu0 %v972
  %v1121 = vpop.f32.mrf.mxu0
  %v1122 = vadd.f32 %v1005, %v1121
  %v1123 = vpop.f32.mrf.mxu0
  %v1124 = vpop.f32.mrf.mxu0
  %v1125 = vadd.f32 %v1005, %v1124
  %v1126 = vpop.f32.mrf.mxu0
  %1127 = vmatprep.mubr.bf16.mxu0 0
  %1128 = vmatmul.mubr.bf16.gmra.mxu0 %v973
  %v1129 = vpop.f32.mrf.mxu0
  %v1130 = vadd.f32 %v1005, %v1129
  %v1131 = vpop.f32.mrf.mxu0
  %v1132 = vpop.f32.mrf.mxu0
  %v1133 = vadd.f32 %v1005, %v1132
  %v1134 = vpop.f32.mrf.mxu0
  %1135 = vmatprep.mubr.bf16.mxu0 0
  %1136 = vmatmul.mubr.bf16.gmra.mxu0 %v974
  %v1137 = vpop.f32.mrf.mxu0
  %v1138 = vadd.f32 %v1005, %v1137
  %v1139 = vpop.f32.mrf.mxu0
  %v1140 = vpop.f32.mrf.mxu0
  %v1141 = vadd.f32 %v1005, %v1140
  %v1142 = vpop.f32.mrf.mxu0
  %1143 = vmatprep.mubr.bf16.mxu0 0
  %1144 = vmatmul.mubr.bf16.gmra.mxu0 %v975
  %v1145 = vpop.f32.mrf.mxu0
  %v1146 = vadd.f32 %v1005, %v1145
  %v1147 = vpop.f32.mrf.mxu0
  %v1148 = vpop.f32.mrf.mxu0
  %v1149 = vadd.f32 %v1005, %v1148
  %v1150 = vpop.f32.mrf.mxu0
  %1151 = vmatprep.mubr.bf16.mxu0 0
  %1152 = vmatmul.mubr.bf16.gmra.mxu0 %v976
  %v1153 = vpop.f32.mrf.mxu0
  %v1154 = vadd.f32 %v1005, %v1153
  %v1155 = vpop.f32.mrf.mxu0
  %v1156 = vpop.f32.mrf.mxu0
  %v1157 = vadd.f32 %v1005, %v1156
  %v1158 = vpop.f32.mrf.mxu0
  %1159 = vmatprep.mubr.bf16.mxu0 0
  %1160 = vmatmul.mubr.bf16.gmra.mxu0 %v977
  %v1161 = vpop.f32.mrf.mxu0
  %v1162 = vadd.f32 %v1005, %v1161
  %v1163 = vpop.f32.mrf.mxu0
  %v1164 = vpop.f32.mrf.mxu0
  %v1165 = vadd.f32 %v1005, %v1164
  %v1166 = vpop.f32.mrf.mxu0
  %1167 = vmatprep.mubr.bf16.mxu0 0
  %1168 = vmatmul.mubr.bf16.gmra.mxu0 %v978
  %v1169 = vpop.f32.mrf.mxu0
  %v1170 = vadd.f32 %v1005, %v1169
  %v1171 = vpop.f32.mrf.mxu0
  %v1172 = vpop.f32.mrf.mxu0
  %v1173 = vadd.f32 %v1005, %v1172
  %v1174 = vpop.f32.mrf.mxu0
  %1175 = vmatprep.mubr.bf16.mxu0 0
  %1176 = vmatmul.mubr.bf16.gmra.mxu0 %v979
  %v1177 = vpop.f32.mrf.mxu0
  %v1178 = vadd.f32 %v1005, %v1177
  %v1179 = vpop.f32.mrf.mxu0
  %v1180 = vpop.f32.mrf.mxu0
  %v1181 = vadd.f32 %v1005, %v1180
  %v1182 = vpop.f32.mrf.mxu0
  %1183 = vmatprep.mubr.bf16.mxu0 0
  %1184 = vmatmul.mubr.bf16.gmra.mxu0 %v980
  %v1185 = vpop.f32.mrf.mxu0
  %v1186 = vadd.f32 %v1005, %v1185
  %v1187 = vpop.f32.mrf.mxu0
  %v1188 = vpop.f32.mrf.mxu0
  %v1189 = vadd.f32 %v1005, %v1188
  %v1190 = vpop.f32.mrf.mxu0
  %1191 = vmatprep.mubr.bf16.mxu0 0
  %1192 = vmatmul.mubr.bf16.gmra.mxu0 %v981
  %v1193 = vpop.f32.mrf.mxu0
  %v1194 = vadd.f32 %v1005, %v1193
  %v1195 = vpop.f32.mrf.mxu0
  %v1196 = vpop.f32.mrf.mxu0
  %v1197 = vadd.f32 %v1005, %v1196
  %v1198 = vpop.f32.mrf.mxu0
  %1199 = vmatprep.mubr.bf16.mxu0 0
  %1200 = vmatmul.mubr.bf16.gmra.mxu0 %v982
  %v1201 = vpop.f32.mrf.mxu0
  %v1202 = vadd.f32 %v1005, %v1201
  %v1203 = vpop.f32.mrf.mxu0
  %v1204 = vpop.f32.mrf.mxu0
  %v1205 = vadd.f32 %v1005, %v1204
  %v1206 = vpop.f32.mrf.mxu0
  %1207 = vmatprep.mubr.bf16.mxu0 0
  %1208 = vmatmul.mubr.bf16.gmra.mxu0 %v983
  %v1209 = vpop.f32.mrf.mxu0
  %v1210 = vadd.f32 %v1005, %v1209
  %v1211 = vpop.f32.mrf.mxu0
  %v1212 = vpop.f32.mrf.mxu0
  %v1213 = vadd.f32 %v1005, %v1212
  %v1214 = vpop.f32.mrf.mxu0
  %1215 = vdwg.mxu0
  %v1216 = vmax.f32 %v1090, 0.0
  %v1217 = vmax.f32 %v1093, 0.0
  %v1218 = vmax.f32 %v1098, 0.0
  %v1219 = vmax.f32 %v1101, 0.0
  %v1220 = vmax.f32 %v1106, 0.0
  %v1221 = vmax.f32 %v1109, 0.0
  %v1222 = vmax.f32 %v1114, 0.0
  %v1223 = vmax.f32 %v1117, 0.0
  %v1224 = vmax.f32 %v1122, 0.0
  %v1225 = vmax.f32 %v1125, 0.0
  %v1226 = vmax.f32 %v1130, 0.0
  %v1227 = vmax.f32 %v1133, 0.0
  %v1228 = vmax.f32 %v1138, 0.0
  %v1229 = vmax.f32 %v1141, 0.0
  %v1230 = vmax.f32 %v1146, 0.0
  %v1231 = vmax.f32 %v1149, 0.0
  %v1232 = vmax.f32 %v1154, 0.0
  %v1233 = vmax.f32 %v1157, 0.0
  %v1234 = vmax.f32 %v1162, 0.0
  %v1235 = vmax.f32 %v1165, 0.0
  %v1236 = vmax.f32 %v1170, 0.0
  %v1237 = vmax.f32 %v1173, 0.0
  %v1238 = vmax.f32 %v1178, 0.0
  %v1239 = vmax.f32 %v1181, 0.0
  %v1240 = vmax.f32 %v1186, 0.0
  %v1241 = vmax.f32 %v1189, 0.0
  %v1242 = vmax.f32 %v1194, 0.0
  %v1243 = vmax.f32 %v1197, 0.0
  %v1244 = vmax.f32 %v1202, 0.0
  %v1245 = vmax.f32 %v1205, 0.0
  %v1246 = vmax.f32 %v1210, 0.0
  %v1247 = vmax.f32 %v1213, 0.0
  %v1248 = vpack.c.bf16 %v1217, %v1216
  %v1249 = vpack.c.bf16 %v1219, %v1218
  %v1250 = vpack.c.bf16 %v1221, %v1220
  %v1251 = vpack.c.bf16 %v1223, %v1222
  %v1252 = vpack.c.bf16 %v1225, %v1224
  %v1253 = vpack.c.bf16 %v1227, %v1226
  %v1254 = vpack.c.bf16 %v1229, %v1228
  %v1255 = vpack.c.bf16 %v1231, %v1230
  %v1256 = vpack.c.bf16 %v1233, %v1232
  %v1257 = vpack.c.bf16 %v1235, %v1234
  %v1258 = vpack.c.bf16 %v1237, %v1236
  %v1259 = vpack.c.bf16 %v1239, %v1238
  %v1260 = vpack.c.bf16 %v1241, %v1240
  %v1261 = vpack.c.bf16 %v1243, %v1242
  %v1262 = vpack.c.bf16 %v1245, %v1244
  %v1263 = vpack.c.bf16 %v1247, %v1246
  %v1264 = vld [vmem:[%s9] sm:$0xf]
  %v1265 = vld [vmem:[%s9 + $0x4] sm:$0xf]
  %v1266 = vld [vmem:[%s9 + $0x8] sm:$0xf]
  %v1267 = vld [vmem:[%s9 + $0xc] sm:$0xf]
  %v1268 = vld [vmem:[%s9 + $0x10] sm:$0xf]
  %v1269 = vld [vmem:[%s9 + $0x14] sm:$0xf]
  %v1270 = vld [vmem:[%s9 + $0x18] sm:$0xf]
  %v1271 = vld [vmem:[%s9 + $0x1c] sm:$0xf]
  %v1272 = vld [vmem:[%s9 + $0x20] sm:$0xf]
  %v1273 = vld [vmem:[%s9 + $0x24] sm:$0xf]
  %v1274 = vld [vmem:[%s9 + $0x28] sm:$0xf]
  %v1275 = vld [vmem:[%s9 + $0x2c] sm:$0xf]
  %v1276 = vld [vmem:[%s9 + $0x30] sm:$0xf]
  %v1277 = vld [vmem:[%s9 + $0x34] sm:$0xf]
  %v1278 = vld [vmem:[%s9 + $0x38] sm:$0xf]
  %v1279 = vld [vmem:[%s9 + $0x3c] sm:$0xf]
  %v1280 = vld [vmem:[%s10] sm:$0x1]
  %v1282 = vlaneseq
  %v1283 = vshrl.u32 %v1282, 7
  %v1284 = vsub.s32 0, %v1283
  %v1285 = vrot.slane %v1280, %v1284
  %v1303 = vunpack.c.l.b16 %v1264
  %v1304 = vunpack.c.l.b16 %v1265
  %v1305 = vunpack.c.l.b16 %v1266
  %v1306 = vunpack.c.l.b16 %v1267
  %v1307 = vunpack.c.l.b16 %v1268
  %v1308 = vunpack.c.l.b16 %v1269
  %v1309 = vunpack.c.l.b16 %v1270
  %v1310 = vunpack.c.l.b16 %v1271
  %v1311 = vunpack.c.l.b16 %v1272
  %v1312 = vunpack.c.l.b16 %v1273
  %v1313 = vunpack.c.l.b16 %v1274
  %v1314 = vunpack.c.l.b16 %v1275
  %v1315 = vunpack.c.l.b16 %v1276
  %v1316 = vunpack.c.l.b16 %v1277
  %v1317 = vunpack.c.l.b16 %v1278
  %v1318 = vunpack.c.l.b16 %v1279
  %v1319 = vpack.c.b16 %v1304, %v1303
  %v1320 = vpack.c.b16 %v1306, %v1305
  %v1321 = vpack.c.b16 %v1308, %v1307
  %v1322 = vpack.c.b16 %v1310, %v1309
  %v1323 = vpack.c.b16 %v1312, %v1311
  %v1324 = vpack.c.b16 %v1314, %v1313
  %v1325 = vpack.c.b16 %v1316, %v1315
  %v1326 = vpack.c.b16 %v1318, %v1317
  %1335 = vmatprep.subr.bf16.mxu0 0
  %1336 = vmatpush1.bf16.msra.mxu0 %v1326
  %1337 = vmatprep.subr.bf16.mxu0 0
  %1338 = vmatpush1.bf16.msra.mxu0 %v1325
  %1339 = vmatprep.subr.bf16.mxu0 0
  %1340 = vmatpush1.bf16.msra.mxu0 %v1324
  %1341 = vmatprep.subr.bf16.mxu0 0
  %1342 = vmatpush1.bf16.msra.mxu0 %v1323
  %1343 = vmatprep.subr.bf16.mxu0 0
  %1344 = vmatpush1.bf16.msra.mxu0 %v1322
  %1345 = vmatprep.subr.bf16.mxu0 0
  %1346 = vmatpush1.bf16.msra.mxu0 %v1321
  %1347 = vmatprep.subr.bf16.mxu0 0
  %1348 = vmatpush1.bf16.msra.mxu0 %v1320
  %1349 = vmatprep.subr.bf16.mxu0 0
  %1350 = vmatpush1.bf16.msra.mxu0 %v1319
  %1351 = vmatprep.subr.bf16.mxu0 0
  %1352 = vmatpush2.bf16.msra.mxu0 0
  %1353 = vmatprep.subr.bf16.mxu0 0
  %1354 = vmatpush2.bf16.msra.mxu0 0
  %1355 = vmatprep.subr.bf16.mxu0 0
  %1356 = vmatpush2.bf16.msra.mxu0 0
  %1357 = vmatprep.subr.bf16.mxu0 0
  %1358 = vmatpush2.bf16.msra.mxu0 0
  %1359 = vmatprep.subr.bf16.mxu0 0
  %1360 = vmatpush2.bf16.msra.mxu0 0
  %1361 = vmatprep.subr.bf16.mxu0 0
  %1362 = vmatpush2.bf16.msra.mxu0 0
  %1363 = vmatprep.subr.bf16.mxu0 0
  %1364 = vmatpush2.bf16.msra.mxu0 0
  %1365 = vmatprep.subr.bf16.mxu0 0
  %1366 = vmatpush2.bf16.msra.mxu0 0
  %1367 = vmatprep.mubr.bf16.mxu0 0
  %1368 = vmatmul.mubr.bf16.gmra.mxu0 %v1248
  %v1369 = vpop.f32.mrf.mxu0
  %v1370 = vadd.f32 %v1285, %v1369
  %v1371 = vpop.f32.mrf.mxu0
  %v1372 = vpop.f32.mrf.mxu0
  %v1373 = vadd.f32 %v1285, %v1372
  %v1374 = vpop.f32.mrf.mxu0
  %1375 = vmatprep.mubr.bf16.mxu0 0
  %1376 = vmatmul.mubr.bf16.gmra.mxu0 %v1249
  %v1377 = vpop.f32.mrf.mxu0
  %v1378 = vadd.f32 %v1285, %v1377
  %v1379 = vpop.f32.mrf.mxu0
  %v1380 = vpop.f32.mrf.mxu0
  %v1381 = vadd.f32 %v1285, %v1380
  %v1382 = vpop.f32.mrf.mxu0
  %1383 = vmatprep.mubr.bf16.mxu0 0
  %1384 = vmatmul.mubr.bf16.gmra.mxu0 %v1250
  %v1385 = vpop.f32.mrf.mxu0
  %v1386 = vadd.f32 %v1285, %v1385
  %v1387 = vpop.f32.mrf.mxu0
  %v1388 = vpop.f32.mrf.mxu0
  %v1389 = vadd.f32 %v1285, %v1388
  %v1390 = vpop.f32.mrf.mxu0
  %1391 = vmatprep.mubr.bf16.mxu0 0
  %1392 = vmatmul.mubr.bf16.gmra.mxu0 %v1251
  %v1393 = vpop.f32.mrf.mxu0
  %v1394 = vadd.f32 %v1285, %v1393
  %v1395 = vpop.f32.mrf.mxu0
  %v1396 = vpop.f32.mrf.mxu0
  %v1397 = vadd.f32 %v1285, %v1396
  %v1398 = vpop.f32.mrf.mxu0
  %1399 = vmatprep.mubr.bf16.mxu0 0
  %1400 = vmatmul.mubr.bf16.gmra.mxu0 %v1252
  %v1401 = vpop.f32.mrf.mxu0
  %v1402 = vadd.f32 %v1285, %v1401
  %v1403 = vpop.f32.mrf.mxu0
  %v1404 = vpop.f32.mrf.mxu0
  %v1405 = vadd.f32 %v1285, %v1404
  %v1406 = vpop.f32.mrf.mxu0
  %1407 = vmatprep.mubr.bf16.mxu0 0
  %1408 = vmatmul.mubr.bf16.gmra.mxu0 %v1253
  %v1409 = vpop.f32.mrf.mxu0
  %v1410 = vadd.f32 %v1285, %v1409
  %v1411 = vpop.f32.mrf.mxu0
  %v1412 = vpop.f32.mrf.mxu0
  %v1413 = vadd.f32 %v1285, %v1412
  %v1414 = vpop.f32.mrf.mxu0
  %1415 = vmatprep.mubr.bf16.mxu0 0
  %1416 = vmatmul.mubr.bf16.gmra.mxu0 %v1254
  %v1417 = vpop.f32.mrf.mxu0
  %v1418 = vadd.f32 %v1285, %v1417
  %v1419 = vpop.f32.mrf.mxu0
  %v1420 = vpop.f32.mrf.mxu0
  %v1421 = vadd.f32 %v1285, %v1420
  %v1422 = vpop.f32.mrf.mxu0
  %1423 = vmatprep.mubr.bf16.mxu0 0
  %1424 = vmatmul.mubr.bf16.gmra.mxu0 %v1255
  %v1425 = vpop.f32.mrf.mxu0
  %v1426 = vadd.f32 %v1285, %v1425
  %v1427 = vpop.f32.mrf.mxu0
  %v1428 = vpop.f32.mrf.mxu0
  %v1429 = vadd.f32 %v1285, %v1428
  %v1430 = vpop.f32.mrf.mxu0
  %1431 = vmatprep.mubr.bf16.mxu0 0
  %1432 = vmatmul.mubr.bf16.gmra.mxu0 %v1256
  %v1433 = vpop.f32.mrf.mxu0
  %v1434 = vadd.f32 %v1285, %v1433
  %v1435 = vpop.f32.mrf.mxu0
  %v1436 = vpop.f32.mrf.mxu0
  %v1437 = vadd.f32 %v1285, %v1436
  %v1438 = vpop.f32.mrf.mxu0
  %1439 = vmatprep.mubr.bf16.mxu0 0
  %1440 = vmatmul.mubr.bf16.gmra.mxu0 %v1257
  %v1441 = vpop.f32.mrf.mxu0
  %v1442 = vadd.f32 %v1285, %v1441
  %v1443 = vpop.f32.mrf.mxu0
  %v1444 = vpop.f32.mrf.mxu0
  %v1445 = vadd.f32 %v1285, %v1444
  %v1446 = vpop.f32.mrf.mxu0
  %1447 = vmatprep.mubr.bf16.mxu0 0
  %1448 = vmatmul.mubr.bf16.gmra.mxu0 %v1258
  %v1449 = vpop.f32.mrf.mxu0
  %v1450 = vadd.f32 %v1285, %v1449
  %v1451 = vpop.f32.mrf.mxu0
  %v1452 = vpop.f32.mrf.mxu0
  %v1453 = vadd.f32 %v1285, %v1452
  %v1454 = vpop.f32.mrf.mxu0
  %1455 = vmatprep.mubr.bf16.mxu0 0
  %1456 = vmatmul.mubr.bf16.gmra.mxu0 %v1259
  %v1457 = vpop.f32.mrf.mxu0
  %v1458 = vadd.f32 %v1285, %v1457
  %v1459 = vpop.f32.mrf.mxu0
  %v1460 = vpop.f32.mrf.mxu0
  %v1461 = vadd.f32 %v1285, %v1460
  %v1462 = vpop.f32.mrf.mxu0
  %1463 = vmatprep.mubr.bf16.mxu0 0
  %1464 = vmatmul.mubr.bf16.gmra.mxu0 %v1260
  %v1465 = vpop.f32.mrf.mxu0
  %v1466 = vadd.f32 %v1285, %v1465
  %v1467 = vpop.f32.mrf.mxu0
  %v1468 = vpop.f32.mrf.mxu0
  %v1469 = vadd.f32 %v1285, %v1468
  %v1470 = vpop.f32.mrf.mxu0
  %1471 = vmatprep.mubr.bf16.mxu0 0
  %1472 = vmatmul.mubr.bf16.gmra.mxu0 %v1261
  %v1473 = vpop.f32.mrf.mxu0
  %v1474 = vadd.f32 %v1285, %v1473
  %v1475 = vpop.f32.mrf.mxu0
  %v1476 = vpop.f32.mrf.mxu0
  %v1477 = vadd.f32 %v1285, %v1476
  %v1478 = vpop.f32.mrf.mxu0
  %1479 = vmatprep.mubr.bf16.mxu0 0
  %1480 = vmatmul.mubr.bf16.gmra.mxu0 %v1262
  %v1481 = vpop.f32.mrf.mxu0
  %v1482 = vadd.f32 %v1285, %v1481
  %v1483 = vpop.f32.mrf.mxu0
  %v1484 = vpop.f32.mrf.mxu0
  %v1485 = vadd.f32 %v1285, %v1484
  %v1486 = vpop.f32.mrf.mxu0
  %1487 = vmatprep.mubr.bf16.mxu0 0
  %1488 = vmatmul.mubr.bf16.gmra.mxu0 %v1263
  %v1489 = vpop.f32.mrf.mxu0
  %v1490 = vadd.f32 %v1285, %v1489
  %v1491 = vpop.f32.mrf.mxu0
  %v1492 = vpop.f32.mrf.mxu0
  %v1493 = vadd.f32 %v1285, %v1492
  %v1494 = vpop.f32.mrf.mxu0
  %1495 = vdwg.mxu0
  %vm1496 = vcmask 23552
  %1497 = vst.msk [vmem:[%s11] sm:$0xff] %vm1496, %v1370
  %1498 = vst.msk [vmem:[%s11 + $0x8] sm:$0xff] %vm1496, %v1373
  %1499 = vst.msk [vmem:[%s11 + $0x10] sm:$0xff] %vm1496, %v1378
  %1500 = vst.msk [vmem:[%s11 + $0x18] sm:$0xff] %vm1496, %v1381
  %1501 = vst.msk [vmem:[%s11 + $0x20] sm:$0xff] %vm1496, %v1386
  %1502 = vst.msk [vmem:[%s11 + $0x28] sm:$0xff] %vm1496, %v1389
  %1503 = vst.msk [vmem:[%s11 + $0x30] sm:$0xff] %vm1496, %v1394
  %1504 = vst.msk [vmem:[%s11 + $0x38] sm:$0xff] %vm1496, %v1397
  %1505 = vst.msk [vmem:[%s11 + $0x40] sm:$0xff] %vm1496, %v1402
  %1506 = vst.msk [vmem:[%s11 + $0x48] sm:$0xff] %vm1496, %v1405
  %1507 = vst.msk [vmem:[%s11 + $0x50] sm:$0xff] %vm1496, %v1410
  %1508 = vst.msk [vmem:[%s11 + $0x58] sm:$0xff] %vm1496, %v1413
  %1509 = vst.msk [vmem:[%s11 + $0x60] sm:$0xff] %vm1496, %v1418
  %1510 = vst.msk [vmem:[%s11 + $0x68] sm:$0xff] %vm1496, %v1421
  %1511 = vst.msk [vmem:[%s11 + $0x70] sm:$0xff] %vm1496, %v1426
  %1512 = vst.msk [vmem:[%s11 + $0x78] sm:$0xff] %vm1496, %v1429
  %1513 = vst.msk [vmem:[%s11 + $0x80] sm:$0xff] %vm1496, %v1434
  %1514 = vst.msk [vmem:[%s11 + $0x88] sm:$0xff] %vm1496, %v1437
  %1515 = vst.msk [vmem:[%s11 + $0x90] sm:$0xff] %vm1496, %v1442
  %1516 = vst.msk [vmem:[%s11 + $0x98] sm:$0xff] %vm1496, %v1445
  %1517 = vst.msk [vmem:[%s11 + $0xa0] sm:$0xff] %vm1496, %v1450
  %1518 = vst.msk [vmem:[%s11 + $0xa8] sm:$0xff] %vm1496, %v1453
  %1519 = vst.msk [vmem:[%s11 + $0xb0] sm:$0xff] %vm1496, %v1458
  %1520 = vst.msk [vmem:[%s11 + $0xb8] sm:$0xff] %vm1496, %v1461
  %1521 = vst.msk [vmem:[%s11 + $0xc0] sm:$0xff] %vm1496, %v1466
  %1522 = vst.msk [vmem:[%s11 + $0xc8] sm:$0xff] %vm1496, %v1469
  %1523 = vst.msk [vmem:[%s11 + $0xd0] sm:$0xff] %vm1496, %v1474
  %1524 = vst.msk [vmem:[%s11 + $0xd8] sm:$0xff] %vm1496, %v1477
  %1525 = vst.msk [vmem:[%s11 + $0xe0] sm:$0xff] %vm1496, %v1482
  %1526 = vst.msk [vmem:[%s11 + $0xe8] sm:$0xff] %vm1496, %v1485
  %1527 = vst.msk [vmem:[%s11 + $0xf0] sm:$0xff] %vm1496, %v1490
  %1528 = vst.msk [vmem:[%s11 + $0xf8] sm:$0xff] %vm1496, %v1493
  // Predicated region
  $region46: #{tpu_custom_call.1} parent=0 // pred_check
    _
  $region47: #{tpu_custom_call.1} parent=0 // pred_check_branch
    %1530 = sbr.rel (0) target = $region49
  $region48: #{tpu_custom_call.1} parent=0 // pred_region
    _
  $region49: #{tpu_custom_call.1} parent=0 // pred_fallthru
    _
  // Predicated region
  $region50: #{tpu_custom_call.1} parent=0 // pred_check
    _
  $region51: #{tpu_custom_call.1} parent=0 // pred_check_branch
    %1532 = sbr.rel (0) target = $region53
  $region52: #{tpu_custom_call.1} parent=0 // pred_region
    _
  $region53: #{tpu_custom_call.1} parent=0 // pred_fallthru
    _

</llo_original>
